<compile_context>
chip_gen: v7x
topology: tpu7x:2x2x1
jax: 0.10.0
libtpu: 0.0.40
codegen_flags: <defaults>
</compile_context>

<pallas_src>
import functools

import jax
import jax.numpy as jnp
import numpy as np
from jax.experimental import pallas as pl
from jax.experimental.pallas import tpu as pltpu


# ----------------------------------------------------------------------------
# Kernel
# ----------------------------------------------------------------------------
def _gru_decode_kernel(stack_size, H, B, S, *refs):
    # refs = (z_flat, h0, [10 weight refs per layer], w_fc, b_fc,
    #         decoded_flat, h_out, x_scr)
    n_w = 10 * stack_size + 2
    z_ref, h0_ref = refs[0], refs[1]
    w_refs = refs[2:2 + n_w]
    decoded_ref = refs[2 + n_w]
    h_out_ref = refs[3 + n_w]
    x_scr = refs[4 + n_w]

    x_all = z_ref[...]  # (S*B, in) — all timesteps, time-major flattened

    for layer in range(stack_size):
        base = 10 * layer
        # Hoisted: load every weight/bias once per layer (outside the time loop).
        w_ih_r = w_refs[base + 0][...]
        w_ih_z = w_refs[base + 1][...]
        w_ih_n = w_refs[base + 2][...]
        w_hh_r = w_refs[base + 3][...]
        w_hh_z = w_refs[base + 4][...]
        w_hh_n = w_refs[base + 5][...]
        b_r = w_refs[base + 6][...]    # b_ih_r + b_hh_r (folded)
        b_z = w_refs[base + 7][...]    # b_ih_z + b_hh_z (folded)
        b_in = w_refs[base + 8][...]   # b_ih_n
        b_hn = w_refs[base + 9][...]   # b_hh_n (must stay inside r * (...))

        # Input-side gate matmuls batched over all timesteps: one MXU call per
        # gate with M = S*B instead of S small M = B matmuls.
        gi_r = jnp.dot(x_all, w_ih_r, preferred_element_type=jnp.float32) + b_r
        gi_z = jnp.dot(x_all, w_ih_z, preferred_element_type=jnp.float32) + b_z
        gi_n = jnp.dot(x_all, w_ih_n, preferred_element_type=jnp.float32) + b_in

        h = h0_ref[layer]  # (B, H)

        # Sequential recurrence (S is small and static -> fully unrolled).
        for t in range(S):
            lo = t * B
            gir_t = gi_r[lo:lo + B, :]
            giz_t = gi_z[lo:lo + B, :]
            gin_t = gi_n[lo:lo + B, :]

            gh_r = jnp.dot(h, w_hh_r, preferred_element_type=jnp.float32)
            gh_z = jnp.dot(h, w_hh_z, preferred_element_type=jnp.float32)
            gh_n = jnp.dot(h, w_hh_n, preferred_element_type=jnp.float32) + b_hn

            r = jax.nn.sigmoid(gir_t + gh_r)
            zg = jax.nn.sigmoid(giz_t + gh_z)
            n = jnp.tanh(gin_t + r * gh_n)
            h = (1.0 - zg) * n + zg * h

            # Collect this layer's output for all timesteps (next layer's input
            # / FC input) in a persistent VMEM slab.
            x_scr[lo:lo + B, :] = h

        h_out_ref[layer] = h           # final hidden state of this layer
        x_all = x_scr[...]             # (S*B, H) input to the next layer

    # FC head hoisted out of the recurrence: one matmul, one slab store.
    w_fc = w_refs[10 * stack_size][...]      # (H, A)
    b_fc = w_refs[10 * stack_size + 1][...]  # (1, A)
    decoded_ref[...] = (
        jnp.dot(x_all, w_fc, preferred_element_type=jnp.float32) + b_fc
    ).astype(decoded_ref.dtype)


# ----------------------------------------------------------------------------
# Wrapper
# ----------------------------------------------------------------------------
def _prepare_weight_args(params, stack_size, H, A):
    """Split PyTorch-layout GRU weights per gate, transpose, fold biases."""
    flat = []
    for layer in range(stack_size):
        w_ih, w_hh, b_ih, b_hh = params[f"gru_l{layer}"]  # (3H,in),(3H,H),(3H,),(3H,)
        w_ih_r, w_ih_z, w_ih_n = (w_ih[0:H].T, w_ih[H:2 * H].T, w_ih[2 * H:3 * H].T)
        w_hh_r, w_hh_z, w_hh_n = (w_hh[0:H].T, w_hh[H:2 * H].T, w_hh[2 * H:3 * H].T)
        b_r = (b_ih[0:H] + b_hh[0:H]).reshape(1, H)
        b_z = (b_ih[H:2 * H] + b_hh[H:2 * H]).reshape(1, H)
        b_in = b_ih[2 * H:3 * H].reshape(1, H)
        b_hn = b_hh[2 * H:3 * H].reshape(1, H)
        flat += [w_ih_r, w_ih_z, w_ih_n, w_hh_r, w_hh_z, w_hh_n,
                 b_r, b_z, b_in, b_hn]
    w_fc, b_fc = params["fc"]  # (A, H), (A,)
    flat += [w_fc.T, b_fc.reshape(1, A)]
    return flat


def vae_decode(z, hidden, params, *, gru_stack_size, gru_neurons_num,
               len_alphabet):
    """z: (S, B, L), hidden: (num_layers, B, H) -> (decoded (S,B,A), hidden)."""
    S, B, L = z.shape
    H = gru_neurons_num
    A = len_alphabet

    weight_args = _prepare_weight_args(params, gru_stack_size, H, A)
    z_flat = z.reshape(S * B, L)  # time-major flatten: row t*B + b

    def full_spec(shape):
        return pl.BlockSpec(shape, lambda i, _n=len(shape): (0,) * _n)

    in_specs = [full_spec((S * B, L)),                        # z (all timesteps)
                full_spec((gru_stack_size, B, H))]            # h0
    in_specs += [full_spec(tuple(w.shape)) for w in weight_args]

    out_shapes = (
        jax.ShapeDtypeStruct((S * B, A), jnp.float32),        # decoded slab
        jax.ShapeDtypeStruct((gru_stack_size, B, H), jnp.float32),
    )
    out_specs = (
        full_spec((S * B, A)),
        full_spec((gru_stack_size, B, H)),
    )

    kernel = functools.partial(_gru_decode_kernel, gru_stack_size, H, B, S)

    decoded_flat, h_out = pl.pallas_call(
        kernel,
        out_shape=out_shapes,
        grid_spec=pltpu.PrefetchScalarGridSpec(
            num_scalar_prefetch=0,
            grid=(1,),  # single invocation: no per-timestep pipeline overhead
            in_specs=in_specs,
            out_specs=out_specs,
            scratch_shapes=[pltpu.VMEM((S * B, H), jnp.float32)],
        ),
        compiler_params=pltpu.CompilerParams(
            dimension_semantics=("arbitrary",)),
    )(z_flat, hidden, *weight_args)

    # TODO(synk): for large batch on v7x, add a leading "parallel" grid axis
    # over batch shards to use both TensorCores; irrelevant at B=2.
    return decoded_flat.reshape(S, B, A), h_out


# ----------------------------------------------------------------------------
# Deterministic parameter init (PyTorch-style uniform(-1/sqrt(H), 1/sqrt(H)),
# stored in PyTorch layout; the wrapper repacks per-gate).
# ----------------------------------------------------------------------------
def init_params(key, latent_dim, stack_size, H, A):
    params = {}
    bound = 1.0 / np.sqrt(H)
    for layer in range(stack_size):
        in_dim = latent_dim if layer == 0 else H
        key, k1, k2, k3, k4 = jax.random.split(key, 5)
        w_ih = jax.random.uniform(k1, (3 * H, in_dim), jnp.float32, -bound, bound)
        w_hh = jax.random.uniform(k2, (3 * H, H), jnp.float32, -bound, bound)
        b_ih = jax.random.uniform(k3, (3 * H,), jnp.float32, -bound, bound)
        b_hh = jax.random.uniform(k4, (3 * H,), jnp.float32, -bound, bound)
        params[f"gru_l{layer}"] = (w_ih, w_hh, b_ih, b_hh)
    key, k1, k2 = jax.random.split(key, 3)
    w_fc = jax.random.uniform(k1, (A, H), jnp.float32, -bound, bound)
    b_fc = jax.random.uniform(k2, (A,), jnp.float32, -bound, bound)
    params["fc"] = (w_fc, b_fc)
    return params


# ----------------------------------------------------------------------------
# Pure-JAX reference (mirrors torch.nn.GRU + nn.Linear semantics).
# ----------------------------------------------------------------------------
def reference(z, hidden, params, stack_size, H):
    S, B, _ = z.shape
    h = [hidden[l] for l in range(stack_size)]
    outs = []
    for t in range(S):
        x = z[t]
        for layer in range(stack_size):
            w_ih, w_hh, b_ih, b_hh = params[f"gru_l{layer}"]
            gi = x @ w_ih.T + b_ih
            gh = h[layer] @ w_hh.T + b_hh
            r = jax.nn.sigmoid(gi[:, :H] + gh[:, :H])
            zg = jax.nn.sigmoid(gi[:, H:2 * H] + gh[:, H:2 * H])
            n = jnp.tanh(gi[:, 2 * H:] + r * gh[:, 2 * H:])
            h[layer] = (1.0 - zg) * n + zg * h[layer]
            x = h[layer]
        outs.append(x)
    l1 = jnp.stack(outs, axis=0)
    w_fc, b_fc = params["fc"]
    decoded = l1 @ w_fc.T + b_fc
    return decoded, jnp.stack(h, axis=0)


if __name__ == "__main__":
    # Small shapes consistent with the module's forward.
    latent_dimension = 32
    gru_stack_size = 2
    gru_neurons_num = 32
    len_alphabet = 16
    seq_len = 8
    batch = 2

    key = jax.random.PRNGKey(0)
    kp, kz = jax.random.split(key)
    params = init_params(kp, latent_dimension, gru_stack_size,
                         gru_neurons_num, len_alphabet)

    z = jax.random.normal(kz, (seq_len, batch, latent_dimension), jnp.float32)
    hidden0 = jnp.zeros((gru_stack_size, batch, gru_neurons_num), jnp.float32)

    decoded, hidden_out = vae_decode(
        z, hidden0, params,
        gru_stack_size=gru_stack_size,
        gru_neurons_num=gru_neurons_num,
        len_alphabet=len_alphabet)
    jax.block_until_ready((decoded, hidden_out))

    # Sanity check against the pure-JAX reference.
    ref_dec, ref_h = reference(z, hidden0, params, gru_stack_size,
                               gru_neurons_num)
    assert decoded.shape == (seq_len, batch, len_alphabet)
    assert hidden_out.shape == (gru_stack_size, batch, gru_neurons_num)
    np.testing.assert_allclose(np.asarray(decoded), np.asarray(ref_dec),
                               atol=1e-2, rtol=1e-2)
    np.testing.assert_allclose(np.asarray(hidden_out), np.asarray(ref_h),
                               atol=1e-2, rtol=1e-2)

    print("KERNEL_OK")
</pallas_src>

<mosaic_0001>
module attributes {stable_mosaic.version = 11 : i64} {
  func.func @_gru_decode_kernel(%arg0: i32, %arg1: memref<16x32xf32, #tpu.memory_space<vmem>>, %arg2: memref<2x2x32xf32, #tpu.memory_space<vmem>>, %arg3: memref<32x32xf32, #tpu.memory_space<vmem>>, %arg4: memref<32x32xf32, #tpu.memory_space<vmem>>, %arg5: memref<32x32xf32, #tpu.memory_space<vmem>>, %arg6: memref<32x32xf32, #tpu.memory_space<vmem>>, %arg7: memref<32x32xf32, #tpu.memory_space<vmem>>, %arg8: memref<32x32xf32, #tpu.memory_space<vmem>>, %arg9: memref<1x32xf32, #tpu.memory_space<vmem>>, %arg10: memref<1x32xf32, #tpu.memory_space<vmem>>, %arg11: memref<1x32xf32, #tpu.memory_space<vmem>>, %arg12: memref<1x32xf32, #tpu.memory_space<vmem>>, %arg13: memref<32x32xf32, #tpu.memory_space<vmem>>, %arg14: memref<32x32xf32, #tpu.memory_space<vmem>>, %arg15: memref<32x32xf32, #tpu.memory_space<vmem>>, %arg16: memref<32x32xf32, #tpu.memory_space<vmem>>, %arg17: memref<32x32xf32, #tpu.memory_space<vmem>>, %arg18: memref<32x32xf32, #tpu.memory_space<vmem>>, %arg19: memref<1x32xf32, #tpu.memory_space<vmem>>, %arg20: memref<1x32xf32, #tpu.memory_space<vmem>>, %arg21: memref<1x32xf32, #tpu.memory_space<vmem>>, %arg22: memref<1x32xf32, #tpu.memory_space<vmem>>, %arg23: memref<32x16xf32, #tpu.memory_space<vmem>>, %arg24: memref<1x16xf32, #tpu.memory_space<vmem>>, %arg25: memref<16x16xf32, #tpu.memory_space<vmem>>, %arg26: memref<2x2x32xf32, #tpu.memory_space<vmem>>, %arg27: memref<16x32xf32, #tpu.memory_space<vmem>>) attributes {dimension_semantics = [#tpu.dimension_semantics<arbitrary>], iteration_bounds = array<i64: 1>, scalar_prefetch = 0 : i64, scratch_operands = 1 : i64, tpu.core_type = #tpu.core_type<tc>, window_params = [{pipeline_mode = #tpu.pipeline_mode<synchronous>, transform_indices = @transform_0, window_bounds = array<i64: 16, 32>}, {pipeline_mode = #tpu.pipeline_mode<synchronous>, transform_indices = @transform_1, window_bounds = array<i64: 2, 2, 32>}, {pipeline_mode = #tpu.pipeline_mode<synchronous>, transform_indices = @transform_2, window_bounds = array<i64: 32, 32>}, {pipeline_mode = #tpu.pipeline_mode<synchronous>, transform_indices = @transform_3, window_bounds = array<i64: 32, 32>}, {pipeline_mode = #tpu.pipeline_mode<synchronous>, transform_indices = @transform_4, window_bounds = array<i64: 32, 32>}, {pipeline_mode = #tpu.pipeline_mode<synchronous>, transform_indices = @transform_5, window_bounds = array<i64: 32, 32>}, {pipeline_mode = #tpu.pipeline_mode<synchronous>, transform_indices = @transform_6, window_bounds = array<i64: 32, 32>}, {pipeline_mode = #tpu.pipeline_mode<synchronous>, transform_indices = @transform_7, window_bounds = array<i64: 32, 32>}, {pipeline_mode = #tpu.pipeline_mode<synchronous>, transform_indices = @transform_8, window_bounds = array<i64: 1, 32>}, {pipeline_mode = #tpu.pipeline_mode<synchronous>, transform_indices = @transform_9, window_bounds = array<i64: 1, 32>}, {pipeline_mode = #tpu.pipeline_mode<synchronous>, transform_indices = @transform_10, window_bounds = array<i64: 1, 32>}, {pipeline_mode = #tpu.pipeline_mode<synchronous>, transform_indices = @transform_11, window_bounds = array<i64: 1, 32>}, {pipeline_mode = #tpu.pipeline_mode<synchronous>, transform_indices = @transform_12, window_bounds = array<i64: 32, 32>}, {pipeline_mode = #tpu.pipeline_mode<synchronous>, transform_indices = @transform_13, window_bounds = array<i64: 32, 32>}, {pipeline_mode = #tpu.pipeline_mode<synchronous>, transform_indices = @transform_14, window_bounds = array<i64: 32, 32>}, {pipeline_mode = #tpu.pipeline_mode<synchronous>, transform_indices = @transform_15, window_bounds = array<i64: 32, 32>}, {pipeline_mode = #tpu.pipeline_mode<synchronous>, transform_indices = @transform_16, window_bounds = array<i64: 32, 32>}, {pipeline_mode = #tpu.pipeline_mode<synchronous>, transform_indices = @transform_17, window_bounds = array<i64: 32, 32>}, {pipeline_mode = #tpu.pipeline_mode<synchronous>, transform_indices = @transform_18, window_bounds = array<i64: 1, 32>}, {pipeline_mode = #tpu.pipeline_mode<synchronous>, transform_indices = @transform_19, window_bounds = array<i64: 1, 32>}, {pipeline_mode = #tpu.pipeline_mode<synchronous>, transform_indices = @transform_20, window_bounds = array<i64: 1, 32>}, {pipeline_mode = #tpu.pipeline_mode<synchronous>, transform_indices = @transform_21, window_bounds = array<i64: 1, 32>}, {pipeline_mode = #tpu.pipeline_mode<synchronous>, transform_indices = @transform_22, window_bounds = array<i64: 32, 16>}, {pipeline_mode = #tpu.pipeline_mode<synchronous>, transform_indices = @transform_23, window_bounds = array<i64: 1, 16>}, {pipeline_mode = #tpu.pipeline_mode<synchronous>, transform_indices = @transform_24, window_bounds = array<i64: 16, 16>}, {pipeline_mode = #tpu.pipeline_mode<synchronous>, transform_indices = @transform_25, window_bounds = array<i64: 2, 2, 32>}]} {
    %c0 = arith.constant 0 : index
    %c0_0 = arith.constant 0 : index
    %0 = vector.load %arg1[%c0, %c0_0] : memref<16x32xf32, #tpu.memory_space<vmem>>, vector<16x32xf32>
    %c0_1 = arith.constant 0 : index
    %c0_2 = arith.constant 0 : index
    %1 = vector.load %arg3[%c0_1, %c0_2] : memref<32x32xf32, #tpu.memory_space<vmem>>, vector<32x32xf32>
    %c0_3 = arith.constant 0 : index
    %c0_4 = arith.constant 0 : index
    %2 = vector.load %arg4[%c0_3, %c0_4] : memref<32x32xf32, #tpu.memory_space<vmem>>, vector<32x32xf32>
    %c0_5 = arith.constant 0 : index
    %c0_6 = arith.constant 0 : index
    %3 = vector.load %arg5[%c0_5, %c0_6] : memref<32x32xf32, #tpu.memory_space<vmem>>, vector<32x32xf32>
    %c0_7 = arith.constant 0 : index
    %c0_8 = arith.constant 0 : index
    %4 = vector.load %arg6[%c0_7, %c0_8] : memref<32x32xf32, #tpu.memory_space<vmem>>, vector<32x32xf32>
    %c0_9 = arith.constant 0 : index
    %c0_10 = arith.constant 0 : index
    %5 = vector.load %arg7[%c0_9, %c0_10] : memref<32x32xf32, #tpu.memory_space<vmem>>, vector<32x32xf32>
    %c0_11 = arith.constant 0 : index
    %c0_12 = arith.constant 0 : index
    %6 = vector.load %arg8[%c0_11, %c0_12] : memref<32x32xf32, #tpu.memory_space<vmem>>, vector<32x32xf32>
    %c0_13 = arith.constant 0 : index
    %c0_14 = arith.constant 0 : index
    %7 = vector.load %arg9[%c0_13, %c0_14] : memref<1x32xf32, #tpu.memory_space<vmem>>, vector<1x32xf32>
    %c0_15 = arith.constant 0 : index
    %c0_16 = arith.constant 0 : index
    %8 = vector.load %arg10[%c0_15, %c0_16] : memref<1x32xf32, #tpu.memory_space<vmem>>, vector<1x32xf32>
    %c0_17 = arith.constant 0 : index
    %c0_18 = arith.constant 0 : index
    %9 = vector.load %arg11[%c0_17, %c0_18] : memref<1x32xf32, #tpu.memory_space<vmem>>, vector<1x32xf32>
    %c0_19 = arith.constant 0 : index
    %c0_20 = arith.constant 0 : index
    %10 = vector.load %arg12[%c0_19, %c0_20] : memref<1x32xf32, #tpu.memory_space<vmem>>, vector<1x32xf32>
    %cst = arith.constant dense<0.000000e+00> : vector<16x32xf32>
    %11 = tpu.matmul %0, %1, %cst {dimension_numbers = #tpu.dot_dimension_numbers<[1], [0], [0], [1], [0, 0, 1, 1], [], []>} : vector<16x32xf32>, vector<32x32xf32>, vector<16x32xf32> -> vector<16x32xf32>
    %12 = vector.broadcast %7 : vector<1x32xf32> to vector<16x32xf32>
    %13 = arith.addf %11, %12 : vector<16x32xf32>
    %cst_21 = arith.constant dense<0.000000e+00> : vector<16x32xf32>
    %14 = tpu.matmul %0, %2, %cst_21 {dimension_numbers = #tpu.dot_dimension_numbers<[1], [0], [0], [1], [0, 0, 1, 1], [], []>} : vector<16x32xf32>, vector<32x32xf32>, vector<16x32xf32> -> vector<16x32xf32>
    %15 = vector.broadcast %8 : vector<1x32xf32> to vector<16x32xf32>
    %16 = arith.addf %14, %15 : vector<16x32xf32>
    %cst_22 = arith.constant dense<0.000000e+00> : vector<16x32xf32>
    %17 = tpu.matmul %0, %3, %cst_22 {dimension_numbers = #tpu.dot_dimension_numbers<[1], [0], [0], [1], [0, 0, 1, 1], [], []>} : vector<16x32xf32>, vector<32x32xf32>, vector<16x32xf32> -> vector<16x32xf32>
    %18 = vector.broadcast %9 : vector<1x32xf32> to vector<16x32xf32>
    %19 = arith.addf %17, %18 : vector<16x32xf32>
    %c0_23 = arith.constant 0 : index
    %c0_24 = arith.constant 0 : index
    %c0_25 = arith.constant 0 : index
    %20 = vector.load %arg2[%c0_23, %c0_24, %c0_25] : memref<2x2x32xf32, #tpu.memory_space<vmem>>, vector<1x2x32xf32>
    %21 = vector.shape_cast %20 : vector<1x2x32xf32> to vector<2x32xf32>
    %22 = vector.extract_strided_slice %13 {offsets = [0, 0], sizes = [2, 32], strides = [1, 1]} : vector<16x32xf32> to vector<2x32xf32>
    %23 = vector.extract_strided_slice %16 {offsets = [0, 0], sizes = [2, 32], strides = [1, 1]} : vector<16x32xf32> to vector<2x32xf32>
    %24 = vector.extract_strided_slice %19 {offsets = [0, 0], sizes = [2, 32], strides = [1, 1]} : vector<16x32xf32> to vector<2x32xf32>
    %cst_26 = arith.constant dense<0.000000e+00> : vector<2x32xf32>
    %25 = tpu.matmul %21, %4, %cst_26 {dimension_numbers = #tpu.dot_dimension_numbers<[1], [0], [0], [1], [0, 0, 1, 1], [], []>} : vector<2x32xf32>, vector<32x32xf32>, vector<2x32xf32> -> vector<2x32xf32>
    %cst_27 = arith.constant dense<0.000000e+00> : vector<2x32xf32>
    %26 = tpu.matmul %21, %5, %cst_27 {dimension_numbers = #tpu.dot_dimension_numbers<[1], [0], [0], [1], [0, 0, 1, 1], [], []>} : vector<2x32xf32>, vector<32x32xf32>, vector<2x32xf32> -> vector<2x32xf32>
    %cst_28 = arith.constant dense<0.000000e+00> : vector<2x32xf32>
    %27 = tpu.matmul %21, %6, %cst_28 {dimension_numbers = #tpu.dot_dimension_numbers<[1], [0], [0], [1], [0, 0, 1, 1], [], []>} : vector<2x32xf32>, vector<32x32xf32>, vector<2x32xf32> -> vector<2x32xf32>
    %28 = vector.broadcast %10 : vector<1x32xf32> to vector<2x32xf32>
    %29 = arith.addf %27, %28 : vector<2x32xf32>
    %30 = arith.addf %22, %25 : vector<2x32xf32>
    %31 = arith.negf %30 : vector<2x32xf32>
    %32 = math.exp %31 : vector<2x32xf32>
    %cst_29 = arith.constant 1.000000e+00 : f32
    %33 = vector.broadcast %cst_29 : f32 to vector<2x32xf32>
    %34 = arith.addf %33, %32 : vector<2x32xf32>
    %35 = arith.divf %33, %34 : vector<2x32xf32>
    %36 = arith.addf %23, %26 : vector<2x32xf32>
    %37 = arith.negf %36 : vector<2x32xf32>
    %38 = math.exp %37 : vector<2x32xf32>
    %cst_30 = arith.constant 1.000000e+00 : f32
    %39 = vector.broadcast %cst_30 : f32 to vector<2x32xf32>
    %40 = arith.addf %39, %38 : vector<2x32xf32>
    %41 = arith.divf %39, %40 : vector<2x32xf32>
    %42 = arith.mulf %35, %29 : vector<2x32xf32>
    %43 = arith.addf %24, %42 : vector<2x32xf32>
    %44 = math.tanh %43 : vector<2x32xf32>
    %cst_31 = arith.constant 1.000000e+00 : f32
    %45 = vector.broadcast %cst_31 : f32 to vector<2x32xf32>
    %46 = arith.subf %45, %41 : vector<2x32xf32>
    %47 = arith.mulf %46, %44 : vector<2x32xf32>
    %48 = arith.mulf %41, %21 : vector<2x32xf32>
    %49 = arith.addf %47, %48 : vector<2x32xf32>
    %c0_32 = arith.constant 0 : index
    %c0_33 = arith.constant 0 : index
    %50 = vector.load %arg27[%c0_32, %c0_33] : memref<16x32xf32, #tpu.memory_space<vmem>>, vector<2x32xf32>
    tpu.vector_store %arg27[%c0_32, %c0_33], %49 {strides = array<i32>} : memref<16x32xf32, #tpu.memory_space<vmem>>, vector<2x32xf32>,
    %51 = vector.extract_strided_slice %13 {offsets = [2, 0], sizes = [2, 32], strides = [1, 1]} : vector<16x32xf32> to vector<2x32xf32>
    %52 = vector.extract_strided_slice %16 {offsets = [2, 0], sizes = [2, 32], strides = [1, 1]} : vector<16x32xf32> to vector<2x32xf32>
    %53 = vector.extract_strided_slice %19 {offsets = [2, 0], sizes = [2, 32], strides = [1, 1]} : vector<16x32xf32> to vector<2x32xf32>
    %cst_34 = arith.constant dense<0.000000e+00> : vector<2x32xf32>
    %54 = tpu.matmul %49, %4, %cst_34 {dimension_numbers = #tpu.dot_dimension_numbers<[1], [0], [0], [1], [0, 0, 1, 1], [], []>} : vector<2x32xf32>, vector<32x32xf32>, vector<2x32xf32> -> vector<2x32xf32>
    %cst_35 = arith.constant dense<0.000000e+00> : vector<2x32xf32>
    %55 = tpu.matmul %49, %5, %cst_35 {dimension_numbers = #tpu.dot_dimension_numbers<[1], [0], [0], [1], [0, 0, 1, 1], [], []>} : vector<2x32xf32>, vector<32x32xf32>, vector<2x32xf32> -> vector<2x32xf32>
    %cst_36 = arith.constant dense<0.000000e+00> : vector<2x32xf32>
    %56 = tpu.matmul %49, %6, %cst_36 {dimension_numbers = #tpu.dot_dimension_numbers<[1], [0], [0], [1], [0, 0, 1, 1], [], []>} : vector<2x32xf32>, vector<32x32xf32>, vector<2x32xf32> -> vector<2x32xf32>
    %57 = vector.broadcast %10 : vector<1x32xf32> to vector<2x32xf32>
    %58 = arith.addf %56, %57 : vector<2x32xf32>
    %59 = arith.addf %51, %54 : vector<2x32xf32>
    %60 = arith.negf %59 : vector<2x32xf32>
    %61 = math.exp %60 : vector<2x32xf32>
    %cst_37 = arith.constant 1.000000e+00 : f32
    %62 = vector.broadcast %cst_37 : f32 to vector<2x32xf32>
    %63 = arith.addf %62, %61 : vector<2x32xf32>
    %64 = arith.divf %62, %63 : vector<2x32xf32>
    %65 = arith.addf %52, %55 : vector<2x32xf32>
    %66 = arith.negf %65 : vector<2x32xf32>
    %67 = math.exp %66 : vector<2x32xf32>
    %cst_38 = arith.constant 1.000000e+00 : f32
    %68 = vector.broadcast %cst_38 : f32 to vector<2x32xf32>
    %69 = arith.addf %68, %67 : vector<2x32xf32>
    %70 = arith.divf %68, %69 : vector<2x32xf32>
    %71 = arith.mulf %64, %58 : vector<2x32xf32>
    %72 = arith.addf %53, %71 : vector<2x32xf32>
    %73 = math.tanh %72 : vector<2x32xf32>
    %cst_39 = arith.constant 1.000000e+00 : f32
    %74 = vector.broadcast %cst_39 : f32 to vector<2x32xf32>
    %75 = arith.subf %74, %70 : vector<2x32xf32>
    %76 = arith.mulf %75, %73 : vector<2x32xf32>
    %77 = arith.mulf %70, %49 : vector<2x32xf32>
    %78 = arith.addf %76, %77 : vector<2x32xf32>
    %c2 = arith.constant 2 : index
    %c0_40 = arith.constant 0 : index
    %79 = vector.load %arg27[%c2, %c0_40] : memref<16x32xf32, #tpu.memory_space<vmem>>, vector<2x32xf32>
    tpu.vector_store %arg27[%c2, %c0_40], %78 {strides = array<i32>} : memref<16x32xf32, #tpu.memory_space<vmem>>, vector<2x32xf32>,
    %80 = vector.extract_strided_slice %13 {offsets = [4, 0], sizes = [2, 32], strides = [1, 1]} : vector<16x32xf32> to vector<2x32xf32>
    %81 = vector.extract_strided_slice %16 {offsets = [4, 0], sizes = [2, 32], strides = [1, 1]} : vector<16x32xf32> to vector<2x32xf32>
    %82 = vector.extract_strided_slice %19 {offsets = [4, 0], sizes = [2, 32], strides = [1, 1]} : vector<16x32xf32> to vector<2x32xf32>
    %cst_41 = arith.constant dense<0.000000e+00> : vector<2x32xf32>
    %83 = tpu.matmul %78, %4, %cst_41 {dimension_numbers = #tpu.dot_dimension_numbers<[1], [0], [0], [1], [0, 0, 1, 1], [], []>} : vector<2x32xf32>, vector<32x32xf32>, vector<2x32xf32> -> vector<2x32xf32>
    %cst_42 = arith.constant dense<0.000000e+00> : vector<2x32xf32>
    %84 = tpu.matmul %78, %5, %cst_42 {dimension_numbers = #tpu.dot_dimension_numbers<[1], [0], [0], [1], [0, 0, 1, 1], [], []>} : vector<2x32xf32>, vector<32x32xf32>, vector<2x32xf32> -> vector<2x32xf32>
    %cst_43 = arith.constant dense<0.000000e+00> : vector<2x32xf32>
    %85 = tpu.matmul %78, %6, %cst_43 {dimension_numbers = #tpu.dot_dimension_numbers<[1], [0], [0], [1], [0, 0, 1, 1], [], []>} : vector<2x32xf32>, vector<32x32xf32>, vector<2x32xf32> -> vector<2x32xf32>
    %86 = vector.broadcast %10 : vector<1x32xf32> to vector<2x32xf32>
    %87 = arith.addf %85, %86 : vector<2x32xf32>
    %88 = arith.addf %80, %83 : vector<2x32xf32>
    %89 = arith.negf %88 : vector<2x32xf32>
    %90 = math.exp %89 : vector<2x32xf32>
    %cst_44 = arith.constant 1.000000e+00 : f32
    %91 = vector.broadcast %cst_44 : f32 to vector<2x32xf32>
    %92 = arith.addf %91, %90 : vector<2x32xf32>
    %93 = arith.divf %91, %92 : vector<2x32xf32>
    %94 = arith.addf %81, %84 : vector<2x32xf32>
    %95 = arith.negf %94 : vector<2x32xf32>
    %96 = math.exp %95 : vector<2x32xf32>
    %cst_45 = arith.constant 1.000000e+00 : f32
    %97 = vector.broadcast %cst_45 : f32 to vector<2x32xf32>
    %98 = arith.addf %97, %96 : vector<2x32xf32>
    %99 = arith.divf %97, %98 : vector<2x32xf32>
    %100 = arith.mulf %93, %87 : vector<2x32xf32>
    %101 = arith.addf %82, %100 : vector<2x32xf32>
    %102 = math.tanh %101 : vector<2x32xf32>
    %cst_46 = arith.constant 1.000000e+00 : f32
    %103 = vector.broadcast %cst_46 : f32 to vector<2x32xf32>
    %104 = arith.subf %103, %99 : vector<2x32xf32>
    %105 = arith.mulf %104, %102 : vector<2x32xf32>
    %106 = arith.mulf %99, %78 : vector<2x32xf32>
    %107 = arith.addf %105, %106 : vector<2x32xf32>
    %c4 = arith.constant 4 : index
    %c0_47 = arith.constant 0 : index
    %108 = vector.load %arg27[%c4, %c0_47] : memref<16x32xf32, #tpu.memory_space<vmem>>, vector<2x32xf32>
    tpu.vector_store %arg27[%c4, %c0_47], %107 {strides = array<i32>} : memref<16x32xf32, #tpu.memory_space<vmem>>, vector<2x32xf32>,
    %109 = vector.extract_strided_slice %13 {offsets = [6, 0], sizes = [2, 32], strides = [1, 1]} : vector<16x32xf32> to vector<2x32xf32>
    %110 = vector.extract_strided_slice %16 {offsets = [6, 0], sizes = [2, 32], strides = [1, 1]} : vector<16x32xf32> to vector<2x32xf32>
    %111 = vector.extract_strided_slice %19 {offsets = [6, 0], sizes = [2, 32], strides = [1, 1]} : vector<16x32xf32> to vector<2x32xf32>
    %cst_48 = arith.constant dense<0.000000e+00> : vector<2x32xf32>
    %112 = tpu.matmul %107, %4, %cst_48 {dimension_numbers = #tpu.dot_dimension_numbers<[1], [0], [0], [1], [0, 0, 1, 1], [], []>} : vector<2x32xf32>, vector<32x32xf32>, vector<2x32xf32> -> vector<2x32xf32>
    %cst_49 = arith.constant dense<0.000000e+00> : vector<2x32xf32>
    %113 = tpu.matmul %107, %5, %cst_49 {dimension_numbers = #tpu.dot_dimension_numbers<[1], [0], [0], [1], [0, 0, 1, 1], [], []>} : vector<2x32xf32>, vector<32x32xf32>, vector<2x32xf32> -> vector<2x32xf32>
    %cst_50 = arith.constant dense<0.000000e+00> : vector<2x32xf32>
    %114 = tpu.matmul %107, %6, %cst_50 {dimension_numbers = #tpu.dot_dimension_numbers<[1], [0], [0], [1], [0, 0, 1, 1], [], []>} : vector<2x32xf32>, vector<32x32xf32>, vector<2x32xf32> -> vector<2x32xf32>
    %115 = vector.broadcast %10 : vector<1x32xf32> to vector<2x32xf32>
    %116 = arith.addf %114, %115 : vector<2x32xf32>
    %117 = arith.addf %109, %112 : vector<2x32xf32>
    %118 = arith.negf %117 : vector<2x32xf32>
    %119 = math.exp %118 : vector<2x32xf32>
    %cst_51 = arith.constant 1.000000e+00 : f32
    %120 = vector.broadcast %cst_51 : f32 to vector<2x32xf32>
    %121 = arith.addf %120, %119 : vector<2x32xf32>
    %122 = arith.divf %120, %121 : vector<2x32xf32>
    %123 = arith.addf %110, %113 : vector<2x32xf32>
    %124 = arith.negf %123 : vector<2x32xf32>
    %125 = math.exp %124 : vector<2x32xf32>
    %cst_52 = arith.constant 1.000000e+00 : f32
    %126 = vector.broadcast %cst_52 : f32 to vector<2x32xf32>
    %127 = arith.addf %126, %125 : vector<2x32xf32>
    %128 = arith.divf %126, %127 : vector<2x32xf32>
    %129 = arith.mulf %122, %116 : vector<2x32xf32>
    %130 = arith.addf %111, %129 : vector<2x32xf32>
    %131 = math.tanh %130 : vector<2x32xf32>
    %cst_53 = arith.constant 1.000000e+00 : f32
    %132 = vector.broadcast %cst_53 : f32 to vector<2x32xf32>
    %133 = arith.subf %132, %128 : vector<2x32xf32>
    %134 = arith.mulf %133, %131 : vector<2x32xf32>
    %135 = arith.mulf %128, %107 : vector<2x32xf32>
    %136 = arith.addf %134, %135 : vector<2x32xf32>
    %c6 = arith.constant 6 : index
    %c0_54 = arith.constant 0 : index
    %137 = vector.load %arg27[%c6, %c0_54] : memref<16x32xf32, #tpu.memory_space<vmem>>, vector<2x32xf32>
    tpu.vector_store %arg27[%c6, %c0_54], %136 {strides = array<i32>} : memref<16x32xf32, #tpu.memory_space<vmem>>, vector<2x32xf32>,
    %138 = vector.extract_strided_slice %13 {offsets = [8, 0], sizes = [2, 32], strides = [1, 1]} : vector<16x32xf32> to vector<2x32xf32>
    %139 = vector.extract_strided_slice %16 {offsets = [8, 0], sizes = [2, 32], strides = [1, 1]} : vector<16x32xf32> to vector<2x32xf32>
    %140 = vector.extract_strided_slice %19 {offsets = [8, 0], sizes = [2, 32], strides = [1, 1]} : vector<16x32xf32> to vector<2x32xf32>
    %cst_55 = arith.constant dense<0.000000e+00> : vector<2x32xf32>
    %141 = tpu.matmul %136, %4, %cst_55 {dimension_numbers = #tpu.dot_dimension_numbers<[1], [0], [0], [1], [0, 0, 1, 1], [], []>} : vector<2x32xf32>, vector<32x32xf32>, vector<2x32xf32> -> vector<2x32xf32>
    %cst_56 = arith.constant dense<0.000000e+00> : vector<2x32xf32>
    %142 = tpu.matmul %136, %5, %cst_56 {dimension_numbers = #tpu.dot_dimension_numbers<[1], [0], [0], [1], [0, 0, 1, 1], [], []>} : vector<2x32xf32>, vector<32x32xf32>, vector<2x32xf32> -> vector<2x32xf32>
    %cst_57 = arith.constant dense<0.000000e+00> : vector<2x32xf32>
    %143 = tpu.matmul %136, %6, %cst_57 {dimension_numbers = #tpu.dot_dimension_numbers<[1], [0], [0], [1], [0, 0, 1, 1], [], []>} : vector<2x32xf32>, vector<32x32xf32>, vector<2x32xf32> -> vector<2x32xf32>
    %144 = vector.broadcast %10 : vector<1x32xf32> to vector<2x32xf32>
    %145 = arith.addf %143, %144 : vector<2x32xf32>
    %146 = arith.addf %138, %141 : vector<2x32xf32>
    %147 = arith.negf %146 : vector<2x32xf32>
    %148 = math.exp %147 : vector<2x32xf32>
    %cst_58 = arith.constant 1.000000e+00 : f32
    %149 = vector.broadcast %cst_58 : f32 to vector<2x32xf32>
    %150 = arith.addf %149, %148 : vector<2x32xf32>
    %151 = arith.divf %149, %150 : vector<2x32xf32>
    %152 = arith.addf %139, %142 : vector<2x32xf32>
    %153 = arith.negf %152 : vector<2x32xf32>
    %154 = math.exp %153 : vector<2x32xf32>
    %cst_59 = arith.constant 1.000000e+00 : f32
    %155 = vector.broadcast %cst_59 : f32 to vector<2x32xf32>
    %156 = arith.addf %155, %154 : vector<2x32xf32>
    %157 = arith.divf %155, %156 : vector<2x32xf32>
    %158 = arith.mulf %151, %145 : vector<2x32xf32>
    %159 = arith.addf %140, %158 : vector<2x32xf32>
    %160 = math.tanh %159 : vector<2x32xf32>
    %cst_60 = arith.constant 1.000000e+00 : f32
    %161 = vector.broadcast %cst_60 : f32 to vector<2x32xf32>
    %162 = arith.subf %161, %157 : vector<2x32xf32>
    %163 = arith.mulf %162, %160 : vector<2x32xf32>
    %164 = arith.mulf %157, %136 : vector<2x32xf32>
    %165 = arith.addf %163, %164 : vector<2x32xf32>
    %c8 = arith.constant 8 : index
    %c0_61 = arith.constant 0 : index
    %166 = vector.load %arg27[%c8, %c0_61] : memref<16x32xf32, #tpu.memory_space<vmem>>, vector<2x32xf32>
    tpu.vector_store %arg27[%c8, %c0_61], %165 {strides = array<i32>} : memref<16x32xf32, #tpu.memory_space<vmem>>, vector<2x32xf32>,
    %167 = vector.extract_strided_slice %13 {offsets = [10, 0], sizes = [2, 32], strides = [1, 1]} : vector<16x32xf32> to vector<2x32xf32>
    %168 = vector.extract_strided_slice %16 {offsets = [10, 0], sizes = [2, 32], strides = [1, 1]} : vector<16x32xf32> to vector<2x32xf32>
    %169 = vector.extract_strided_slice %19 {offsets = [10, 0], sizes = [2, 32], strides = [1, 1]} : vector<16x32xf32> to vector<2x32xf32>
    %cst_62 = arith.constant dense<0.000000e+00> : vector<2x32xf32>
    %170 = tpu.matmul %165, %4, %cst_62 {dimension_numbers = #tpu.dot_dimension_numbers<[1], [0], [0], [1], [0, 0, 1, 1], [], []>} : vector<2x32xf32>, vector<32x32xf32>, vector<2x32xf32> -> vector<2x32xf32>
    %cst_63 = arith.constant dense<0.000000e+00> : vector<2x32xf32>
    %171 = tpu.matmul %165, %5, %cst_63 {dimension_numbers = #tpu.dot_dimension_numbers<[1], [0], [0], [1], [0, 0, 1, 1], [], []>} : vector<2x32xf32>, vector<32x32xf32>, vector<2x32xf32> -> vector<2x32xf32>
    %cst_64 = arith.constant dense<0.000000e+00> : vector<2x32xf32>
    %172 = tpu.matmul %165, %6, %cst_64 {dimension_numbers = #tpu.dot_dimension_numbers<[1], [0], [0], [1], [0, 0, 1, 1], [], []>} : vector<2x32xf32>, vector<32x32xf32>, vector<2x32xf32> -> vector<2x32xf32>
    %173 = vector.broadcast %10 : vector<1x32xf32> to vector<2x32xf32>
    %174 = arith.addf %172, %173 : vector<2x32xf32>
    %175 = arith.addf %167, %170 : vector<2x32xf32>
    %176 = arith.negf %175 : vector<2x32xf32>
    %177 = math.exp %176 : vector<2x32xf32>
    %cst_65 = arith.constant 1.000000e+00 : f32
    %178 = vector.broadcast %cst_65 : f32 to vector<2x32xf32>
    %179 = arith.addf %178, %177 : vector<2x32xf32>
    %180 = arith.divf %178, %179 : vector<2x32xf32>
    %181 = arith.addf %168, %171 : vector<2x32xf32>
    %182 = arith.negf %181 : vector<2x32xf32>
    %183 = math.exp %182 : vector<2x32xf32>
    %cst_66 = arith.constant 1.000000e+00 : f32
    %184 = vector.broadcast %cst_66 : f32 to vector<2x32xf32>
    %185 = arith.addf %184, %183 : vector<2x32xf32>
    %186 = arith.divf %184, %185 : vector<2x32xf32>
    %187 = arith.mulf %180, %174 : vector<2x32xf32>
    %188 = arith.addf %169, %187 : vector<2x32xf32>
    %189 = math.tanh %188 : vector<2x32xf32>
    %cst_67 = arith.constant 1.000000e+00 : f32
    %190 = vector.broadcast %cst_67 : f32 to vector<2x32xf32>
    %191 = arith.subf %190, %186 : vector<2x32xf32>
    %192 = arith.mulf %191, %189 : vector<2x32xf32>
    %193 = arith.mulf %186, %165 : vector<2x32xf32>
    %194 = arith.addf %192, %193 : vector<2x32xf32>
    %c10 = arith.constant 10 : index
    %c0_68 = arith.constant 0 : index
    %195 = vector.load %arg27[%c10, %c0_68] : memref<16x32xf32, #tpu.memory_space<vmem>>, vector<2x32xf32>
    tpu.vector_store %arg27[%c10, %c0_68], %194 {strides = array<i32>} : memref<16x32xf32, #tpu.memory_space<vmem>>, vector<2x32xf32>,
    %196 = vector.extract_strided_slice %13 {offsets = [12, 0], sizes = [2, 32], strides = [1, 1]} : vector<16x32xf32> to vector<2x32xf32>
    %197 = vector.extract_strided_slice %16 {offsets = [12, 0], sizes = [2, 32], strides = [1, 1]} : vector<16x32xf32> to vector<2x32xf32>
    %198 = vector.extract_strided_slice %19 {offsets = [12, 0], sizes = [2, 32], strides = [1, 1]} : vector<16x32xf32> to vector<2x32xf32>
    %cst_69 = arith.constant dense<0.000000e+00> : vector<2x32xf32>
    %199 = tpu.matmul %194, %4, %cst_69 {dimension_numbers = #tpu.dot_dimension_numbers<[1], [0], [0], [1], [0, 0, 1, 1], [], []>} : vector<2x32xf32>, vector<32x32xf32>, vector<2x32xf32> -> vector<2x32xf32>
    %cst_70 = arith.constant dense<0.000000e+00> : vector<2x32xf32>
    %200 = tpu.matmul %194, %5, %cst_70 {dimension_numbers = #tpu.dot_dimension_numbers<[1], [0], [0], [1], [0, 0, 1, 1], [], []>} : vector<2x32xf32>, vector<32x32xf32>, vector<2x32xf32> -> vector<2x32xf32>
    %cst_71 = arith.constant dense<0.000000e+00> : vector<2x32xf32>
    %201 = tpu.matmul %194, %6, %cst_71 {dimension_numbers = #tpu.dot_dimension_numbers<[1], [0], [0], [1], [0, 0, 1, 1], [], []>} : vector<2x32xf32>, vector<32x32xf32>, vector<2x32xf32> -> vector<2x32xf32>
    %202 = vector.broadcast %10 : vector<1x32xf32> to vector<2x32xf32>
    %203 = arith.addf %201, %202 : vector<2x32xf32>
    %204 = arith.addf %196, %199 : vector<2x32xf32>
    %205 = arith.negf %204 : vector<2x32xf32>
    %206 = math.exp %205 : vector<2x32xf32>
    %cst_72 = arith.constant 1.000000e+00 : f32
    %207 = vector.broadcast %cst_72 : f32 to vector<2x32xf32>
    %208 = arith.addf %207, %206 : vector<2x32xf32>
    %209 = arith.divf %207, %208 : vector<2x32xf32>
    %210 = arith.addf %197, %200 : vector<2x32xf32>
    %211 = arith.negf %210 : vector<2x32xf32>
    %212 = math.exp %211 : vector<2x32xf32>
    %cst_73 = arith.constant 1.000000e+00 : f32
    %213 = vector.broadcast %cst_73 : f32 to vector<2x32xf32>
    %214 = arith.addf %213, %212 : vector<2x32xf32>
    %215 = arith.divf %213, %214 : vector<2x32xf32>
    %216 = arith.mulf %209, %203 : vector<2x32xf32>
    %217 = arith.addf %198, %216 : vector<2x32xf32>
    %218 = math.tanh %217 : vector<2x32xf32>
    %cst_74 = arith.constant 1.000000e+00 : f32
    %219 = vector.broadcast %cst_74 : f32 to vector<2x32xf32>
    %220 = arith.subf %219, %215 : vector<2x32xf32>
    %221 = arith.mulf %220, %218 : vector<2x32xf32>
    %222 = arith.mulf %215, %194 : vector<2x32xf32>
    %223 = arith.addf %221, %222 : vector<2x32xf32>
    %c12 = arith.constant 12 : index
    %c0_75 = arith.constant 0 : index
    %224 = vector.load %arg27[%c12, %c0_75] : memref<16x32xf32, #tpu.memory_space<vmem>>, vector<2x32xf32>
    tpu.vector_store %arg27[%c12, %c0_75], %223 {strides = array<i32>} : memref<16x32xf32, #tpu.memory_space<vmem>>, vector<2x32xf32>,
    %225 = vector.extract_strided_slice %13 {offsets = [14, 0], sizes = [2, 32], strides = [1, 1]} : vector<16x32xf32> to vector<2x32xf32>
    %226 = vector.extract_strided_slice %16 {offsets = [14, 0], sizes = [2, 32], strides = [1, 1]} : vector<16x32xf32> to vector<2x32xf32>
    %227 = vector.extract_strided_slice %19 {offsets = [14, 0], sizes = [2, 32], strides = [1, 1]} : vector<16x32xf32> to vector<2x32xf32>
    %cst_76 = arith.constant dense<0.000000e+00> : vector<2x32xf32>
    %228 = tpu.matmul %223, %4, %cst_76 {dimension_numbers = #tpu.dot_dimension_numbers<[1], [0], [0], [1], [0, 0, 1, 1], [], []>} : vector<2x32xf32>, vector<32x32xf32>, vector<2x32xf32> -> vector<2x32xf32>
    %cst_77 = arith.constant dense<0.000000e+00> : vector<2x32xf32>
    %229 = tpu.matmul %223, %5, %cst_77 {dimension_numbers = #tpu.dot_dimension_numbers<[1], [0], [0], [1], [0, 0, 1, 1], [], []>} : vector<2x32xf32>, vector<32x32xf32>, vector<2x32xf32> -> vector<2x32xf32>
    %cst_78 = arith.constant dense<0.000000e+00> : vector<2x32xf32>
    %230 = tpu.matmul %223, %6, %cst_78 {dimension_numbers = #tpu.dot_dimension_numbers<[1], [0], [0], [1], [0, 0, 1, 1], [], []>} : vector<2x32xf32>, vector<32x32xf32>, vector<2x32xf32> -> vector<2x32xf32>
    %231 = vector.broadcast %10 : vector<1x32xf32> to vector<2x32xf32>
    %232 = arith.addf %230, %231 : vector<2x32xf32>
    %233 = arith.addf %225, %228 : vector<2x32xf32>
    %234 = arith.negf %233 : vector<2x32xf32>
    %235 = math.exp %234 : vector<2x32xf32>
    %cst_79 = arith.constant 1.000000e+00 : f32
    %236 = vector.broadcast %cst_79 : f32 to vector<2x32xf32>
    %237 = arith.addf %236, %235 : vector<2x32xf32>
    %238 = arith.divf %236, %237 : vector<2x32xf32>
    %239 = arith.addf %226, %229 : vector<2x32xf32>
    %240 = arith.negf %239 : vector<2x32xf32>
    %241 = math.exp %240 : vector<2x32xf32>
    %cst_80 = arith.constant 1.000000e+00 : f32
    %242 = vector.broadcast %cst_80 : f32 to vector<2x32xf32>
    %243 = arith.addf %242, %241 : vector<2x32xf32>
    %244 = arith.divf %242, %243 : vector<2x32xf32>
    %245 = arith.mulf %238, %232 : vector<2x32xf32>
    %246 = arith.addf %227, %245 : vector<2x32xf32>
    %247 = math.tanh %246 : vector<2x32xf32>
    %cst_81 = arith.constant 1.000000e+00 : f32
    %248 = vector.broadcast %cst_81 : f32 to vector<2x32xf32>
    %249 = arith.subf %248, %244 : vector<2x32xf32>
    %250 = arith.mulf %249, %247 : vector<2x32xf32>
    %251 = arith.mulf %244, %223 : vector<2x32xf32>
    %252 = arith.addf %250, %251 : vector<2x32xf32>
    %c14 = arith.constant 14 : index
    %c0_82 = arith.constant 0 : index
    %253 = vector.load %arg27[%c14, %c0_82] : memref<16x32xf32, #tpu.memory_space<vmem>>, vector<2x32xf32>
    tpu.vector_store %arg27[%c14, %c0_82], %252 {strides = array<i32>} : memref<16x32xf32, #tpu.memory_space<vmem>>, vector<2x32xf32>,
    %c0_83 = arith.constant 0 : index
    %c0_84 = arith.constant 0 : index
    %c0_85 = arith.constant 0 : index
    %254 = vector.load %arg26[%c0_83, %c0_84, %c0_85] : memref<2x2x32xf32, #tpu.memory_space<vmem>>, vector<1x2x32xf32>
    %255 = vector.shape_cast %254 : vector<1x2x32xf32> to vector<2x32xf32>
    %256 = vector.shape_cast %252 : vector<2x32xf32> to vector<1x2x32xf32>
    tpu.vector_store %arg26[%c0_83, %c0_84, %c0_85], %256 {strides = array<i32>} : memref<2x2x32xf32, #tpu.memory_space<vmem>>, vector<1x2x32xf32>,
    %c0_86 = arith.constant 0 : index
    %c0_87 = arith.constant 0 : index
    %257 = vector.load %arg27[%c0_86, %c0_87] : memref<16x32xf32, #tpu.memory_space<vmem>>, vector<16x32xf32>
    %c0_88 = arith.constant 0 : index
    %c0_89 = arith.constant 0 : index
    %258 = vector.load %arg13[%c0_88, %c0_89] : memref<32x32xf32, #tpu.memory_space<vmem>>, vector<32x32xf32>
    %c0_90 = arith.constant 0 : index
    %c0_91 = arith.constant 0 : index
    %259 = vector.load %arg14[%c0_90, %c0_91] : memref<32x32xf32, #tpu.memory_space<vmem>>, vector<32x32xf32>
    %c0_92 = arith.constant 0 : index
    %c0_93 = arith.constant 0 : index
    %260 = vector.load %arg15[%c0_92, %c0_93] : memref<32x32xf32, #tpu.memory_space<vmem>>, vector<32x32xf32>
    %c0_94 = arith.constant 0 : index
    %c0_95 = arith.constant 0 : index
    %261 = vector.load %arg16[%c0_94, %c0_95] : memref<32x32xf32, #tpu.memory_space<vmem>>, vector<32x32xf32>
    %c0_96 = arith.constant 0 : index
    %c0_97 = arith.constant 0 : index
    %262 = vector.load %arg17[%c0_96, %c0_97] : memref<32x32xf32, #tpu.memory_space<vmem>>, vector<32x32xf32>
    %c0_98 = arith.constant 0 : index
    %c0_99 = arith.constant 0 : index
    %263 = vector.load %arg18[%c0_98, %c0_99] : memref<32x32xf32, #tpu.memory_space<vmem>>, vector<32x32xf32>
    %c0_100 = arith.constant 0 : index
    %c0_101 = arith.constant 0 : index
    %264 = vector.load %arg19[%c0_100, %c0_101] : memref<1x32xf32, #tpu.memory_space<vmem>>, vector<1x32xf32>
    %c0_102 = arith.constant 0 : index
    %c0_103 = arith.constant 0 : index
    %265 = vector.load %arg20[%c0_102, %c0_103] : memref<1x32xf32, #tpu.memory_space<vmem>>, vector<1x32xf32>
    %c0_104 = arith.constant 0 : index
    %c0_105 = arith.constant 0 : index
    %266 = vector.load %arg21[%c0_104, %c0_105] : memref<1x32xf32, #tpu.memory_space<vmem>>, vector<1x32xf32>
    %c0_106 = arith.constant 0 : index
    %c0_107 = arith.constant 0 : index
    %267 = vector.load %arg22[%c0_106, %c0_107] : memref<1x32xf32, #tpu.memory_space<vmem>>, vector<1x32xf32>
    %cst_108 = arith.constant dense<0.000000e+00> : vector<16x32xf32>
    %268 = tpu.matmul %257, %258, %cst_108 {dimension_numbers = #tpu.dot_dimension_numbers<[1], [0], [0], [1], [0, 0, 1, 1], [], []>} : vector<16x32xf32>, vector<32x32xf32>, vector<16x32xf32> -> vector<16x32xf32>
    %269 = vector.broadcast %264 : vector<1x32xf32> to vector<16x32xf32>
    %270 = arith.addf %268, %269 : vector<16x32xf32>
    %cst_109 = arith.constant dense<0.000000e+00> : vector<16x32xf32>
    %271 = tpu.matmul %257, %259, %cst_109 {dimension_numbers = #tpu.dot_dimension_numbers<[1], [0], [0], [1], [0, 0, 1, 1], [], []>} : vector<16x32xf32>, vector<32x32xf32>, vector<16x32xf32> -> vector<16x32xf32>
    %272 = vector.broadcast %265 : vector<1x32xf32> to vector<16x32xf32>
    %273 = arith.addf %271, %272 : vector<16x32xf32>
    %cst_110 = arith.constant dense<0.000000e+00> : vector<16x32xf32>
    %274 = tpu.matmul %257, %260, %cst_110 {dimension_numbers = #tpu.dot_dimension_numbers<[1], [0], [0], [1], [0, 0, 1, 1], [], []>} : vector<16x32xf32>, vector<32x32xf32>, vector<16x32xf32> -> vector<16x32xf32>
    %275 = vector.broadcast %266 : vector<1x32xf32> to vector<16x32xf32>
    %276 = arith.addf %274, %275 : vector<16x32xf32>
    %c1 = arith.constant 1 : index
    %c0_111 = arith.constant 0 : index
    %c0_112 = arith.constant 0 : index
    %277 = vector.load %arg2[%c1, %c0_111, %c0_112] : memref<2x2x32xf32, #tpu.memory_space<vmem>>, vector<1x2x32xf32>
    %278 = vector.shape_cast %277 : vector<1x2x32xf32> to vector<2x32xf32>
    %279 = vector.extract_strided_slice %270 {offsets = [0, 0], sizes = [2, 32], strides = [1, 1]} : vector<16x32xf32> to vector<2x32xf32>
    %280 = vector.extract_strided_slice %273 {offsets = [0, 0], sizes = [2, 32], strides = [1, 1]} : vector<16x32xf32> to vector<2x32xf32>
    %281 = vector.extract_strided_slice %276 {offsets = [0, 0], sizes = [2, 32], strides = [1, 1]} : vector<16x32xf32> to vector<2x32xf32>
    %cst_113 = arith.constant dense<0.000000e+00> : vector<2x32xf32>
    %282 = tpu.matmul %278, %261, %cst_113 {dimension_numbers = #tpu.dot_dimension_numbers<[1], [0], [0], [1], [0, 0, 1, 1], [], []>} : vector<2x32xf32>, vector<32x32xf32>, vector<2x32xf32> -> vector<2x32xf32>
    %cst_114 = arith.constant dense<0.000000e+00> : vector<2x32xf32>
    %283 = tpu.matmul %278, %262, %cst_114 {dimension_numbers = #tpu.dot_dimension_numbers<[1], [0], [0], [1], [0, 0, 1, 1], [], []>} : vector<2x32xf32>, vector<32x32xf32>, vector<2x32xf32> -> vector<2x32xf32>
    %cst_115 = arith.constant dense<0.000000e+00> : vector<2x32xf32>
    %284 = tpu.matmul %278, %263, %cst_115 {dimension_numbers = #tpu.dot_dimension_numbers<[1], [0], [0], [1], [0, 0, 1, 1], [], []>} : vector<2x32xf32>, vector<32x32xf32>, vector<2x32xf32> -> vector<2x32xf32>
    %285 = vector.broadcast %267 : vector<1x32xf32> to vector<2x32xf32>
    %286 = arith.addf %284, %285 : vector<2x32xf32>
    %287 = arith.addf %279, %282 : vector<2x32xf32>
    %288 = arith.negf %287 : vector<2x32xf32>
    %289 = math.exp %288 : vector<2x32xf32>
    %cst_116 = arith.constant 1.000000e+00 : f32
    %290 = vector.broadcast %cst_116 : f32 to vector<2x32xf32>
    %291 = arith.addf %290, %289 : vector<2x32xf32>
    %292 = arith.divf %290, %291 : vector<2x32xf32>
    %293 = arith.addf %280, %283 : vector<2x32xf32>
    %294 = arith.negf %293 : vector<2x32xf32>
    %295 = math.exp %294 : vector<2x32xf32>
    %cst_117 = arith.constant 1.000000e+00 : f32
    %296 = vector.broadcast %cst_117 : f32 to vector<2x32xf32>
    %297 = arith.addf %296, %295 : vector<2x32xf32>
    %298 = arith.divf %296, %297 : vector<2x32xf32>
    %299 = arith.mulf %292, %286 : vector<2x32xf32>
    %300 = arith.addf %281, %299 : vector<2x32xf32>
    %301 = math.tanh %300 : vector<2x32xf32>
    %cst_118 = arith.constant 1.000000e+00 : f32
    %302 = vector.broadcast %cst_118 : f32 to vector<2x32xf32>
    %303 = arith.subf %302, %298 : vector<2x32xf32>
    %304 = arith.mulf %303, %301 : vector<2x32xf32>
    %305 = arith.mulf %298, %278 : vector<2x32xf32>
    %306 = arith.addf %304, %305 : vector<2x32xf32>
    %c0_119 = arith.constant 0 : index
    %c0_120 = arith.constant 0 : index
    %307 = vector.load %arg27[%c0_119, %c0_120] : memref<16x32xf32, #tpu.memory_space<vmem>>, vector<2x32xf32>
    tpu.vector_store %arg27[%c0_119, %c0_120], %306 {strides = array<i32>} : memref<16x32xf32, #tpu.memory_space<vmem>>, vector<2x32xf32>,
    %308 = vector.extract_strided_slice %270 {offsets = [2, 0], sizes = [2, 32], strides = [1, 1]} : vector<16x32xf32> to vector<2x32xf32>
    %309 = vector.extract_strided_slice %273 {offsets = [2, 0], sizes = [2, 32], strides = [1, 1]} : vector<16x32xf32> to vector<2x32xf32>
    %310 = vector.extract_strided_slice %276 {offsets = [2, 0], sizes = [2, 32], strides = [1, 1]} : vector<16x32xf32> to vector<2x32xf32>
    %cst_121 = arith.constant dense<0.000000e+00> : vector<2x32xf32>
    %311 = tpu.matmul %306, %261, %cst_121 {dimension_numbers = #tpu.dot_dimension_numbers<[1], [0], [0], [1], [0, 0, 1, 1], [], []>} : vector<2x32xf32>, vector<32x32xf32>, vector<2x32xf32> -> vector<2x32xf32>
    %cst_122 = arith.constant dense<0.000000e+00> : vector<2x32xf32>
    %312 = tpu.matmul %306, %262, %cst_122 {dimension_numbers = #tpu.dot_dimension_numbers<[1], [0], [0], [1], [0, 0, 1, 1], [], []>} : vector<2x32xf32>, vector<32x32xf32>, vector<2x32xf32> -> vector<2x32xf32>
    %cst_123 = arith.constant dense<0.000000e+00> : vector<2x32xf32>
    %313 = tpu.matmul %306, %263, %cst_123 {dimension_numbers = #tpu.dot_dimension_numbers<[1], [0], [0], [1], [0, 0, 1, 1], [], []>} : vector<2x32xf32>, vector<32x32xf32>, vector<2x32xf32> -> vector<2x32xf32>
    %314 = vector.broadcast %267 : vector<1x32xf32> to vector<2x32xf32>
    %315 = arith.addf %313, %314 : vector<2x32xf32>
    %316 = arith.addf %308, %311 : vector<2x32xf32>
    %317 = arith.negf %316 : vector<2x32xf32>
    %318 = math.exp %317 : vector<2x32xf32>
    %cst_124 = arith.constant 1.000000e+00 : f32
    %319 = vector.broadcast %cst_124 : f32 to vector<2x32xf32>
    %320 = arith.addf %319, %318 : vector<2x32xf32>
    %321 = arith.divf %319, %320 : vector<2x32xf32>
    %322 = arith.addf %309, %312 : vector<2x32xf32>
    %323 = arith.negf %322 : vector<2x32xf32>
    %324 = math.exp %323 : vector<2x32xf32>
    %cst_125 = arith.constant 1.000000e+00 : f32
    %325 = vector.broadcast %cst_125 : f32 to vector<2x32xf32>
    %326 = arith.addf %325, %324 : vector<2x32xf32>
    %327 = arith.divf %325, %326 : vector<2x32xf32>
    %328 = arith.mulf %321, %315 : vector<2x32xf32>
    %329 = arith.addf %310, %328 : vector<2x32xf32>
    %330 = math.tanh %329 : vector<2x32xf32>
    %cst_126 = arith.constant 1.000000e+00 : f32
    %331 = vector.broadcast %cst_126 : f32 to vector<2x32xf32>
    %332 = arith.subf %331, %327 : vector<2x32xf32>
    %333 = arith.mulf %332, %330 : vector<2x32xf32>
    %334 = arith.mulf %327, %306 : vector<2x32xf32>
    %335 = arith.addf %333, %334 : vector<2x32xf32>
    %c2_127 = arith.constant 2 : index
    %c0_128 = arith.constant 0 : index
    %336 = vector.load %arg27[%c2_127, %c0_128] : memref<16x32xf32, #tpu.memory_space<vmem>>, vector<2x32xf32>
    tpu.vector_store %arg27[%c2_127, %c0_128], %335 {strides = array<i32>} : memref<16x32xf32, #tpu.memory_space<vmem>>, vector<2x32xf32>,
    %337 = vector.extract_strided_slice %270 {offsets = [4, 0], sizes = [2, 32], strides = [1, 1]} : vector<16x32xf32> to vector<2x32xf32>
    %338 = vector.extract_strided_slice %273 {offsets = [4, 0], sizes = [2, 32], strides = [1, 1]} : vector<16x32xf32> to vector<2x32xf32>
    %339 = vector.extract_strided_slice %276 {offsets = [4, 0], sizes = [2, 32], strides = [1, 1]} : vector<16x32xf32> to vector<2x32xf32>
    %cst_129 = arith.constant dense<0.000000e+00> : vector<2x32xf32>
    %340 = tpu.matmul %335, %261, %cst_129 {dimension_numbers = #tpu.dot_dimension_numbers<[1], [0], [0], [1], [0, 0, 1, 1], [], []>} : vector<2x32xf32>, vector<32x32xf32>, vector<2x32xf32> -> vector<2x32xf32>
    %cst_130 = arith.constant dense<0.000000e+00> : vector<2x32xf32>
    %341 = tpu.matmul %335, %262, %cst_130 {dimension_numbers = #tpu.dot_dimension_numbers<[1], [0], [0], [1], [0, 0, 1, 1], [], []>} : vector<2x32xf32>, vector<32x32xf32>, vector<2x32xf32> -> vector<2x32xf32>
    %cst_131 = arith.constant dense<0.000000e+00> : vector<2x32xf32>
    %342 = tpu.matmul %335, %263, %cst_131 {dimension_numbers = #tpu.dot_dimension_numbers<[1], [0], [0], [1], [0, 0, 1, 1], [], []>} : vector<2x32xf32>, vector<32x32xf32>, vector<2x32xf32> -> vector<2x32xf32>
    %343 = vector.broadcast %267 : vector<1x32xf32> to vector<2x32xf32>
    %344 = arith.addf %342, %343 : vector<2x32xf32>
    %345 = arith.addf %337, %340 : vector<2x32xf32>
    %346 = arith.negf %345 : vector<2x32xf32>
    %347 = math.exp %346 : vector<2x32xf32>
    %cst_132 = arith.constant 1.000000e+00 : f32
    %348 = vector.broadcast %cst_132 : f32 to vector<2x32xf32>
    %349 = arith.addf %348, %347 : vector<2x32xf32>
    %350 = arith.divf %348, %349 : vector<2x32xf32>
    %351 = arith.addf %338, %341 : vector<2x32xf32>
    %352 = arith.negf %351 : vector<2x32xf32>
    %353 = math.exp %352 : vector<2x32xf32>
    %cst_133 = arith.constant 1.000000e+00 : f32
    %354 = vector.broadcast %cst_133 : f32 to vector<2x32xf32>
    %355 = arith.addf %354, %353 : vector<2x32xf32>
    %356 = arith.divf %354, %355 : vector<2x32xf32>
    %357 = arith.mulf %350, %344 : vector<2x32xf32>
    %358 = arith.addf %339, %357 : vector<2x32xf32>
    %359 = math.tanh %358 : vector<2x32xf32>
    %cst_134 = arith.constant 1.000000e+00 : f32
    %360 = vector.broadcast %cst_134 : f32 to vector<2x32xf32>
    %361 = arith.subf %360, %356 : vector<2x32xf32>
    %362 = arith.mulf %361, %359 : vector<2x32xf32>
    %363 = arith.mulf %356, %335 : vector<2x32xf32>
    %364 = arith.addf %362, %363 : vector<2x32xf32>
    %c4_135 = arith.constant 4 : index
    %c0_136 = arith.constant 0 : index
    %365 = vector.load %arg27[%c4_135, %c0_136] : memref<16x32xf32, #tpu.memory_space<vmem>>, vector<2x32xf32>
    tpu.vector_store %arg27[%c4_135, %c0_136], %364 {strides = array<i32>} : memref<16x32xf32, #tpu.memory_space<vmem>>, vector<2x32xf32>,
    %366 = vector.extract_strided_slice %270 {offsets = [6, 0], sizes = [2, 32], strides = [1, 1]} : vector<16x32xf32> to vector<2x32xf32>
    %367 = vector.extract_strided_slice %273 {offsets = [6, 0], sizes = [2, 32], strides = [1, 1]} : vector<16x32xf32> to vector<2x32xf32>
    %368 = vector.extract_strided_slice %276 {offsets = [6, 0], sizes = [2, 32], strides = [1, 1]} : vector<16x32xf32> to vector<2x32xf32>
    %cst_137 = arith.constant dense<0.000000e+00> : vector<2x32xf32>
    %369 = tpu.matmul %364, %261, %cst_137 {dimension_numbers = #tpu.dot_dimension_numbers<[1], [0], [0], [1], [0, 0, 1, 1], [], []>} : vector<2x32xf32>, vector<32x32xf32>, vector<2x32xf32> -> vector<2x32xf32>
    %cst_138 = arith.constant dense<0.000000e+00> : vector<2x32xf32>
    %370 = tpu.matmul %364, %262, %cst_138 {dimension_numbers = #tpu.dot_dimension_numbers<[1], [0], [0], [1], [0, 0, 1, 1], [], []>} : vector<2x32xf32>, vector<32x32xf32>, vector<2x32xf32> -> vector<2x32xf32>
    %cst_139 = arith.constant dense<0.000000e+00> : vector<2x32xf32>
    %371 = tpu.matmul %364, %263, %cst_139 {dimension_numbers = #tpu.dot_dimension_numbers<[1], [0], [0], [1], [0, 0, 1, 1], [], []>} : vector<2x32xf32>, vector<32x32xf32>, vector<2x32xf32> -> vector<2x32xf32>
    %372 = vector.broadcast %267 : vector<1x32xf32> to vector<2x32xf32>
    %373 = arith.addf %371, %372 : vector<2x32xf32>
    %374 = arith.addf %366, %369 : vector<2x32xf32>
    %375 = arith.negf %374 : vector<2x32xf32>
    %376 = math.exp %375 : vector<2x32xf32>
    %cst_140 = arith.constant 1.000000e+00 : f32
    %377 = vector.broadcast %cst_140 : f32 to vector<2x32xf32>
    %378 = arith.addf %377, %376 : vector<2x32xf32>
    %379 = arith.divf %377, %378 : vector<2x32xf32>
    %380 = arith.addf %367, %370 : vector<2x32xf32>
    %381 = arith.negf %380 : vector<2x32xf32>
    %382 = math.exp %381 : vector<2x32xf32>
    %cst_141 = arith.constant 1.000000e+00 : f32
    %383 = vector.broadcast %cst_141 : f32 to vector<2x32xf32>
    %384 = arith.addf %383, %382 : vector<2x32xf32>
    %385 = arith.divf %383, %384 : vector<2x32xf32>
    %386 = arith.mulf %379, %373 : vector<2x32xf32>
    %387 = arith.addf %368, %386 : vector<2x32xf32>
    %388 = math.tanh %387 : vector<2x32xf32>
    %cst_142 = arith.constant 1.000000e+00 : f32
    %389 = vector.broadcast %cst_142 : f32 to vector<2x32xf32>
    %390 = arith.subf %389, %385 : vector<2x32xf32>
    %391 = arith.mulf %390, %388 : vector<2x32xf32>
    %392 = arith.mulf %385, %364 : vector<2x32xf32>
    %393 = arith.addf %391, %392 : vector<2x32xf32>
    %c6_143 = arith.constant 6 : index
    %c0_144 = arith.constant 0 : index
    %394 = vector.load %arg27[%c6_143, %c0_144] : memref<16x32xf32, #tpu.memory_space<vmem>>, vector<2x32xf32>
    tpu.vector_store %arg27[%c6_143, %c0_144], %393 {strides = array<i32>} : memref<16x32xf32, #tpu.memory_space<vmem>>, vector<2x32xf32>,
    %395 = vector.extract_strided_slice %270 {offsets = [8, 0], sizes = [2, 32], strides = [1, 1]} : vector<16x32xf32> to vector<2x32xf32>
    %396 = vector.extract_strided_slice %273 {offsets = [8, 0], sizes = [2, 32], strides = [1, 1]} : vector<16x32xf32> to vector<2x32xf32>
    %397 = vector.extract_strided_slice %276 {offsets = [8, 0], sizes = [2, 32], strides = [1, 1]} : vector<16x32xf32> to vector<2x32xf32>
    %cst_145 = arith.constant dense<0.000000e+00> : vector<2x32xf32>
    %398 = tpu.matmul %393, %261, %cst_145 {dimension_numbers = #tpu.dot_dimension_numbers<[1], [0], [0], [1], [0, 0, 1, 1], [], []>} : vector<2x32xf32>, vector<32x32xf32>, vector<2x32xf32> -> vector<2x32xf32>
    %cst_146 = arith.constant dense<0.000000e+00> : vector<2x32xf32>
    %399 = tpu.matmul %393, %262, %cst_146 {dimension_numbers = #tpu.dot_dimension_numbers<[1], [0], [0], [1], [0, 0, 1, 1], [], []>} : vector<2x32xf32>, vector<32x32xf32>, vector<2x32xf32> -> vector<2x32xf32>
    %cst_147 = arith.constant dense<0.000000e+00> : vector<2x32xf32>
    %400 = tpu.matmul %393, %263, %cst_147 {dimension_numbers = #tpu.dot_dimension_numbers<[1], [0], [0], [1], [0, 0, 1, 1], [], []>} : vector<2x32xf32>, vector<32x32xf32>, vector<2x32xf32> -> vector<2x32xf32>
    %401 = vector.broadcast %267 : vector<1x32xf32> to vector<2x32xf32>
    %402 = arith.addf %400, %401 : vector<2x32xf32>
    %403 = arith.addf %395, %398 : vector<2x32xf32>
    %404 = arith.negf %403 : vector<2x32xf32>
    %405 = math.exp %404 : vector<2x32xf32>
    %cst_148 = arith.constant 1.000000e+00 : f32
    %406 = vector.broadcast %cst_148 : f32 to vector<2x32xf32>
    %407 = arith.addf %406, %405 : vector<2x32xf32>
    %408 = arith.divf %406, %407 : vector<2x32xf32>
    %409 = arith.addf %396, %399 : vector<2x32xf32>
    %410 = arith.negf %409 : vector<2x32xf32>
    %411 = math.exp %410 : vector<2x32xf32>
    %cst_149 = arith.constant 1.000000e+00 : f32
    %412 = vector.broadcast %cst_149 : f32 to vector<2x32xf32>
    %413 = arith.addf %412, %411 : vector<2x32xf32>
    %414 = arith.divf %412, %413 : vector<2x32xf32>
    %415 = arith.mulf %408, %402 : vector<2x32xf32>
    %416 = arith.addf %397, %415 : vector<2x32xf32>
    %417 = math.tanh %416 : vector<2x32xf32>
    %cst_150 = arith.constant 1.000000e+00 : f32
    %418 = vector.broadcast %cst_150 : f32 to vector<2x32xf32>
    %419 = arith.subf %418, %414 : vector<2x32xf32>
    %420 = arith.mulf %419, %417 : vector<2x32xf32>
    %421 = arith.mulf %414, %393 : vector<2x32xf32>
    %422 = arith.addf %420, %421 : vector<2x32xf32>
    %c8_151 = arith.constant 8 : index
    %c0_152 = arith.constant 0 : index
    %423 = vector.load %arg27[%c8_151, %c0_152] : memref<16x32xf32, #tpu.memory_space<vmem>>, vector<2x32xf32>
    tpu.vector_store %arg27[%c8_151, %c0_152], %422 {strides = array<i32>} : memref<16x32xf32, #tpu.memory_space<vmem>>, vector<2x32xf32>,
    %424 = vector.extract_strided_slice %270 {offsets = [10, 0], sizes = [2, 32], strides = [1, 1]} : vector<16x32xf32> to vector<2x32xf32>
    %425 = vector.extract_strided_slice %273 {offsets = [10, 0], sizes = [2, 32], strides = [1, 1]} : vector<16x32xf32> to vector<2x32xf32>
    %426 = vector.extract_strided_slice %276 {offsets = [10, 0], sizes = [2, 32], strides = [1, 1]} : vector<16x32xf32> to vector<2x32xf32>
    %cst_153 = arith.constant dense<0.000000e+00> : vector<2x32xf32>
    %427 = tpu.matmul %422, %261, %cst_153 {dimension_numbers = #tpu.dot_dimension_numbers<[1], [0], [0], [1], [0, 0, 1, 1], [], []>} : vector<2x32xf32>, vector<32x32xf32>, vector<2x32xf32> -> vector<2x32xf32>
    %cst_154 = arith.constant dense<0.000000e+00> : vector<2x32xf32>
    %428 = tpu.matmul %422, %262, %cst_154 {dimension_numbers = #tpu.dot_dimension_numbers<[1], [0], [0], [1], [0, 0, 1, 1], [], []>} : vector<2x32xf32>, vector<32x32xf32>, vector<2x32xf32> -> vector<2x32xf32>
    %cst_155 = arith.constant dense<0.000000e+00> : vector<2x32xf32>
    %429 = tpu.matmul %422, %263, %cst_155 {dimension_numbers = #tpu.dot_dimension_numbers<[1], [0], [0], [1], [0, 0, 1, 1], [], []>} : vector<2x32xf32>, vector<32x32xf32>, vector<2x32xf32> -> vector<2x32xf32>
    %430 = vector.broadcast %267 : vector<1x32xf32> to vector<2x32xf32>
    %431 = arith.addf %429, %430 : vector<2x32xf32>
    %432 = arith.addf %424, %427 : vector<2x32xf32>
    %433 = arith.negf %432 : vector<2x32xf32>
    %434 = math.exp %433 : vector<2x32xf32>
    %cst_156 = arith.constant 1.000000e+00 : f32
    %435 = vector.broadcast %cst_156 : f32 to vector<2x32xf32>
    %436 = arith.addf %435, %434 : vector<2x32xf32>
    %437 = arith.divf %435, %436 : vector<2x32xf32>
    %438 = arith.addf %425, %428 : vector<2x32xf32>
    %439 = arith.negf %438 : vector<2x32xf32>
    %440 = math.exp %439 : vector<2x32xf32>
    %cst_157 = arith.constant 1.000000e+00 : f32
    %441 = vector.broadcast %cst_157 : f32 to vector<2x32xf32>
    %442 = arith.addf %441, %440 : vector<2x32xf32>
    %443 = arith.divf %441, %442 : vector<2x32xf32>
    %444 = arith.mulf %437, %431 : vector<2x32xf32>
    %445 = arith.addf %426, %444 : vector<2x32xf32>
    %446 = math.tanh %445 : vector<2x32xf32>
    %cst_158 = arith.constant 1.000000e+00 : f32
    %447 = vector.broadcast %cst_158 : f32 to vector<2x32xf32>
    %448 = arith.subf %447, %443 : vector<2x32xf32>
    %449 = arith.mulf %448, %446 : vector<2x32xf32>
    %450 = arith.mulf %443, %422 : vector<2x32xf32>
    %451 = arith.addf %449, %450 : vector<2x32xf32>
    %c10_159 = arith.constant 10 : index
    %c0_160 = arith.constant 0 : index
    %452 = vector.load %arg27[%c10_159, %c0_160] : memref<16x32xf32, #tpu.memory_space<vmem>>, vector<2x32xf32>
    tpu.vector_store %arg27[%c10_159, %c0_160], %451 {strides = array<i32>} : memref<16x32xf32, #tpu.memory_space<vmem>>, vector<2x32xf32>,
    %453 = vector.extract_strided_slice %270 {offsets = [12, 0], sizes = [2, 32], strides = [1, 1]} : vector<16x32xf32> to vector<2x32xf32>
    %454 = vector.extract_strided_slice %273 {offsets = [12, 0], sizes = [2, 32], strides = [1, 1]} : vector<16x32xf32> to vector<2x32xf32>
    %455 = vector.extract_strided_slice %276 {offsets = [12, 0], sizes = [2, 32], strides = [1, 1]} : vector<16x32xf32> to vector<2x32xf32>
    %cst_161 = arith.constant dense<0.000000e+00> : vector<2x32xf32>
    %456 = tpu.matmul %451, %261, %cst_161 {dimension_numbers = #tpu.dot_dimension_numbers<[1], [0], [0], [1], [0, 0, 1, 1], [], []>} : vector<2x32xf32>, vector<32x32xf32>, vector<2x32xf32> -> vector<2x32xf32>
    %cst_162 = arith.constant dense<0.000000e+00> : vector<2x32xf32>
    %457 = tpu.matmul %451, %262, %cst_162 {dimension_numbers = #tpu.dot_dimension_numbers<[1], [0], [0], [1], [0, 0, 1, 1], [], []>} : vector<2x32xf32>, vector<32x32xf32>, vector<2x32xf32> -> vector<2x32xf32>
    %cst_163 = arith.constant dense<0.000000e+00> : vector<2x32xf32>
    %458 = tpu.matmul %451, %263, %cst_163 {dimension_numbers = #tpu.dot_dimension_numbers<[1], [0], [0], [1], [0, 0, 1, 1], [], []>} : vector<2x32xf32>, vector<32x32xf32>, vector<2x32xf32> -> vector<2x32xf32>
    %459 = vector.broadcast %267 : vector<1x32xf32> to vector<2x32xf32>
    %460 = arith.addf %458, %459 : vector<2x32xf32>
    %461 = arith.addf %453, %456 : vector<2x32xf32>
    %462 = arith.negf %461 : vector<2x32xf32>
    %463 = math.exp %462 : vector<2x32xf32>
    %cst_164 = arith.constant 1.000000e+00 : f32
    %464 = vector.broadcast %cst_164 : f32 to vector<2x32xf32>
    %465 = arith.addf %464, %463 : vector<2x32xf32>
    %466 = arith.divf %464, %465 : vector<2x32xf32>
    %467 = arith.addf %454, %457 : vector<2x32xf32>
    %468 = arith.negf %467 : vector<2x32xf32>
    %469 = math.exp %468 : vector<2x32xf32>
    %cst_165 = arith.constant 1.000000e+00 : f32
    %470 = vector.broadcast %cst_165 : f32 to vector<2x32xf32>
    %471 = arith.addf %470, %469 : vector<2x32xf32>
    %472 = arith.divf %470, %471 : vector<2x32xf32>
    %473 = arith.mulf %466, %460 : vector<2x32xf32>
    %474 = arith.addf %455, %473 : vector<2x32xf32>
    %475 = math.tanh %474 : vector<2x32xf32>
    %cst_166 = arith.constant 1.000000e+00 : f32
    %476 = vector.broadcast %cst_166 : f32 to vector<2x32xf32>
    %477 = arith.subf %476, %472 : vector<2x32xf32>
    %478 = arith.mulf %477, %475 : vector<2x32xf32>
    %479 = arith.mulf %472, %451 : vector<2x32xf32>
    %480 = arith.addf %478, %479 : vector<2x32xf32>
    %c12_167 = arith.constant 12 : index
    %c0_168 = arith.constant 0 : index
    %481 = vector.load %arg27[%c12_167, %c0_168] : memref<16x32xf32, #tpu.memory_space<vmem>>, vector<2x32xf32>
    tpu.vector_store %arg27[%c12_167, %c0_168], %480 {strides = array<i32>} : memref<16x32xf32, #tpu.memory_space<vmem>>, vector<2x32xf32>,
    %482 = vector.extract_strided_slice %270 {offsets = [14, 0], sizes = [2, 32], strides = [1, 1]} : vector<16x32xf32> to vector<2x32xf32>
    %483 = vector.extract_strided_slice %273 {offsets = [14, 0], sizes = [2, 32], strides = [1, 1]} : vector<16x32xf32> to vector<2x32xf32>
    %484 = vector.extract_strided_slice %276 {offsets = [14, 0], sizes = [2, 32], strides = [1, 1]} : vector<16x32xf32> to vector<2x32xf32>
    %cst_169 = arith.constant dense<0.000000e+00> : vector<2x32xf32>
    %485 = tpu.matmul %480, %261, %cst_169 {dimension_numbers = #tpu.dot_dimension_numbers<[1], [0], [0], [1], [0, 0, 1, 1], [], []>} : vector<2x32xf32>, vector<32x32xf32>, vector<2x32xf32> -> vector<2x32xf32>
    %cst_170 = arith.constant dense<0.000000e+00> : vector<2x32xf32>
    %486 = tpu.matmul %480, %262, %cst_170 {dimension_numbers = #tpu.dot_dimension_numbers<[1], [0], [0], [1], [0, 0, 1, 1], [], []>} : vector<2x32xf32>, vector<32x32xf32>, vector<2x32xf32> -> vector<2x32xf32>
    %cst_171 = arith.constant dense<0.000000e+00> : vector<2x32xf32>
    %487 = tpu.matmul %480, %263, %cst_171 {dimension_numbers = #tpu.dot_dimension_numbers<[1], [0], [0], [1], [0, 0, 1, 1], [], []>} : vector<2x32xf32>, vector<32x32xf32>, vector<2x32xf32> -> vector<2x32xf32>
    %488 = vector.broadcast %267 : vector<1x32xf32> to vector<2x32xf32>
    %489 = arith.addf %487, %488 : vector<2x32xf32>
    %490 = arith.addf %482, %485 : vector<2x32xf32>
    %491 = arith.negf %490 : vector<2x32xf32>
    %492 = math.exp %491 : vector<2x32xf32>
    %cst_172 = arith.constant 1.000000e+00 : f32
    %493 = vector.broadcast %cst_172 : f32 to vector<2x32xf32>
    %494 = arith.addf %493, %492 : vector<2x32xf32>
    %495 = arith.divf %493, %494 : vector<2x32xf32>
    %496 = arith.addf %483, %486 : vector<2x32xf32>
    %497 = arith.negf %496 : vector<2x32xf32>
    %498 = math.exp %497 : vector<2x32xf32>
    %cst_173 = arith.constant 1.000000e+00 : f32
    %499 = vector.broadcast %cst_173 : f32 to vector<2x32xf32>
    %500 = arith.addf %499, %498 : vector<2x32xf32>
    %501 = arith.divf %499, %500 : vector<2x32xf32>
    %502 = arith.mulf %495, %489 : vector<2x32xf32>
    %503 = arith.addf %484, %502 : vector<2x32xf32>
    %504 = math.tanh %503 : vector<2x32xf32>
    %cst_174 = arith.constant 1.000000e+00 : f32
    %505 = vector.broadcast %cst_174 : f32 to vector<2x32xf32>
    %506 = arith.subf %505, %501 : vector<2x32xf32>
    %507 = arith.mulf %506, %504 : vector<2x32xf32>
    %508 = arith.mulf %501, %480 : vector<2x32xf32>
    %509 = arith.addf %507, %508 : vector<2x32xf32>
    %c14_175 = arith.constant 14 : index
    %c0_176 = arith.constant 0 : index
    %510 = vector.load %arg27[%c14_175, %c0_176] : memref<16x32xf32, #tpu.memory_space<vmem>>, vector<2x32xf32>
    tpu.vector_store %arg27[%c14_175, %c0_176], %509 {strides = array<i32>} : memref<16x32xf32, #tpu.memory_space<vmem>>, vector<2x32xf32>,
    %c1_177 = arith.constant 1 : index
    %c0_178 = arith.constant 0 : index
    %c0_179 = arith.constant 0 : index
    %511 = vector.load %arg26[%c1_177, %c0_178, %c0_179] : memref<2x2x32xf32, #tpu.memory_space<vmem>>, vector<1x2x32xf32>
    %512 = vector.shape_cast %511 : vector<1x2x32xf32> to vector<2x32xf32>
    %513 = vector.shape_cast %509 : vector<2x32xf32> to vector<1x2x32xf32>
    tpu.vector_store %arg26[%c1_177, %c0_178, %c0_179], %513 {strides = array<i32>} : memref<2x2x32xf32, #tpu.memory_space<vmem>>, vector<1x2x32xf32>,
    %c0_180 = arith.constant 0 : index
    %c0_181 = arith.constant 0 : index
    %514 = vector.load %arg27[%c0_180, %c0_181] : memref<16x32xf32, #tpu.memory_space<vmem>>, vector<16x32xf32>
    %c0_182 = arith.constant 0 : index
    %c0_183 = arith.constant 0 : index
    %515 = vector.load %arg23[%c0_182, %c0_183] : memref<32x16xf32, #tpu.memory_space<vmem>>, vector<32x16xf32>
    %c0_184 = arith.constant 0 : index
    %c0_185 = arith.constant 0 : index
    %516 = vector.load %arg24[%c0_184, %c0_185] : memref<1x16xf32, #tpu.memory_space<vmem>>, vector<1x16xf32>
    %cst_186 = arith.constant dense<0.000000e+00> : vector<16x16xf32>
    %517 = tpu.matmul %514, %515, %cst_186 {dimension_numbers = #tpu.dot_dimension_numbers<[1], [0], [0], [1], [0, 0, 1, 1], [], []>} : vector<16x32xf32>, vector<32x16xf32>, vector<16x16xf32> -> vector<16x16xf32>
    %518 = vector.broadcast %516 : vector<1x16xf32> to vector<16x16xf32>
    %519 = arith.addf %517, %518 : vector<16x16xf32>
    %c0_187 = arith.constant 0 : index
    %c0_188 = arith.constant 0 : index
    %520 = vector.load %arg25[%c0_187, %c0_188] : memref<16x16xf32, #tpu.memory_space<vmem>>, vector<16x16xf32>
    tpu.vector_store %arg25[%c0_187, %c0_188], %519 {strides = array<i32>} : memref<16x16xf32, #tpu.memory_space<vmem>>, vector<16x16xf32>,
    return
  }
  func.func @transform_0(%arg0: i32) -> (i32, i32) {
    %c0_i32 = arith.constant 0 : i32
    %c0_i32_0 = arith.constant 0 : i32
    %c0_i32_1 = arith.constant 0 : i32
    return %c0_i32, %c0_i32_0 : i32, i32
  }
  func.func @transform_1(%arg0: i32) -> (i32, i32, i32) {
    %c0_i32 = arith.constant 0 : i32
    %c0_i32_0 = arith.constant 0 : i32
    %c0_i32_1 = arith.constant 0 : i32
    %c0_i32_2 = arith.constant 0 : i32
    return %c0_i32, %c0_i32_0, %c0_i32_1 : i32, i32, i32
  }
  func.func @transform_2(%arg0: i32) -> (i32, i32) {
    %c0_i32 = arith.constant 0 : i32
    %c0_i32_0 = arith.constant 0 : i32
    %c0_i32_1 = arith.constant 0 : i32
    return %c0_i32, %c0_i32_0 : i32, i32
  }
  func.func @transform_3(%arg0: i32) -> (i32, i32) {
    %c0_i32 = arith.constant 0 : i32
    %c0_i32_0 = arith.constant 0 : i32
    %c0_i32_1 = arith.constant 0 : i32
    return %c0_i32, %c0_i32_0 : i32, i32
  }
  func.func @transform_4(%arg0: i32) -> (i32, i32) {
    %c0_i32 = arith.constant 0 : i32
    %c0_i32_0 = arith.constant 0 : i32
    %c0_i32_1 = arith.constant 0 : i32
    return %c0_i32, %c0_i32_0 : i32, i32
  }
  func.func @transform_5(%arg0: i32) -> (i32, i32) {
    %c0_i32 = arith.constant 0 : i32
    %c0_i32_0 = arith.constant 0 : i32
    %c0_i32_1 = arith.constant 0 : i32
    return %c0_i32, %c0_i32_0 : i32, i32
  }
  func.func @transform_6(%arg0: i32) -> (i32, i32) {
    %c0_i32 = arith.constant 0 : i32
    %c0_i32_0 = arith.constant 0 : i32
    %c0_i32_1 = arith.constant 0 : i32
    return %c0_i32, %c0_i32_0 : i32, i32
  }
  func.func @transform_7(%arg0: i32) -> (i32, i32) {
    %c0_i32 = arith.constant 0 : i32
    %c0_i32_0 = arith.constant 0 : i32
    %c0_i32_1 = arith.constant 0 : i32
    return %c0_i32, %c0_i32_0 : i32, i32
  }
  func.func @transform_8(%arg0: i32) -> (i32, i32) {
    %c0_i32 = arith.constant 0 : i32
    %c0_i32_0 = arith.constant 0 : i32
    %c0_i32_1 = arith.constant 0 : i32
    return %c0_i32, %c0_i32_0 : i32, i32
  }
  func.func @transform_9(%arg0: i32) -> (i32, i32) {
    %c0_i32 = arith.constant 0 : i32
    %c0_i32_0 = arith.constant 0 : i32
    %c0_i32_1 = arith.constant 0 : i32
    return %c0_i32, %c0_i32_0 : i32, i32
  }
  func.func @transform_10(%arg0: i32) -> (i32, i32) {
    %c0_i32 = arith.constant 0 : i32
    %c0_i32_0 = arith.constant 0 : i32
    %c0_i32_1 = arith.constant 0 : i32
    return %c0_i32, %c0_i32_0 : i32, i32
  }
  func.func @transform_11(%arg0: i32) -> (i32, i32) {
    %c0_i32 = arith.constant 0 : i32
    %c0_i32_0 = arith.constant 0 : i32
    %c0_i32_1 = arith.constant 0 : i32
    return %c0_i32, %c0_i32_0 : i32, i32
  }
  func.func @transform_12(%arg0: i32) -> (i32, i32) {
    %c0_i32 = arith.constant 0 : i32
    %c0_i32_0 = arith.constant 0 : i32
    %c0_i32_1 = arith.constant 0 : i32
    return %c0_i32, %c0_i32_0 : i32, i32
  }
  func.func @transform_13(%arg0: i32) -> (i32, i32) {
    %c0_i32 = arith.constant 0 : i32
    %c0_i32_0 = arith.constant 0 : i32
    %c0_i32_1 = arith.constant 0 : i32
    return %c0_i32, %c0_i32_0 : i32, i32
  }
  func.func @transform_14(%arg0: i32) -> (i32, i32) {
    %c0_i32 = arith.constant 0 : i32
    %c0_i32_0 = arith.constant 0 : i32
    %c0_i32_1 = arith.constant 0 : i32
    return %c0_i32, %c0_i32_0 : i32, i32
  }
  func.func @transform_15(%arg0: i32) -> (i32, i32) {
    %c0_i32 = arith.constant 0 : i32
    %c0_i32_0 = arith.constant 0 : i32
    %c0_i32_1 = arith.constant 0 : i32
    return %c0_i32, %c0_i32_0 : i32, i32
  }
  func.func @transform_16(%arg0: i32) -> (i32, i32) {
    %c0_i32 = arith.constant 0 : i32
    %c0_i32_0 = arith.constant 0 : i32
    %c0_i32_1 = arith.constant 0 : i32
    return %c0_i32, %c0_i32_0 : i32, i32
  }
  func.func @transform_17(%arg0: i32) -> (i32, i32) {
    %c0_i32 = arith.constant 0 : i32
    %c0_i32_0 = arith.constant 0 : i32
    %c0_i32_1 = arith.constant 0 : i32
    return %c0_i32, %c0_i32_0 : i32, i32
  }
  func.func @transform_18(%arg0: i32) -> (i32, i32) {
    %c0_i32 = arith.constant 0 : i32
    %c0_i32_0 = arith.constant 0 : i32
    %c0_i32_1 = arith.constant 0 : i32
    return %c0_i32, %c0_i32_0 : i32, i32
  }
  func.func @transform_19(%arg0: i32) -> (i32, i32) {
    %c0_i32 = arith.constant 0 : i32
    %c0_i32_0 = arith.constant 0 : i32
    %c0_i32_1 = arith.constant 0 : i32
    return %c0_i32, %c0_i32_0 : i32, i32
  }
  func.func @transform_20(%arg0: i32) -> (i32, i32) {
    %c0_i32 = arith.constant 0 : i32
    %c0_i32_0 = arith.constant 0 : i32
    %c0_i32_1 = arith.constant 0 : i32
    return %c0_i32, %c0_i32_0 : i32, i32
  }
  func.func @transform_21(%arg0: i32) -> (i32, i32) {
    %c0_i32 = arith.constant 0 : i32
    %c0_i32_0 = arith.constant 0 : i32
    %c0_i32_1 = arith.constant 0 : i32
    return %c0_i32, %c0_i32_0 : i32, i32
  }
  func.func @transform_22(%arg0: i32) -> (i32, i32) {
    %c0_i32 = arith.constant 0 : i32
    %c0_i32_0 = arith.constant 0 : i32
    %c0_i32_1 = arith.constant 0 : i32
    return %c0_i32, %c0_i32_0 : i32, i32
  }
  func.func @transform_23(%arg0: i32) -> (i32, i32) {
    %c0_i32 = arith.constant 0 : i32
    %c0_i32_0 = arith.constant 0 : i32
    %c0_i32_1 = arith.constant 0 : i32
    return %c0_i32, %c0_i32_0 : i32, i32
  }
  func.func @transform_24(%arg0: i32) -> (i32, i32) {
    %c0_i32 = arith.constant 0 : i32
    %c0_i32_0 = arith.constant 0 : i32
    %c0_i32_1 = arith.constant 0 : i32
    return %c0_i32, %c0_i32_0 : i32, i32
  }
  func.func @transform_25(%arg0: i32) -> (i32, i32, i32) {
    %c0_i32 = arith.constant 0 : i32
    %c0_i32_0 = arith.constant 0 : i32
    %c0_i32_1 = arith.constant 0 : i32
    %c0_i32_2 = arith.constant 0 : i32
    return %c0_i32, %c0_i32_0, %c0_i32_1 : i32, i32, i32
  }
}

</mosaic_0001>

<llo_original>
// kernel: tpu_custom_call.1
$region0: #{tpu_custom_call.1}
  #allocation0 [shape = 'u32[]', space=smem, size = 0x4, offset = 0x4, fixed_abs, tag = 'smem constant byte address 0x4 - core index']
  #allocation1 [shape = 'u32[144,128]{1,0:T(1,128)}', space=vmem, size = 0x12000, scoped, tag = 'internal scratch']
  #allocation2 [shape = 'f32[16,32]{1,0:T(8,128)}', space=vmem, size = 0x2000, scoped, tag = 'scratch operand']
  %s0 = inlined_call_operand.hbm [shape: f32[16,32], index: 0, kind: input, shape index: {}]
  %s1 = inlined_call_operand.hbm [shape: f32[2,2,32], index: 1, kind: input, shape index: {}]
  %s2 = inlined_call_operand.vmem [shape: f32[32,32], index: 2, kind: input, shape index: {}]
  %s3 = inlined_call_operand.hbm [shape: f32[32,32], index: 3, kind: input, shape index: {}]
  %s4 = inlined_call_operand.hbm [shape: f32[32,32], index: 4, kind: input, shape index: {}]
  %s5 = inlined_call_operand.vmem [shape: f32[32,32], index: 5, kind: input, shape index: {}]
  %s6 = inlined_call_operand.hbm [shape: f32[32,32], index: 6, kind: input, shape index: {}]
  %s7 = inlined_call_operand.hbm [shape: f32[32,32], index: 7, kind: input, shape index: {}]
  %s8 = inlined_call_operand.hbm [shape: f32[1,32], index: 8, kind: input, shape index: {}]
  %s9 = inlined_call_operand.hbm [shape: f32[1,32], index: 9, kind: input, shape index: {}]
  %s10 = inlined_call_operand.hbm [shape: f32[1,32], index: 10, kind: input, shape index: {}]
  %s11 = inlined_call_operand.hbm [shape: f32[1,32], index: 11, kind: input, shape index: {}]
  %s12 = inlined_call_operand.hbm [shape: f32[32,32], index: 12, kind: input, shape index: {}]
  %s13 = inlined_call_operand.vmem [shape: f32[32,32], index: 13, kind: input, shape index: {}]
  %s14 = inlined_call_operand.hbm [shape: f32[32,32], index: 14, kind: input, shape index: {}]
  %s15 = inlined_call_operand.hbm [shape: f32[32,32], index: 15, kind: input, shape index: {}]
  %s16 = inlined_call_operand.hbm [shape: f32[32,32], index: 16, kind: input, shape index: {}]
  %s17 = inlined_call_operand.hbm [shape: f32[32,32], index: 17, kind: input, shape index: {}]
  %s18 = inlined_call_operand.vmem [shape: f32[1,32], index: 18, kind: input, shape index: {}]
  %s19 = inlined_call_operand.vmem [shape: f32[1,32], index: 19, kind: input, shape index: {}]
  %s20 = inlined_call_operand.vmem [shape: f32[1,32], index: 20, kind: input, shape index: {}]
  %s21 = inlined_call_operand.vmem [shape: f32[1,32], index: 21, kind: input, shape index: {}]
  %s22 = inlined_call_operand.vmem [shape: f32[32,16], index: 22, kind: input, shape index: {}]
  %s23 = inlined_call_operand.vmem [shape: f32[1,16], index: 23, kind: input, shape index: {}]
  %s24 = inlined_call_operand.hbm [shape: f32[16,16], index: 24, kind: output, shape index: {0}]
  %s25 = inlined_call_operand.hbm [shape: f32[2,2,32], index: 25, kind: output, shape index: {1}]
  %26 = xla_tuple %s24, %s25
  %s27 = sld [smem:[#allocation0]]
  $region174: #{tpu_custom_call.1} parent=0
    _
  %s29 = ssub.s32 1, %s27
  %s30 = scalar_select 0, %s29, %s27
  $region1: #{tpu_custom_call.1} parent=0
    #allocation3 [shape = 'u8[8192]{0}', space=vmem, size = 0x2000, scoped, tag = 'input window, operand 0, single buffered']
    #allocation4 [shape = 's32[1]{0}', space=sflag, size = 0x4, scoped, tag = 'scoped memory for tpu_custom_call.1']
    #allocation5 [shape = 's32[1]{0}', space=sflag, size = 0x4, scoped, tag = 'scoped memory for tpu_custom_call.1']
    #allocation6 [shape = 'u8[2048]{0}', space=vmem, size = 0x800, scoped, tag = 'input window, operand 1, single buffered']
    #allocation7 [shape = 's32[1]{0}', space=sflag, size = 0x4, scoped, tag = 'scoped memory for tpu_custom_call.1']
    #allocation8 [shape = 'u8[16384]{0}', space=vmem, size = 0x4000, scoped, tag = 'input window, operand 3, single buffered']
    #allocation9 [shape = 'u8[16384]{0}', space=vmem, size = 0x4000, scoped, tag = 'input window, operand 4, single buffered']
    #allocation10 [shape = 's32[1]{0}', space=sflag, size = 0x4, scoped, tag = 'scoped memory for tpu_custom_call.1']
    #allocation11 [shape = 'u8[16384]{0}', space=vmem, size = 0x4000, scoped, tag = 'input window, operand 6, single buffered']
    #allocation12 [shape = 'u8[16384]{0}', space=vmem, size = 0x4000, scoped, tag = 'input window, operand 7, single buffered']
    #allocation13 [shape = 's32[1]{0}', space=sflag, size = 0x4, scoped, tag = 'scoped memory for tpu_custom_call.1']
    #allocation14 [shape = 'u8[512]{0}', space=vmem, size = 0x400, scoped, tag = 'input window, operand 8, single buffered']
    #allocation15 [shape = 'u8[512]{0}', space=vmem, size = 0x400, scoped, tag = 'input window, operand 9, single buffered']
    #allocation16 [shape = 's32[1]{0}', space=sflag, size = 0x4, scoped, tag = 'scoped memory for tpu_custom_call.1']
    #allocation17 [shape = 'u8[512]{0}', space=vmem, size = 0x400, scoped, tag = 'input window, operand 10, single buffered']
    #allocation18 [shape = 'u8[512]{0}', space=vmem, size = 0x400, scoped, tag = 'input window, operand 11, single buffered']
    #allocation19 [shape = 's32[1]{0}', space=sflag, size = 0x4, scoped, tag = 'scoped memory for tpu_custom_call.1']
    #allocation20 [shape = 'u8[16384]{0}', space=vmem, size = 0x4000, scoped, tag = 'input window, operand 12, single buffered']
    #allocation21 [shape = 'u8[16384]{0}', space=vmem, size = 0x4000, scoped, tag = 'input window, operand 14, single buffered']
    #allocation22 [shape = 's32[1]{0}', space=sflag, size = 0x4, scoped, tag = 'scoped memory for tpu_custom_call.1']
    #allocation23 [shape = 'u8[16384]{0}', space=vmem, size = 0x4000, scoped, tag = 'input window, operand 15, single buffered']
    #allocation24 [shape = 'u8[16384]{0}', space=vmem, size = 0x4000, scoped, tag = 'input window, operand 16, single buffered']
    #allocation25 [shape = 's32[1]{0}', space=sflag, size = 0x4, scoped, tag = 'scoped memory for tpu_custom_call.1']
    #allocation26 [shape = 'u8[16384]{0}', space=vmem, size = 0x4000, scoped, tag = 'input window, operand 17, single buffered']
    #allocation27 [shape = 'u8[8192]{0}', space=vmem, size = 0x2000, scoped, tag = 'output window, operand 0, single buffered']
    #allocation28 [shape = 'u8[2048]{0}', space=vmem, size = 0x800, scoped, tag = 'output window, operand 1, single buffered']
    #allocation29 [shape = 's32[1]{0}', space=sflag, size = 0x4, scoped, tag = 'scoped memory for tpu_custom_call.1']
    %31 = vsyncpa [#allocation4], 0
    %32 = vsyncpa [#allocation7], 0
    %33 = vsyncpa [#allocation10], 0
    %34 = vsyncpa [#allocation13], 0
    %35 = vsyncpa [#allocation16], 0
    %36 = vsyncpa [#allocation19], 0
    %37 = vsyncpa [#allocation22], 0
    %38 = vsyncpa [#allocation25], 0
    %39 = vsyncpa [#allocation5], 0
    %40 = vsyncpa [#allocation29], 0
    // Predicated region
    $region2: #{tpu_custom_call.1} parent=1 // pred_check
      _
    $region3: #{tpu_custom_call.1} parent=1 // pred_check_branch
      %42 = sbr.rel (0) target = $region5
    $region4: #{tpu_custom_call.1} parent=1 // pred_region
      %s44 = ssub.s32 256, 256
      %45 = vsyncadd [#allocation4], %s44
      %s46 = sshll.u32 [#allocation3], 4
      %s47 = int_to_ptr.vmem [resolvable:$true] %s46
      %52 = dma.hbm_to_vmem [thread:$0]  %s0, 256, %s47, [#allocation4], 128, 128, 8
    $region5: #{tpu_custom_call.1} parent=1 // pred_fallthru
      _
    // Predicated region
    $region6: #{tpu_custom_call.1} parent=1 // pred_check
      _
    $region7: #{tpu_custom_call.1} parent=1 // pred_check_branch
      %54 = sbr.rel (0) target = $region9
    $region8: #{tpu_custom_call.1} parent=1 // pred_region
      %s56 = ssub.s32 64, 64
      %57 = vsyncadd [#allocation7], %s56
      %s58 = sshll.u32 [#allocation6], 4
      %s59 = int_to_ptr.vmem [resolvable:$true] %s58
      %64 = dma.hbm_to_vmem [thread:$0]  %s1, 64, %s59, [#allocation7], 32, 32, 2
    $region9: #{tpu_custom_call.1} parent=1 // pred_fallthru
      _
    // Predicated region
    $region10: #{tpu_custom_call.1} parent=1 // pred_check
      _
    $region11: #{tpu_custom_call.1} parent=1 // pred_check_branch
      %66 = sbr.rel (0) target = $region13
    $region12: #{tpu_custom_call.1} parent=1 // pred_region
      _
    $region13: #{tpu_custom_call.1} parent=1 // pred_fallthru
      _
    // Predicated region
    $region14: #{tpu_custom_call.1} parent=1 // pred_check
      _
    $region15: #{tpu_custom_call.1} parent=1 // pred_check_branch
      %68 = sbr.rel (0) target = $region17
    $region16: #{tpu_custom_call.1} parent=1 // pred_region
      %s70 = ssub.s32 512, 512
      %71 = vsyncadd [#allocation7], %s70
      %s72 = sshll.u32 [#allocation8], 4
      %s73 = int_to_ptr.vmem [resolvable:$true] %s72
      %78 = dma.hbm_to_vmem [thread:$0]  %s3, 512, %s73, [#allocation7], 128, 128, 8
    $region17: #{tpu_custom_call.1} parent=1 // pred_fallthru
      _
    // Predicated region
    $region18: #{tpu_custom_call.1} parent=1 // pred_check
      _
    $region19: #{tpu_custom_call.1} parent=1 // pred_check_branch
      %80 = sbr.rel (0) target = $region21
    $region20: #{tpu_custom_call.1} parent=1 // pred_region
      %s82 = ssub.s32 512, 512
      %83 = vsyncadd [#allocation10], %s82
      %s84 = sshll.u32 [#allocation9], 4
      %s85 = int_to_ptr.vmem [resolvable:$true] %s84
      %90 = dma.hbm_to_vmem [thread:$0]  %s4, 512, %s85, [#allocation10], 128, 128, 8
    $region21: #{tpu_custom_call.1} parent=1 // pred_fallthru
      _
    // Predicated region
    $region22: #{tpu_custom_call.1} parent=1 // pred_check
      _
    $region23: #{tpu_custom_call.1} parent=1 // pred_check_branch
      %92 = sbr.rel (0) target = $region25
    $region24: #{tpu_custom_call.1} parent=1 // pred_region
      _
    $region25: #{tpu_custom_call.1} parent=1 // pred_fallthru
      _
    // Predicated region
    $region26: #{tpu_custom_call.1} parent=1 // pred_check
      _
    $region27: #{tpu_custom_call.1} parent=1 // pred_check_branch
      %94 = sbr.rel (0) target = $region29
    $region28: #{tpu_custom_call.1} parent=1 // pred_region
      %s96 = ssub.s32 512, 512
      %97 = vsyncadd [#allocation10], %s96
      %s98 = sshll.u32 [#allocation11], 4
      %s99 = int_to_ptr.vmem [resolvable:$true] %s98
      %104 = dma.hbm_to_vmem [thread:$0]  %s6, 512, %s99, [#allocation10], 128, 128, 8
    $region29: #{tpu_custom_call.1} parent=1 // pred_fallthru
      _
    // Predicated region
    $region30: #{tpu_custom_call.1} parent=1 // pred_check
      _
    $region31: #{tpu_custom_call.1} parent=1 // pred_check_branch
      %106 = sbr.rel (0) target = $region33
    $region32: #{tpu_custom_call.1} parent=1 // pred_region
      %s108 = ssub.s32 512, 512
      %109 = vsyncadd [#allocation13], %s108
      %s110 = sshll.u32 [#allocation12], 4
      %s111 = int_to_ptr.vmem [resolvable:$true] %s110
      %116 = dma.hbm_to_vmem [thread:$0]  %s7, 512, %s111, [#allocation13], 128, 128, 8
    $region33: #{tpu_custom_call.1} parent=1 // pred_fallthru
      _
    // Predicated region
    $region34: #{tpu_custom_call.1} parent=1 // pred_check
      _
    $region35: #{tpu_custom_call.1} parent=1 // pred_check_branch
      %118 = sbr.rel (0) target = $region37
    $region36: #{tpu_custom_call.1} parent=1 // pred_region
      %s120 = ssub.s32 16, 16
      %121 = vsyncadd [#allocation13], %s120
      %s123 = sshll.u32 [#allocation14], 4
      %s124 = int_to_ptr.vmem [resolvable:$true] %s123
      %126 = dma.hbm_to_vmem [thread:$0]  %s8, 16, %s124, [#allocation13]
    $region37: #{tpu_custom_call.1} parent=1 // pred_fallthru
      _
    // Predicated region
    $region38: #{tpu_custom_call.1} parent=1 // pred_check
      _
    $region39: #{tpu_custom_call.1} parent=1 // pred_check_branch
      %128 = sbr.rel (0) target = $region41
    $region40: #{tpu_custom_call.1} parent=1 // pred_region
      %s130 = ssub.s32 16, 16
      %131 = vsyncadd [#allocation16], %s130
      %s133 = sshll.u32 [#allocation15], 4
      %s134 = int_to_ptr.vmem [resolvable:$true] %s133
      %136 = dma.hbm_to_vmem [thread:$0]  %s9, 16, %s134, [#allocation16]
    $region41: #{tpu_custom_call.1} parent=1 // pred_fallthru
      _
    // Predicated region
    $region42: #{tpu_custom_call.1} parent=1 // pred_check
      _
    $region43: #{tpu_custom_call.1} parent=1 // pred_check_branch
      %138 = sbr.rel (0) target = $region45
    $region44: #{tpu_custom_call.1} parent=1 // pred_region
      %s140 = ssub.s32 16, 16
      %141 = vsyncadd [#allocation16], %s140
      %s143 = sshll.u32 [#allocation17], 4
      %s144 = int_to_ptr.vmem [resolvable:$true] %s143
      %146 = dma.hbm_to_vmem [thread:$0]  %s10, 16, %s144, [#allocation16]
    $region45: #{tpu_custom_call.1} parent=1 // pred_fallthru
      _
    // Predicated region
    $region46: #{tpu_custom_call.1} parent=1 // pred_check
      _
    $region47: #{tpu_custom_call.1} parent=1 // pred_check_branch
      %148 = sbr.rel (0) target = $region49
    $region48: #{tpu_custom_call.1} parent=1 // pred_region
      %s150 = ssub.s32 16, 16
      %151 = vsyncadd [#allocation19], %s150
      %s153 = sshll.u32 [#allocation18], 4
      %s154 = int_to_ptr.vmem [resolvable:$true] %s153
      %156 = dma.hbm_to_vmem [thread:$0]  %s11, 16, %s154, [#allocation19]
    $region49: #{tpu_custom_call.1} parent=1 // pred_fallthru
      _
    // Predicated region
    $region50: #{tpu_custom_call.1} parent=1 // pred_check
      _
    $region51: #{tpu_custom_call.1} parent=1 // pred_check_branch
      %158 = sbr.rel (0) target = $region53
    $region52: #{tpu_custom_call.1} parent=1 // pred_region
      %s160 = ssub.s32 512, 512
      %161 = vsyncadd [#allocation19], %s160
      %s162 = sshll.u32 [#allocation20], 4
      %s163 = int_to_ptr.vmem [resolvable:$true] %s162
      %168 = dma.hbm_to_vmem [thread:$0]  %s12, 512, %s163, [#allocation19], 128, 128, 8
    $region53: #{tpu_custom_call.1} parent=1 // pred_fallthru
      _
    // Predicated region
    $region54: #{tpu_custom_call.1} parent=1 // pred_check
      _
    $region55: #{tpu_custom_call.1} parent=1 // pred_check_branch
      %170 = sbr.rel (0) target = $region57
    $region56: #{tpu_custom_call.1} parent=1 // pred_region
      _
    $region57: #{tpu_custom_call.1} parent=1 // pred_fallthru
      _
    // Predicated region
    $region58: #{tpu_custom_call.1} parent=1 // pred_check
      _
    $region59: #{tpu_custom_call.1} parent=1 // pred_check_branch
      %172 = sbr.rel (0) target = $region61
    $region60: #{tpu_custom_call.1} parent=1 // pred_region
      %s174 = ssub.s32 512, 512
      %175 = vsyncadd [#allocation22], %s174
      %s176 = sshll.u32 [#allocation21], 4
      %s177 = int_to_ptr.vmem [resolvable:$true] %s176
      %182 = dma.hbm_to_vmem [thread:$0]  %s14, 512, %s177, [#allocation22], 128, 128, 8
    $region61: #{tpu_custom_call.1} parent=1 // pred_fallthru
      _
    // Predicated region
    $region62: #{tpu_custom_call.1} parent=1 // pred_check
      _
    $region63: #{tpu_custom_call.1} parent=1 // pred_check_branch
      %184 = sbr.rel (0) target = $region65
    $region64: #{tpu_custom_call.1} parent=1 // pred_region
      %s186 = ssub.s32 512, 512
      %187 = vsyncadd [#allocation22], %s186
      %s188 = sshll.u32 [#allocation23], 4
      %s189 = int_to_ptr.vmem [resolvable:$true] %s188
      %194 = dma.hbm_to_vmem [thread:$0]  %s15, 512, %s189, [#allocation22], 128, 128, 8
    $region65: #{tpu_custom_call.1} parent=1 // pred_fallthru
      _
    // Predicated region
    $region66: #{tpu_custom_call.1} parent=1 // pred_check
      _
    $region67: #{tpu_custom_call.1} parent=1 // pred_check_branch
      %196 = sbr.rel (0) target = $region69
    $region68: #{tpu_custom_call.1} parent=1 // pred_region
      %s198 = ssub.s32 512, 512
      %199 = vsyncadd [#allocation25], %s198
      %s200 = sshll.u32 [#allocation24], 4
      %s201 = int_to_ptr.vmem [resolvable:$true] %s200
      %206 = dma.hbm_to_vmem [thread:$0]  %s16, 512, %s201, [#allocation25], 128, 128, 8
    $region69: #{tpu_custom_call.1} parent=1 // pred_fallthru
      _
    // Predicated region
    $region70: #{tpu_custom_call.1} parent=1 // pred_check
      _
    $region71: #{tpu_custom_call.1} parent=1 // pred_check_branch
      %208 = sbr.rel (0) target = $region73
    $region72: #{tpu_custom_call.1} parent=1 // pred_region
      %s210 = ssub.s32 512, 512
      %211 = vsyncadd [#allocation25], %s210
      %s212 = sshll.u32 [#allocation26], 4
      %s213 = int_to_ptr.vmem [resolvable:$true] %s212
      %218 = dma.hbm_to_vmem [thread:$0]  %s17, 512, %s213, [#allocation25], 128, 128, 8
    $region73: #{tpu_custom_call.1} parent=1 // pred_fallthru
      _
    // Predicated region
    $region74: #{tpu_custom_call.1} parent=1 // pred_check
      _
    $region75: #{tpu_custom_call.1} parent=1 // pred_check_branch
      %220 = sbr.rel (0) target = $region77
    $region76: #{tpu_custom_call.1} parent=1 // pred_region
      _
    $region77: #{tpu_custom_call.1} parent=1 // pred_fallthru
      _
    // Predicated region
    $region78: #{tpu_custom_call.1} parent=1 // pred_check
      _
    $region79: #{tpu_custom_call.1} parent=1 // pred_check_branch
      %222 = sbr.rel (0) target = $region81
    $region80: #{tpu_custom_call.1} parent=1 // pred_region
      _
    $region81: #{tpu_custom_call.1} parent=1 // pred_fallthru
      _
    // Predicated region
    $region82: #{tpu_custom_call.1} parent=1 // pred_check
      _
    $region83: #{tpu_custom_call.1} parent=1 // pred_check_branch
      %224 = sbr.rel (0) target = $region85
    $region84: #{tpu_custom_call.1} parent=1 // pred_region
      _
    $region85: #{tpu_custom_call.1} parent=1 // pred_fallthru
      _
    // Predicated region
    $region86: #{tpu_custom_call.1} parent=1 // pred_check
      _
    $region87: #{tpu_custom_call.1} parent=1 // pred_check_branch
      %226 = sbr.rel (0) target = $region89
    $region88: #{tpu_custom_call.1} parent=1 // pred_region
      _
    $region89: #{tpu_custom_call.1} parent=1 // pred_fallthru
      _
    // Predicated region
    $region90: #{tpu_custom_call.1} parent=1 // pred_check
      _
    $region91: #{tpu_custom_call.1} parent=1 // pred_check_branch
      %228 = sbr.rel (0) target = $region93
    $region92: #{tpu_custom_call.1} parent=1 // pred_region
      _
    $region93: #{tpu_custom_call.1} parent=1 // pred_fallthru
      _
    // Predicated region
    $region94: #{tpu_custom_call.1} parent=1 // pred_check
      _
    $region95: #{tpu_custom_call.1} parent=1 // pred_check_branch
      %230 = sbr.rel (0) target = $region97
    $region96: #{tpu_custom_call.1} parent=1 // pred_region
      _
    $region97: #{tpu_custom_call.1} parent=1 // pred_fallthru
      _
    // Predicated region
    $region98: #{tpu_custom_call.1} parent=1 // pred_check
      _
    $region99: #{tpu_custom_call.1} parent=1 // pred_check_branch
      %232 = sbr.rel (0) target = $region101
    $region100: #{tpu_custom_call.1} parent=1 // pred_region
      %233 = dma.done [#allocation4], 256
    $region101: #{tpu_custom_call.1} parent=1 // pred_fallthru
      _
    // Predicated region
    $region102: #{tpu_custom_call.1} parent=1 // pred_check
      _
    $region103: #{tpu_custom_call.1} parent=1 // pred_check_branch
      %235 = sbr.rel (0) target = $region105
    $region104: #{tpu_custom_call.1} parent=1 // pred_region
      %236 = dma.done [#allocation7], 64
    $region105: #{tpu_custom_call.1} parent=1 // pred_fallthru
      _
    // Predicated region
    $region106: #{tpu_custom_call.1} parent=1 // pred_check
      _
    $region107: #{tpu_custom_call.1} parent=1 // pred_check_branch
      %238 = sbr.rel (0) target = $region109
    $region108: #{tpu_custom_call.1} parent=1 // pred_region
      %239 = dma.done [#allocation7], 512
    $region109: #{tpu_custom_call.1} parent=1 // pred_fallthru
      _
    // Predicated region
    $region110: #{tpu_custom_call.1} parent=1 // pred_check
      _
    $region111: #{tpu_custom_call.1} parent=1 // pred_check_branch
      %241 = sbr.rel (0) target = $region113
    $region112: #{tpu_custom_call.1} parent=1 // pred_region
      %242 = dma.done [#allocation10], 512
    $region113: #{tpu_custom_call.1} parent=1 // pred_fallthru
      _
    // Predicated region
    $region114: #{tpu_custom_call.1} parent=1 // pred_check
      _
    $region115: #{tpu_custom_call.1} parent=1 // pred_check_branch
      %244 = sbr.rel (0) target = $region117
    $region116: #{tpu_custom_call.1} parent=1 // pred_region
      %245 = dma.done [#allocation10], 512
    $region117: #{tpu_custom_call.1} parent=1 // pred_fallthru
      _
    // Predicated region
    $region118: #{tpu_custom_call.1} parent=1 // pred_check
      _
    $region119: #{tpu_custom_call.1} parent=1 // pred_check_branch
      %247 = sbr.rel (0) target = $region121
    $region120: #{tpu_custom_call.1} parent=1 // pred_region
      %248 = dma.done [#allocation13], 512
    $region121: #{tpu_custom_call.1} parent=1 // pred_fallthru
      _
    // Predicated region
    $region122: #{tpu_custom_call.1} parent=1 // pred_check
      _
    $region123: #{tpu_custom_call.1} parent=1 // pred_check_branch
      %250 = sbr.rel (0) target = $region125
    $region124: #{tpu_custom_call.1} parent=1 // pred_region
      %251 = dma.done [#allocation13], 16
    $region125: #{tpu_custom_call.1} parent=1 // pred_fallthru
      _
    // Predicated region
    $region126: #{tpu_custom_call.1} parent=1 // pred_check
      _
    $region127: #{tpu_custom_call.1} parent=1 // pred_check_branch
      %253 = sbr.rel (0) target = $region129
    $region128: #{tpu_custom_call.1} parent=1 // pred_region
      %254 = dma.done [#allocation16], 16
    $region129: #{tpu_custom_call.1} parent=1 // pred_fallthru
      _
    // Predicated region
    $region130: #{tpu_custom_call.1} parent=1 // pred_check
      _
    $region131: #{tpu_custom_call.1} parent=1 // pred_check_branch
      %256 = sbr.rel (0) target = $region133
    $region132: #{tpu_custom_call.1} parent=1 // pred_region
      %257 = dma.done [#allocation16], 16
    $region133: #{tpu_custom_call.1} parent=1 // pred_fallthru
      _
    // Predicated region
    $region134: #{tpu_custom_call.1} parent=1 // pred_check
      _
    $region135: #{tpu_custom_call.1} parent=1 // pred_check_branch
      %259 = sbr.rel (0) target = $region137
    $region136: #{tpu_custom_call.1} parent=1 // pred_region
      %260 = dma.done [#allocation19], 16
    $region137: #{tpu_custom_call.1} parent=1 // pred_fallthru
      _
    // Predicated region
    $region138: #{tpu_custom_call.1} parent=1 // pred_check
      _
    $region139: #{tpu_custom_call.1} parent=1 // pred_check_branch
      %262 = sbr.rel (0) target = $region141
    $region140: #{tpu_custom_call.1} parent=1 // pred_region
      %263 = dma.done [#allocation19], 512
    $region141: #{tpu_custom_call.1} parent=1 // pred_fallthru
      _
    // Predicated region
    $region142: #{tpu_custom_call.1} parent=1 // pred_check
      _
    $region143: #{tpu_custom_call.1} parent=1 // pred_check_branch
      %265 = sbr.rel (0) target = $region145
    $region144: #{tpu_custom_call.1} parent=1 // pred_region
      %266 = dma.done [#allocation22], 512
    $region145: #{tpu_custom_call.1} parent=1 // pred_fallthru
      _
    // Predicated region
    $region146: #{tpu_custom_call.1} parent=1 // pred_check
      _
    $region147: #{tpu_custom_call.1} parent=1 // pred_check_branch
      %268 = sbr.rel (0) target = $region149
    $region148: #{tpu_custom_call.1} parent=1 // pred_region
      %269 = dma.done [#allocation22], 512
    $region149: #{tpu_custom_call.1} parent=1 // pred_fallthru
      _
    // Predicated region
    $region150: #{tpu_custom_call.1} parent=1 // pred_check
      _
    $region151: #{tpu_custom_call.1} parent=1 // pred_check_branch
      %271 = sbr.rel (0) target = $region153
    $region152: #{tpu_custom_call.1} parent=1 // pred_region
      %272 = dma.done [#allocation25], 512
    $region153: #{tpu_custom_call.1} parent=1 // pred_fallthru
      _
    // Predicated region
    $region154: #{tpu_custom_call.1} parent=1 // pred_check
      _
    $region155: #{tpu_custom_call.1} parent=1 // pred_check_branch
      %274 = sbr.rel (0) target = $region157
    $region156: #{tpu_custom_call.1} parent=1 // pred_region
      %275 = dma.done [#allocation25], 512
    $region157: #{tpu_custom_call.1} parent=1 // pred_fallthru
      _
    %v276 = vld [vmem:[#allocation3] sm:$0xff]
    %v277 = vld [vmem:[#allocation3 + $0x8] sm:$0xff]
    %v278 = vld [vmem:[%s2] sm:$0xff]
    %v279 = vld [vmem:[%s2 + $0x8] sm:$0xff]
    %v280 = vld [vmem:[%s2 + $0x10] sm:$0xff]
    %v281 = vld [vmem:[%s2 + $0x18] sm:$0xff]
    %v282 = vld [vmem:[#allocation8] sm:$0xff]
    %v283 = vld [vmem:[#allocation8 + $0x8] sm:$0xff]
    %v284 = vld [vmem:[#allocation8 + $0x10] sm:$0xff]
    %v285 = vld [vmem:[#allocation8 + $0x18] sm:$0xff]
    %v286 = vld [vmem:[#allocation9] sm:$0xff]
    %v287 = vld [vmem:[#allocation9 + $0x8] sm:$0xff]
    %v288 = vld [vmem:[#allocation9 + $0x10] sm:$0xff]
    %v289 = vld [vmem:[#allocation9 + $0x18] sm:$0xff]
    %v290 = vld [vmem:[%s5] sm:$0xff]
    %v291 = vld [vmem:[%s5 + $0x8] sm:$0xff]
    %v292 = vld [vmem:[%s5 + $0x10] sm:$0xff]
    %v293 = vld [vmem:[%s5 + $0x18] sm:$0xff]
    %v294 = vld [vmem:[#allocation11] sm:$0xff]
    %v295 = vld [vmem:[#allocation11 + $0x8] sm:$0xff]
    %v296 = vld [vmem:[#allocation11 + $0x10] sm:$0xff]
    %v297 = vld [vmem:[#allocation11 + $0x18] sm:$0xff]
    %v298 = vld [vmem:[#allocation12] sm:$0xff]
    %v299 = vld [vmem:[#allocation12 + $0x8] sm:$0xff]
    %v300 = vld [vmem:[#allocation12 + $0x10] sm:$0xff]
    %v301 = vld [vmem:[#allocation12 + $0x18] sm:$0xff]
    %v302 = vld [vmem:[#allocation14] sm:$0x1]
    %v303 = vld [vmem:[#allocation15] sm:$0x1]
    %v304 = vld [vmem:[#allocation17] sm:$0x1]
    %v305 = vld [vmem:[#allocation18] sm:$0x1]
    %v307 = vlaneseq
    %v308 = vshrl.u32 %v307, 7
    %v309 = vsub.s32 0, %v308
    %v310 = vrot.slane %v302, %v309
    %vm312 = vcmask 261120
    %v314 = vsel %vm312, %v276, 0
    %v317 = vsel %vm312, %v277, 0
    %319 = vmatprep.subr.mxu0 0.0
    %320 = vmatpush1.msra.mxu0 %v278
    %321 = vmatprep.subr.mxu0 0.0
    %322 = vmatpush1.msra.mxu0 %v279
    %323 = vmatprep.subr.mxu0 0.0
    %324 = vmatpush1.msra.mxu0 %v280
    %325 = vmatprep.subr.mxu0 0.0
    %326 = vmatpush1.msra.mxu0 %v281
    %327 = vmatprep.subr.mxu0 0.0
    %328 = vmatpush1.msra.mxu0 0.0
    %329 = vmatprep.subr.mxu0 0.0
    %330 = vmatpush1.msra.mxu0 0.0
    %331 = vmatprep.subr.mxu0 0.0
    %332 = vmatpush1.msra.mxu0 0.0
    %333 = vmatprep.subr.mxu0 0.0
    %334 = vmatpush1.msra.mxu0 0.0
    %335 = vmatprep.subr.mxu0 0.0
    %336 = vmatpush1.msra.mxu0 0.0
    %337 = vmatprep.subr.mxu0 0.0
    %338 = vmatpush1.msra.mxu0 0.0
    %339 = vmatprep.subr.mxu0 0.0
    %340 = vmatpush1.msra.mxu0 0.0
    %341 = vmatprep.subr.mxu0 0.0
    %342 = vmatpush1.msra.mxu0 0.0
    %343 = vmatprep.subr.mxu0 0.0
    %344 = vmatpush1.msra.mxu0 0.0
    %345 = vmatprep.subr.mxu0 0.0
    %346 = vmatpush1.msra.mxu0 0.0
    %347 = vmatprep.subr.mxu0 0.0
    %348 = vmatpush1.msra.mxu0 0.0
    %349 = vmatprep.subr.mxu0 0.0
    %350 = vmatpush1.msra.mxu0 0.0
    %351 = vmatprep.subr.mxu0 0.0
    %352 = vmatpush1.msra.mxu0 0.0
    %353 = vmatprep.subr.mxu0 0.0
    %354 = vmatpush1.msra.mxu0 0.0
    %355 = vmatprep.subr.mxu0 0.0
    %356 = vmatpush1.msra.mxu0 0.0
    %357 = vmatprep.subr.mxu0 0.0
    %358 = vmatpush1.msra.mxu0 0.0
    %359 = vmatprep.subr.mxu0 0.0
    %360 = vmatpush1.msra.mxu0 0.0
    %361 = vmatprep.subr.mxu0 0.0
    %362 = vmatpush1.msra.mxu0 0.0
    %363 = vmatprep.subr.mxu0 0.0
    %364 = vmatpush1.msra.mxu0 0.0
    %365 = vmatprep.subr.mxu0 0.0
    %366 = vmatpush1.msra.mxu0 0.0
    %367 = vmatprep.subr.mxu0 0.0
    %368 = vmatpush1.msra.mxu0 0.0
    %369 = vmatprep.subr.mxu0 0.0
    %370 = vmatpush1.msra.mxu0 0.0
    %371 = vmatprep.subr.mxu0 0.0
    %372 = vmatpush1.msra.mxu0 0.0
    %373 = vmatprep.subr.mxu0 0.0
    %374 = vmatpush1.msra.mxu0 0.0
    %375 = vmatprep.subr.mxu0 0.0
    %376 = vmatpush1.msra.mxu0 0.0
    %377 = vmatprep.subr.mxu0 0.0
    %378 = vmatpush1.msra.mxu0 0.0
    %379 = vmatprep.subr.mxu0 0.0
    %380 = vmatpush1.msra.mxu0 0.0
    %381 = vmatprep.subr.mxu0 0.0
    %382 = vmatpush1.msra.mxu0 0.0
    %383 = vmatprep.mubr.f32.mxu0 0.0
    %384 = vmatmul.mubr.f32.gmra.mrb[0].mxu0 %v314
    %v385 = vpop.f32.mrb[0].mxu0
    %v386 = vadd.f32 %v310, %v385
    %v387 = vpop.f32.mrb[0].mxu0
    %388 = vmatprep.mubr.f32.mxu0 0.0
    %389 = vmatmul.mubr.f32.gmra.mrb[0].mxu0 %v317
    %v390 = vpop.f32.mrb[0].mxu0
    %v391 = vadd.f32 %v310, %v390
    %v392 = vpop.f32.mrb[0].mxu0
    %393 = vdwg.mxu0
    %v395 = vlaneseq
    %v396 = vshrl.u32 %v395, 7
    %v397 = vsub.s32 0, %v396
    %v398 = vrot.slane %v303, %v397
    %400 = vmatprep.subr.mxu0 0.0
    %401 = vmatpush1.msra.mxu0 %v282
    %402 = vmatprep.subr.mxu0 0.0
    %403 = vmatpush1.msra.mxu0 %v283
    %404 = vmatprep.subr.mxu0 0.0
    %405 = vmatpush1.msra.mxu0 %v284
    %406 = vmatprep.subr.mxu0 0.0
    %407 = vmatpush1.msra.mxu0 %v285
    %408 = vmatprep.subr.mxu0 0.0
    %409 = vmatpush1.msra.mxu0 0.0
    %410 = vmatprep.subr.mxu0 0.0
    %411 = vmatpush1.msra.mxu0 0.0
    %412 = vmatprep.subr.mxu0 0.0
    %413 = vmatpush1.msra.mxu0 0.0
    %414 = vmatprep.subr.mxu0 0.0
    %415 = vmatpush1.msra.mxu0 0.0
    %416 = vmatprep.subr.mxu0 0.0
    %417 = vmatpush1.msra.mxu0 0.0
    %418 = vmatprep.subr.mxu0 0.0
    %419 = vmatpush1.msra.mxu0 0.0
    %420 = vmatprep.subr.mxu0 0.0
    %421 = vmatpush1.msra.mxu0 0.0
    %422 = vmatprep.subr.mxu0 0.0
    %423 = vmatpush1.msra.mxu0 0.0
    %424 = vmatprep.subr.mxu0 0.0
    %425 = vmatpush1.msra.mxu0 0.0
    %426 = vmatprep.subr.mxu0 0.0
    %427 = vmatpush1.msra.mxu0 0.0
    %428 = vmatprep.subr.mxu0 0.0
    %429 = vmatpush1.msra.mxu0 0.0
    %430 = vmatprep.subr.mxu0 0.0
    %431 = vmatpush1.msra.mxu0 0.0
    %432 = vmatprep.subr.mxu0 0.0
    %433 = vmatpush1.msra.mxu0 0.0
    %434 = vmatprep.subr.mxu0 0.0
    %435 = vmatpush1.msra.mxu0 0.0
    %436 = vmatprep.subr.mxu0 0.0
    %437 = vmatpush1.msra.mxu0 0.0
    %438 = vmatprep.subr.mxu0 0.0
    %439 = vmatpush1.msra.mxu0 0.0
    %440 = vmatprep.subr.mxu0 0.0
    %441 = vmatpush1.msra.mxu0 0.0
    %442 = vmatprep.subr.mxu0 0.0
    %443 = vmatpush1.msra.mxu0 0.0
    %444 = vmatprep.subr.mxu0 0.0
    %445 = vmatpush1.msra.mxu0 0.0
    %446 = vmatprep.subr.mxu0 0.0
    %447 = vmatpush1.msra.mxu0 0.0
    %448 = vmatprep.subr.mxu0 0.0
    %449 = vmatpush1.msra.mxu0 0.0
    %450 = vmatprep.subr.mxu0 0.0
    %451 = vmatpush1.msra.mxu0 0.0
    %452 = vmatprep.subr.mxu0 0.0
    %453 = vmatpush1.msra.mxu0 0.0
    %454 = vmatprep.subr.mxu0 0.0
    %455 = vmatpush1.msra.mxu0 0.0
    %456 = vmatprep.subr.mxu0 0.0
    %457 = vmatpush1.msra.mxu0 0.0
    %458 = vmatprep.subr.mxu0 0.0
    %459 = vmatpush1.msra.mxu0 0.0
    %460 = vmatprep.subr.mxu0 0.0
    %461 = vmatpush1.msra.mxu0 0.0
    %462 = vmatprep.subr.mxu0 0.0
    %463 = vmatpush1.msra.mxu0 0.0
    %464 = vmatprep.mubr.f32.mxu0 0.0
    %465 = vmatmul.mubr.f32.gmra.mrb[0].mxu0 %v314
    %v466 = vpop.f32.mrb[0].mxu0
    %v467 = vadd.f32 %v398, %v466
    %v468 = vpop.f32.mrb[0].mxu0
    %469 = vmatprep.mubr.f32.mxu0 0.0
    %470 = vmatmul.mubr.f32.gmra.mrb[0].mxu0 %v317
    %v471 = vpop.f32.mrb[0].mxu0
    %v472 = vadd.f32 %v398, %v471
    %v473 = vpop.f32.mrb[0].mxu0
    %474 = vdwg.mxu0
    %v476 = vlaneseq
    %v477 = vshrl.u32 %v476, 7
    %v478 = vsub.s32 0, %v477
    %v479 = vrot.slane %v304, %v478
    %481 = vmatprep.subr.mxu0 0.0
    %482 = vmatpush1.msra.mxu0 %v286
    %483 = vmatprep.subr.mxu0 0.0
    %484 = vmatpush1.msra.mxu0 %v287
    %485 = vmatprep.subr.mxu0 0.0
    %486 = vmatpush1.msra.mxu0 %v288
    %487 = vmatprep.subr.mxu0 0.0
    %488 = vmatpush1.msra.mxu0 %v289
    %489 = vmatprep.subr.mxu0 0.0
    %490 = vmatpush1.msra.mxu0 0.0
    %491 = vmatprep.subr.mxu0 0.0
    %492 = vmatpush1.msra.mxu0 0.0
    %493 = vmatprep.subr.mxu0 0.0
    %494 = vmatpush1.msra.mxu0 0.0
    %495 = vmatprep.subr.mxu0 0.0
    %496 = vmatpush1.msra.mxu0 0.0
    %497 = vmatprep.subr.mxu0 0.0
    %498 = vmatpush1.msra.mxu0 0.0
    %499 = vmatprep.subr.mxu0 0.0
    %500 = vmatpush1.msra.mxu0 0.0
    %501 = vmatprep.subr.mxu0 0.0
    %502 = vmatpush1.msra.mxu0 0.0
    %503 = vmatprep.subr.mxu0 0.0
    %504 = vmatpush1.msra.mxu0 0.0
    %505 = vmatprep.subr.mxu0 0.0
    %506 = vmatpush1.msra.mxu0 0.0
    %507 = vmatprep.subr.mxu0 0.0
    %508 = vmatpush1.msra.mxu0 0.0
    %509 = vmatprep.subr.mxu0 0.0
    %510 = vmatpush1.msra.mxu0 0.0
    %511 = vmatprep.subr.mxu0 0.0
    %512 = vmatpush1.msra.mxu0 0.0
    %513 = vmatprep.subr.mxu0 0.0
    %514 = vmatpush1.msra.mxu0 0.0
    %515 = vmatprep.subr.mxu0 0.0
    %516 = vmatpush1.msra.mxu0 0.0
    %517 = vmatprep.subr.mxu0 0.0
    %518 = vmatpush1.msra.mxu0 0.0
    %519 = vmatprep.subr.mxu0 0.0
    %520 = vmatpush1.msra.mxu0 0.0
    %521 = vmatprep.subr.mxu0 0.0
    %522 = vmatpush1.msra.mxu0 0.0
    %523 = vmatprep.subr.mxu0 0.0
    %524 = vmatpush1.msra.mxu0 0.0
    %525 = vmatprep.subr.mxu0 0.0
    %526 = vmatpush1.msra.mxu0 0.0
    %527 = vmatprep.subr.mxu0 0.0
    %528 = vmatpush1.msra.mxu0 0.0
    %529 = vmatprep.subr.mxu0 0.0
    %530 = vmatpush1.msra.mxu0 0.0
    %531 = vmatprep.subr.mxu0 0.0
    %532 = vmatpush1.msra.mxu0 0.0
    %533 = vmatprep.subr.mxu0 0.0
    %534 = vmatpush1.msra.mxu0 0.0
    %535 = vmatprep.subr.mxu0 0.0
    %536 = vmatpush1.msra.mxu0 0.0
    %537 = vmatprep.subr.mxu0 0.0
    %538 = vmatpush1.msra.mxu0 0.0
    %539 = vmatprep.subr.mxu0 0.0
    %540 = vmatpush1.msra.mxu0 0.0
    %541 = vmatprep.subr.mxu0 0.0
    %542 = vmatpush1.msra.mxu0 0.0
    %543 = vmatprep.subr.mxu0 0.0
    %544 = vmatpush1.msra.mxu0 0.0
    %545 = vmatprep.mubr.f32.mxu0 0.0
    %546 = vmatmul.mubr.f32.gmra.mrb[0].mxu0 %v314
    %v547 = vpop.f32.mrb[0].mxu0
    %v548 = vadd.f32 %v479, %v547
    %v549 = vpop.f32.mrb[0].mxu0
    %550 = vmatprep.mubr.f32.mxu0 0.0
    %551 = vmatmul.mubr.f32.gmra.mrb[0].mxu0 %v317
    %v552 = vpop.f32.mrb[0].mxu0
    %v553 = vadd.f32 %v479, %v552
    %v554 = vpop.f32.mrb[0].mxu0
    %555 = vdwg.mxu0
    %v556 = vld [vmem:[#allocation6] sm:$0x3]
    %v558 = vsel %vm312, %v556, 0
    %560 = vmatprep.subr.mxu0 0.0
    %561 = vmatpush1.msra.mxu0 %v290
    %562 = vmatprep.subr.mxu0 0.0
    %563 = vmatpush1.msra.mxu0 %v291
    %564 = vmatprep.subr.mxu0 0.0
    %565 = vmatpush1.msra.mxu0 %v292
    %566 = vmatprep.subr.mxu0 0.0
    %567 = vmatpush1.msra.mxu0 %v293
    %568 = vmatprep.subr.mxu0 0.0
    %569 = vmatpush1.msra.mxu0 0.0
    %570 = vmatprep.subr.mxu0 0.0
    %571 = vmatpush1.msra.mxu0 0.0
    %572 = vmatprep.subr.mxu0 0.0
    %573 = vmatpush1.msra.mxu0 0.0
    %574 = vmatprep.subr.mxu0 0.0
    %575 = vmatpush1.msra.mxu0 0.0
    %576 = vmatprep.subr.mxu0 0.0
    %577 = vmatpush1.msra.mxu0 0.0
    %578 = vmatprep.subr.mxu0 0.0
    %579 = vmatpush1.msra.mxu0 0.0
    %580 = vmatprep.subr.mxu0 0.0
    %581 = vmatpush1.msra.mxu0 0.0
    %582 = vmatprep.subr.mxu0 0.0
    %583 = vmatpush1.msra.mxu0 0.0
    %584 = vmatprep.subr.mxu0 0.0
    %585 = vmatpush1.msra.mxu0 0.0
    %586 = vmatprep.subr.mxu0 0.0
    %587 = vmatpush1.msra.mxu0 0.0
    %588 = vmatprep.subr.mxu0 0.0
    %589 = vmatpush1.msra.mxu0 0.0
    %590 = vmatprep.subr.mxu0 0.0
    %591 = vmatpush1.msra.mxu0 0.0
    %592 = vmatprep.subr.mxu0 0.0
    %593 = vmatpush1.msra.mxu0 0.0
    %594 = vmatprep.subr.mxu0 0.0
    %595 = vmatpush1.msra.mxu0 0.0
    %596 = vmatprep.subr.mxu0 0.0
    %597 = vmatpush1.msra.mxu0 0.0
    %598 = vmatprep.subr.mxu0 0.0
    %599 = vmatpush1.msra.mxu0 0.0
    %600 = vmatprep.subr.mxu0 0.0
    %601 = vmatpush1.msra.mxu0 0.0
    %602 = vmatprep.subr.mxu0 0.0
    %603 = vmatpush1.msra.mxu0 0.0
    %604 = vmatprep.subr.mxu0 0.0
    %605 = vmatpush1.msra.mxu0 0.0
    %606 = vmatprep.subr.mxu0 0.0
    %607 = vmatpush1.msra.mxu0 0.0
    %608 = vmatprep.subr.mxu0 0.0
    %609 = vmatpush1.msra.mxu0 0.0
    %610 = vmatprep.subr.mxu0 0.0
    %611 = vmatpush1.msra.mxu0 0.0
    %612 = vmatprep.subr.mxu0 0.0
    %613 = vmatpush1.msra.mxu0 0.0
    %614 = vmatprep.subr.mxu0 0.0
    %615 = vmatpush1.msra.mxu0 0.0
    %616 = vmatprep.subr.mxu0 0.0
    %617 = vmatpush1.msra.mxu0 0.0
    %618 = vmatprep.subr.mxu0 0.0
    %619 = vmatpush1.msra.mxu0 0.0
    %620 = vmatprep.subr.mxu0 0.0
    %621 = vmatpush1.msra.mxu0 0.0
    %622 = vmatprep.subr.mxu0 0.0
    %623 = vmatpush1.msra.mxu0 0.0
    %624 = vmatprep.mubr.f32.mxu0 0.0
    %625 = vmatmul.mubr.f32.gmra.mrb[0].mxu0 %v558
    %v626 = vpop.f32.mrb[0].mxu0
    %v627 = vadd.f32 0.0, %v626
    %v628 = vpop.f32.mrb[0].mxu0
    %629 = vdwg.mxu0
    %630 = vmatprep.subr.mxu0 0.0
    %631 = vmatpush1.msra.mxu0 %v294
    %632 = vmatprep.subr.mxu0 0.0
    %633 = vmatpush1.msra.mxu0 %v295
    %634 = vmatprep.subr.mxu0 0.0
    %635 = vmatpush1.msra.mxu0 %v296
    %636 = vmatprep.subr.mxu0 0.0
    %637 = vmatpush1.msra.mxu0 %v297
    %638 = vmatprep.subr.mxu0 0.0
    %639 = vmatpush1.msra.mxu0 0.0
    %640 = vmatprep.subr.mxu0 0.0
    %641 = vmatpush1.msra.mxu0 0.0
    %642 = vmatprep.subr.mxu0 0.0
    %643 = vmatpush1.msra.mxu0 0.0
    %644 = vmatprep.subr.mxu0 0.0
    %645 = vmatpush1.msra.mxu0 0.0
    %646 = vmatprep.subr.mxu0 0.0
    %647 = vmatpush1.msra.mxu0 0.0
    %648 = vmatprep.subr.mxu0 0.0
    %649 = vmatpush1.msra.mxu0 0.0
    %650 = vmatprep.subr.mxu0 0.0
    %651 = vmatpush1.msra.mxu0 0.0
    %652 = vmatprep.subr.mxu0 0.0
    %653 = vmatpush1.msra.mxu0 0.0
    %654 = vmatprep.subr.mxu0 0.0
    %655 = vmatpush1.msra.mxu0 0.0
    %656 = vmatprep.subr.mxu0 0.0
    %657 = vmatpush1.msra.mxu0 0.0
    %658 = vmatprep.subr.mxu0 0.0
    %659 = vmatpush1.msra.mxu0 0.0
    %660 = vmatprep.subr.mxu0 0.0
    %661 = vmatpush1.msra.mxu0 0.0
    %662 = vmatprep.subr.mxu0 0.0
    %663 = vmatpush1.msra.mxu0 0.0
    %664 = vmatprep.subr.mxu0 0.0
    %665 = vmatpush1.msra.mxu0 0.0
    %666 = vmatprep.subr.mxu0 0.0
    %667 = vmatpush1.msra.mxu0 0.0
    %668 = vmatprep.subr.mxu0 0.0
    %669 = vmatpush1.msra.mxu0 0.0
    %670 = vmatprep.subr.mxu0 0.0
    %671 = vmatpush1.msra.mxu0 0.0
    %672 = vmatprep.subr.mxu0 0.0
    %673 = vmatpush1.msra.mxu0 0.0
    %674 = vmatprep.subr.mxu0 0.0
    %675 = vmatpush1.msra.mxu0 0.0
    %676 = vmatprep.subr.mxu0 0.0
    %677 = vmatpush1.msra.mxu0 0.0
    %678 = vmatprep.subr.mxu0 0.0
    %679 = vmatpush1.msra.mxu0 0.0
    %680 = vmatprep.subr.mxu0 0.0
    %681 = vmatpush1.msra.mxu0 0.0
    %682 = vmatprep.subr.mxu0 0.0
    %683 = vmatpush1.msra.mxu0 0.0
    %684 = vmatprep.subr.mxu0 0.0
    %685 = vmatpush1.msra.mxu0 0.0
    %686 = vmatprep.subr.mxu0 0.0
    %687 = vmatpush1.msra.mxu0 0.0
    %688 = vmatprep.subr.mxu0 0.0
    %689 = vmatpush1.msra.mxu0 0.0
    %690 = vmatprep.subr.mxu0 0.0
    %691 = vmatpush1.msra.mxu0 0.0
    %692 = vmatprep.subr.mxu0 0.0
    %693 = vmatpush1.msra.mxu0 0.0
    %694 = vmatprep.mubr.f32.mxu0 0.0
    %695 = vmatmul.mubr.f32.gmra.mrb[0].mxu0 %v558
    %v696 = vpop.f32.mrb[0].mxu0
    %v697 = vadd.f32 0.0, %v696
    %v698 = vpop.f32.mrb[0].mxu0
    %699 = vdwg.mxu0
    %v701 = vlaneseq
    %v702 = vshrl.u32 %v701, 7
    %v703 = vsub.s32 0, %v702
    %v704 = vrot.slane %v305, %v703
    %706 = vmatprep.subr.mxu0 0.0
    %707 = vmatpush1.msra.mxu0 %v298
    %708 = vmatprep.subr.mxu0 0.0
    %709 = vmatpush1.msra.mxu0 %v299
    %710 = vmatprep.subr.mxu0 0.0
    %711 = vmatpush1.msra.mxu0 %v300
    %712 = vmatprep.subr.mxu0 0.0
    %713 = vmatpush1.msra.mxu0 %v301
    %714 = vmatprep.subr.mxu0 0.0
    %715 = vmatpush1.msra.mxu0 0.0
    %716 = vmatprep.subr.mxu0 0.0
    %717 = vmatpush1.msra.mxu0 0.0
    %718 = vmatprep.subr.mxu0 0.0
    %719 = vmatpush1.msra.mxu0 0.0
    %720 = vmatprep.subr.mxu0 0.0
    %721 = vmatpush1.msra.mxu0 0.0
    %722 = vmatprep.subr.mxu0 0.0
    %723 = vmatpush1.msra.mxu0 0.0
    %724 = vmatprep.subr.mxu0 0.0
    %725 = vmatpush1.msra.mxu0 0.0
    %726 = vmatprep.subr.mxu0 0.0
    %727 = vmatpush1.msra.mxu0 0.0
    %728 = vmatprep.subr.mxu0 0.0
    %729 = vmatpush1.msra.mxu0 0.0
    %730 = vmatprep.subr.mxu0 0.0
    %731 = vmatpush1.msra.mxu0 0.0
    %732 = vmatprep.subr.mxu0 0.0
    %733 = vmatpush1.msra.mxu0 0.0
    %734 = vmatprep.subr.mxu0 0.0
    %735 = vmatpush1.msra.mxu0 0.0
    %736 = vmatprep.subr.mxu0 0.0
    %737 = vmatpush1.msra.mxu0 0.0
    %738 = vmatprep.subr.mxu0 0.0
    %739 = vmatpush1.msra.mxu0 0.0
    %740 = vmatprep.subr.mxu0 0.0
    %741 = vmatpush1.msra.mxu0 0.0
    %742 = vmatprep.subr.mxu0 0.0
    %743 = vmatpush1.msra.mxu0 0.0
    %744 = vmatprep.subr.mxu0 0.0
    %745 = vmatpush1.msra.mxu0 0.0
    %746 = vmatprep.subr.mxu0 0.0
    %747 = vmatpush1.msra.mxu0 0.0
    %748 = vmatprep.subr.mxu0 0.0
    %749 = vmatpush1.msra.mxu0 0.0
    %750 = vmatprep.subr.mxu0 0.0
    %751 = vmatpush1.msra.mxu0 0.0
    %752 = vmatprep.subr.mxu0 0.0
    %753 = vmatpush1.msra.mxu0 0.0
    %754 = vmatprep.subr.mxu0 0.0
    %755 = vmatpush1.msra.mxu0 0.0
    %756 = vmatprep.subr.mxu0 0.0
    %757 = vmatpush1.msra.mxu0 0.0
    %758 = vmatprep.subr.mxu0 0.0
    %759 = vmatpush1.msra.mxu0 0.0
    %760 = vmatprep.subr.mxu0 0.0
    %761 = vmatpush1.msra.mxu0 0.0
    %762 = vmatprep.subr.mxu0 0.0
    %763 = vmatpush1.msra.mxu0 0.0
    %764 = vmatprep.subr.mxu0 0.0
    %765 = vmatpush1.msra.mxu0 0.0
    %766 = vmatprep.subr.mxu0 0.0
    %767 = vmatpush1.msra.mxu0 0.0
    %768 = vmatprep.subr.mxu0 0.0
    %769 = vmatpush1.msra.mxu0 0.0
    %770 = vmatprep.mubr.f32.mxu0 0.0
    %771 = vmatmul.mubr.f32.gmra.mrb[0].mxu0 %v558
    %v772 = vpop.f32.mrb[0].mxu0
    %v773 = vadd.f32 %v704, %v772
    %v774 = vpop.f32.mrb[0].mxu0
    %775 = vdwg.mxu0
    %v776 = vadd.f32 %v386, %v627
    %v777 = vxor.u32 %v776, 2147483648
    %v778 = vmul.f32 %v777, 1.442695
    %v779 = vpow.pop %v778
    %v780 = vadd.f32 %v779, 1.0
    %v781 = vrcp.pop %v780
    %v782 = vmul.f32 1.0, %v781
    %v783 = vadd.f32 %v467, %v697
    %v784 = vxor.u32 %v783, 2147483648
    %v785 = vmul.f32 %v784, 1.442695
    %v786 = vpow.pop %v785
    %v787 = vadd.f32 %v786, 1.0
    %v788 = vrcp.pop %v787
    %v789 = vmul.f32 1.0, %v788
    %v790 = vmul.f32 %v782, %v773
    %v791 = vadd.f32 %v548, %v790
    %v792 = vtanh.pop %v791
    %v793 = vsub.f32 1.0, %v789
    %v794 = vmul.f32 %v793, %v792
    %v795 = vmul.f32 %v789, %v556
    %v796 = vadd.f32 %v794, %v795
    %vm797 = vcmask 254976
    %798 = vst.msk [vmem:[#allocation2] sm:$0x3] %vm797, %v796
    %v800 = vsel %vm312, %v796, 0
    %802 = vmatprep.subr.mxu0 0.0
    %803 = vmatpush1.msra.mxu0 %v290
    %804 = vmatprep.subr.mxu0 0.0
    %805 = vmatpush1.msra.mxu0 %v291
    %806 = vmatprep.subr.mxu0 0.0
    %807 = vmatpush1.msra.mxu0 %v292
    %808 = vmatprep.subr.mxu0 0.0
    %809 = vmatpush1.msra.mxu0 %v293
    %810 = vmatprep.subr.mxu0 0.0
    %811 = vmatpush1.msra.mxu0 0.0
    %812 = vmatprep.subr.mxu0 0.0
    %813 = vmatpush1.msra.mxu0 0.0
    %814 = vmatprep.subr.mxu0 0.0
    %815 = vmatpush1.msra.mxu0 0.0
    %816 = vmatprep.subr.mxu0 0.0
    %817 = vmatpush1.msra.mxu0 0.0
    %818 = vmatprep.subr.mxu0 0.0
    %819 = vmatpush1.msra.mxu0 0.0
    %820 = vmatprep.subr.mxu0 0.0
    %821 = vmatpush1.msra.mxu0 0.0
    %822 = vmatprep.subr.mxu0 0.0
    %823 = vmatpush1.msra.mxu0 0.0
    %824 = vmatprep.subr.mxu0 0.0
    %825 = vmatpush1.msra.mxu0 0.0
    %826 = vmatprep.subr.mxu0 0.0
    %827 = vmatpush1.msra.mxu0 0.0
    %828 = vmatprep.subr.mxu0 0.0
    %829 = vmatpush1.msra.mxu0 0.0
    %830 = vmatprep.subr.mxu0 0.0
    %831 = vmatpush1.msra.mxu0 0.0
    %832 = vmatprep.subr.mxu0 0.0
    %833 = vmatpush1.msra.mxu0 0.0
    %834 = vmatprep.subr.mxu0 0.0
    %835 = vmatpush1.msra.mxu0 0.0
    %836 = vmatprep.subr.mxu0 0.0
    %837 = vmatpush1.msra.mxu0 0.0
    %838 = vmatprep.subr.mxu0 0.0
    %839 = vmatpush1.msra.mxu0 0.0
    %840 = vmatprep.subr.mxu0 0.0
    %841 = vmatpush1.msra.mxu0 0.0
    %842 = vmatprep.subr.mxu0 0.0
    %843 = vmatpush1.msra.mxu0 0.0
    %844 = vmatprep.subr.mxu0 0.0
    %845 = vmatpush1.msra.mxu0 0.0
    %846 = vmatprep.subr.mxu0 0.0
    %847 = vmatpush1.msra.mxu0 0.0
    %848 = vmatprep.subr.mxu0 0.0
    %849 = vmatpush1.msra.mxu0 0.0
    %850 = vmatprep.subr.mxu0 0.0
    %851 = vmatpush1.msra.mxu0 0.0
    %852 = vmatprep.subr.mxu0 0.0
    %853 = vmatpush1.msra.mxu0 0.0
    %854 = vmatprep.subr.mxu0 0.0
    %855 = vmatpush1.msra.mxu0 0.0
    %856 = vmatprep.subr.mxu0 0.0
    %857 = vmatpush1.msra.mxu0 0.0
    %858 = vmatprep.subr.mxu0 0.0
    %859 = vmatpush1.msra.mxu0 0.0
    %860 = vmatprep.subr.mxu0 0.0
    %861 = vmatpush1.msra.mxu0 0.0
    %862 = vmatprep.subr.mxu0 0.0
    %863 = vmatpush1.msra.mxu0 0.0
    %864 = vmatprep.subr.mxu0 0.0
    %865 = vmatpush1.msra.mxu0 0.0
    %866 = vmatprep.mubr.f32.mxu0 0.0
    %867 = vmatmul.mubr.f32.gmra.mrb[0].mxu0 %v800
    %v868 = vpop.f32.mrb[0].mxu0
    %v869 = vadd.f32 0.0, %v868
    %v870 = vpop.f32.mrb[0].mxu0
    %871 = vdwg.mxu0
    %872 = vmatprep.subr.mxu0 0.0
    %873 = vmatpush1.msra.mxu0 %v294
    %874 = vmatprep.subr.mxu0 0.0
    %875 = vmatpush1.msra.mxu0 %v295
    %876 = vmatprep.subr.mxu0 0.0
    %877 = vmatpush1.msra.mxu0 %v296
    %878 = vmatprep.subr.mxu0 0.0
    %879 = vmatpush1.msra.mxu0 %v297
    %880 = vmatprep.subr.mxu0 0.0
    %881 = vmatpush1.msra.mxu0 0.0
    %882 = vmatprep.subr.mxu0 0.0
    %883 = vmatpush1.msra.mxu0 0.0
    %884 = vmatprep.subr.mxu0 0.0
    %885 = vmatpush1.msra.mxu0 0.0
    %886 = vmatprep.subr.mxu0 0.0
    %887 = vmatpush1.msra.mxu0 0.0
    %888 = vmatprep.subr.mxu0 0.0
    %889 = vmatpush1.msra.mxu0 0.0
    %890 = vmatprep.subr.mxu0 0.0
    %891 = vmatpush1.msra.mxu0 0.0
    %892 = vmatprep.subr.mxu0 0.0
    %893 = vmatpush1.msra.mxu0 0.0
    %894 = vmatprep.subr.mxu0 0.0
    %895 = vmatpush1.msra.mxu0 0.0
    %896 = vmatprep.subr.mxu0 0.0
    %897 = vmatpush1.msra.mxu0 0.0
    %898 = vmatprep.subr.mxu0 0.0
    %899 = vmatpush1.msra.mxu0 0.0
    %900 = vmatprep.subr.mxu0 0.0
    %901 = vmatpush1.msra.mxu0 0.0
    %902 = vmatprep.subr.mxu0 0.0
    %903 = vmatpush1.msra.mxu0 0.0
    %904 = vmatprep.subr.mxu0 0.0
    %905 = vmatpush1.msra.mxu0 0.0
    %906 = vmatprep.subr.mxu0 0.0
    %907 = vmatpush1.msra.mxu0 0.0
    %908 = vmatprep.subr.mxu0 0.0
    %909 = vmatpush1.msra.mxu0 0.0
    %910 = vmatprep.subr.mxu0 0.0
    %911 = vmatpush1.msra.mxu0 0.0
    %912 = vmatprep.subr.mxu0 0.0
    %913 = vmatpush1.msra.mxu0 0.0
    %914 = vmatprep.subr.mxu0 0.0
    %915 = vmatpush1.msra.mxu0 0.0
    %916 = vmatprep.subr.mxu0 0.0
    %917 = vmatpush1.msra.mxu0 0.0
    %918 = vmatprep.subr.mxu0 0.0
    %919 = vmatpush1.msra.mxu0 0.0
    %920 = vmatprep.subr.mxu0 0.0
    %921 = vmatpush1.msra.mxu0 0.0
    %922 = vmatprep.subr.mxu0 0.0
    %923 = vmatpush1.msra.mxu0 0.0
    %924 = vmatprep.subr.mxu0 0.0
    %925 = vmatpush1.msra.mxu0 0.0
    %926 = vmatprep.subr.mxu0 0.0
    %927 = vmatpush1.msra.mxu0 0.0
    %928 = vmatprep.subr.mxu0 0.0
    %929 = vmatpush1.msra.mxu0 0.0
    %930 = vmatprep.subr.mxu0 0.0
    %931 = vmatpush1.msra.mxu0 0.0
    %932 = vmatprep.subr.mxu0 0.0
    %933 = vmatpush1.msra.mxu0 0.0
    %934 = vmatprep.subr.mxu0 0.0
    %935 = vmatpush1.msra.mxu0 0.0
    %936 = vmatprep.mubr.f32.mxu0 0.0
    %937 = vmatmul.mubr.f32.gmra.mrb[0].mxu0 %v800
    %v938 = vpop.f32.mrb[0].mxu0
    %v939 = vadd.f32 0.0, %v938
    %v940 = vpop.f32.mrb[0].mxu0
    %941 = vdwg.mxu0
    %942 = vmatprep.subr.mxu0 0.0
    %943 = vmatpush1.msra.mxu0 %v298
    %944 = vmatprep.subr.mxu0 0.0
    %945 = vmatpush1.msra.mxu0 %v299
    %946 = vmatprep.subr.mxu0 0.0
    %947 = vmatpush1.msra.mxu0 %v300
    %948 = vmatprep.subr.mxu0 0.0
    %949 = vmatpush1.msra.mxu0 %v301
    %950 = vmatprep.subr.mxu0 0.0
    %951 = vmatpush1.msra.mxu0 0.0
    %952 = vmatprep.subr.mxu0 0.0
    %953 = vmatpush1.msra.mxu0 0.0
    %954 = vmatprep.subr.mxu0 0.0
    %955 = vmatpush1.msra.mxu0 0.0
    %956 = vmatprep.subr.mxu0 0.0
    %957 = vmatpush1.msra.mxu0 0.0
    %958 = vmatprep.subr.mxu0 0.0
    %959 = vmatpush1.msra.mxu0 0.0
    %960 = vmatprep.subr.mxu0 0.0
    %961 = vmatpush1.msra.mxu0 0.0
    %962 = vmatprep.subr.mxu0 0.0
    %963 = vmatpush1.msra.mxu0 0.0
    %964 = vmatprep.subr.mxu0 0.0
    %965 = vmatpush1.msra.mxu0 0.0
    %966 = vmatprep.subr.mxu0 0.0
    %967 = vmatpush1.msra.mxu0 0.0
    %968 = vmatprep.subr.mxu0 0.0
    %969 = vmatpush1.msra.mxu0 0.0
    %970 = vmatprep.subr.mxu0 0.0
    %971 = vmatpush1.msra.mxu0 0.0
    %972 = vmatprep.subr.mxu0 0.0
    %973 = vmatpush1.msra.mxu0 0.0
    %974 = vmatprep.subr.mxu0 0.0
    %975 = vmatpush1.msra.mxu0 0.0
    %976 = vmatprep.subr.mxu0 0.0
    %977 = vmatpush1.msra.mxu0 0.0
    %978 = vmatprep.subr.mxu0 0.0
    %979 = vmatpush1.msra.mxu0 0.0
    %980 = vmatprep.subr.mxu0 0.0
    %981 = vmatpush1.msra.mxu0 0.0
    %982 = vmatprep.subr.mxu0 0.0
    %983 = vmatpush1.msra.mxu0 0.0
    %984 = vmatprep.subr.mxu0 0.0
    %985 = vmatpush1.msra.mxu0 0.0
    %986 = vmatprep.subr.mxu0 0.0
    %987 = vmatpush1.msra.mxu0 0.0
    %988 = vmatprep.subr.mxu0 0.0
    %989 = vmatpush1.msra.mxu0 0.0
    %990 = vmatprep.subr.mxu0 0.0
    %991 = vmatpush1.msra.mxu0 0.0
    %992 = vmatprep.subr.mxu0 0.0
    %993 = vmatpush1.msra.mxu0 0.0
    %994 = vmatprep.subr.mxu0 0.0
    %995 = vmatpush1.msra.mxu0 0.0
    %996 = vmatprep.subr.mxu0 0.0
    %997 = vmatpush1.msra.mxu0 0.0
    %998 = vmatprep.subr.mxu0 0.0
    %999 = vmatpush1.msra.mxu0 0.0
    %1000 = vmatprep.subr.mxu0 0.0
    %1001 = vmatpush1.msra.mxu0 0.0
    %1002 = vmatprep.subr.mxu0 0.0
    %1003 = vmatpush1.msra.mxu0 0.0
    %1004 = vmatprep.subr.mxu0 0.0
    %1005 = vmatpush1.msra.mxu0 0.0
    %1006 = vmatprep.mubr.f32.mxu0 0.0
    %1007 = vmatmul.mubr.f32.gmra.mrb[0].mxu0 %v800
    %v1008 = vpop.f32.mrb[0].mxu0
    %v1009 = vadd.f32 %v704, %v1008
    %v1010 = vpop.f32.mrb[0].mxu0
    %1011 = vdwg.mxu0
    %v1013 = vrot.slane %v869, 6
    %v1015 = vadd.f32 %v386, %v1013
    %v1016 = vxor.u32 %v1015, 2147483648
    %v1017 = vmul.f32 %v1016, 1.442695
    %v1018 = vpow.pop %v1017
    %v1019 = vadd.f32 %v1018, 1.0
    %v1020 = vrcp.pop %v1019
    %v1021 = vmul.f32 1.0, %v1020
    %v1023 = vrot.slane %v939, 6
    %v1025 = vadd.f32 %v467, %v1023
    %v1026 = vxor.u32 %v1025, 2147483648
    %v1027 = vmul.f32 %v1026, 1.442695
    %v1028 = vpow.pop %v1027
    %v1029 = vadd.f32 %v1028, 1.0
    %v1030 = vrcp.pop %v1029
    %v1031 = vmul.f32 1.0, %v1030
    %v1033 = vrot.slane %v1009, 6
    %v1035 = vmul.f32 %v1021, %v1033
    %v1036 = vadd.f32 %v548, %v1035
    %v1037 = vtanh.pop %v1036
    %v1038 = vsub.f32 1.0, %v1031
    %v1039 = vmul.f32 %v1038, %v1037
    %v1040 = vrot.slane %v796, 6
    %v1042 = vmul.f32 %v1031, %v1040
    %v1043 = vadd.f32 %v1039, %v1042
    %vm1044 = vcmask 257026
    %1045 = vst.msk [vmem:[#allocation2] sm:$0xc] %vm1044, %v1043
    %v1047 = vrot.slane %v1043, 2
    %v1048 = vsel %vm312, %v1047, 0
    %1050 = vmatprep.subr.mxu0 0.0
    %1051 = vmatpush1.msra.mxu0 %v290
    %1052 = vmatprep.subr.mxu0 0.0
    %1053 = vmatpush1.msra.mxu0 %v291
    %1054 = vmatprep.subr.mxu0 0.0
    %1055 = vmatpush1.msra.mxu0 %v292
    %1056 = vmatprep.subr.mxu0 0.0
    %1057 = vmatpush1.msra.mxu0 %v293
    %1058 = vmatprep.subr.mxu0 0.0
    %1059 = vmatpush1.msra.mxu0 0.0
    %1060 = vmatprep.subr.mxu0 0.0
    %1061 = vmatpush1.msra.mxu0 0.0
    %1062 = vmatprep.subr.mxu0 0.0
    %1063 = vmatpush1.msra.mxu0 0.0
    %1064 = vmatprep.subr.mxu0 0.0
    %1065 = vmatpush1.msra.mxu0 0.0
    %1066 = vmatprep.subr.mxu0 0.0
    %1067 = vmatpush1.msra.mxu0 0.0
    %1068 = vmatprep.subr.mxu0 0.0
    %1069 = vmatpush1.msra.mxu0 0.0
    %1070 = vmatprep.subr.mxu0 0.0
    %1071 = vmatpush1.msra.mxu0 0.0
    %1072 = vmatprep.subr.mxu0 0.0
    %1073 = vmatpush1.msra.mxu0 0.0
    %1074 = vmatprep.subr.mxu0 0.0
    %1075 = vmatpush1.msra.mxu0 0.0
    %1076 = vmatprep.subr.mxu0 0.0
    %1077 = vmatpush1.msra.mxu0 0.0
    %1078 = vmatprep.subr.mxu0 0.0
    %1079 = vmatpush1.msra.mxu0 0.0
    %1080 = vmatprep.subr.mxu0 0.0
    %1081 = vmatpush1.msra.mxu0 0.0
    %1082 = vmatprep.subr.mxu0 0.0
    %1083 = vmatpush1.msra.mxu0 0.0
    %1084 = vmatprep.subr.mxu0 0.0
    %1085 = vmatpush1.msra.mxu0 0.0
    %1086 = vmatprep.subr.mxu0 0.0
    %1087 = vmatpush1.msra.mxu0 0.0
    %1088 = vmatprep.subr.mxu0 0.0
    %1089 = vmatpush1.msra.mxu0 0.0
    %1090 = vmatprep.subr.mxu0 0.0
    %1091 = vmatpush1.msra.mxu0 0.0
    %1092 = vmatprep.subr.mxu0 0.0
    %1093 = vmatpush1.msra.mxu0 0.0
    %1094 = vmatprep.subr.mxu0 0.0
    %1095 = vmatpush1.msra.mxu0 0.0
    %1096 = vmatprep.subr.mxu0 0.0
    %1097 = vmatpush1.msra.mxu0 0.0
    %1098 = vmatprep.subr.mxu0 0.0
    %1099 = vmatpush1.msra.mxu0 0.0
    %1100 = vmatprep.subr.mxu0 0.0
    %1101 = vmatpush1.msra.mxu0 0.0
    %1102 = vmatprep.subr.mxu0 0.0
    %1103 = vmatpush1.msra.mxu0 0.0
    %1104 = vmatprep.subr.mxu0 0.0
    %1105 = vmatpush1.msra.mxu0 0.0
    %1106 = vmatprep.subr.mxu0 0.0
    %1107 = vmatpush1.msra.mxu0 0.0
    %1108 = vmatprep.subr.mxu0 0.0
    %1109 = vmatpush1.msra.mxu0 0.0
    %1110 = vmatprep.subr.mxu0 0.0
    %1111 = vmatpush1.msra.mxu0 0.0
    %1112 = vmatprep.subr.mxu0 0.0
    %1113 = vmatpush1.msra.mxu0 0.0
    %1114 = vmatprep.mubr.f32.mxu0 0.0
    %1115 = vmatmul.mubr.f32.gmra.mrb[0].mxu0 %v1048
    %v1116 = vpop.f32.mrb[0].mxu0
    %v1117 = vadd.f32 0.0, %v1116
    %v1118 = vpop.f32.mrb[0].mxu0
    %1119 = vdwg.mxu0
    %1120 = vmatprep.subr.mxu0 0.0
    %1121 = vmatpush1.msra.mxu0 %v294
    %1122 = vmatprep.subr.mxu0 0.0
    %1123 = vmatpush1.msra.mxu0 %v295
    %1124 = vmatprep.subr.mxu0 0.0
    %1125 = vmatpush1.msra.mxu0 %v296
    %1126 = vmatprep.subr.mxu0 0.0
    %1127 = vmatpush1.msra.mxu0 %v297
    %1128 = vmatprep.subr.mxu0 0.0
    %1129 = vmatpush1.msra.mxu0 0.0
    %1130 = vmatprep.subr.mxu0 0.0
    %1131 = vmatpush1.msra.mxu0 0.0
    %1132 = vmatprep.subr.mxu0 0.0
    %1133 = vmatpush1.msra.mxu0 0.0
    %1134 = vmatprep.subr.mxu0 0.0
    %1135 = vmatpush1.msra.mxu0 0.0
    %1136 = vmatprep.subr.mxu0 0.0
    %1137 = vmatpush1.msra.mxu0 0.0
    %1138 = vmatprep.subr.mxu0 0.0
    %1139 = vmatpush1.msra.mxu0 0.0
    %1140 = vmatprep.subr.mxu0 0.0
    %1141 = vmatpush1.msra.mxu0 0.0
    %1142 = vmatprep.subr.mxu0 0.0
    %1143 = vmatpush1.msra.mxu0 0.0
    %1144 = vmatprep.subr.mxu0 0.0
    %1145 = vmatpush1.msra.mxu0 0.0
    %1146 = vmatprep.subr.mxu0 0.0
    %1147 = vmatpush1.msra.mxu0 0.0
    %1148 = vmatprep.subr.mxu0 0.0
    %1149 = vmatpush1.msra.mxu0 0.0
    %1150 = vmatprep.subr.mxu0 0.0
    %1151 = vmatpush1.msra.mxu0 0.0
    %1152 = vmatprep.subr.mxu0 0.0
    %1153 = vmatpush1.msra.mxu0 0.0
    %1154 = vmatprep.subr.mxu0 0.0
    %1155 = vmatpush1.msra.mxu0 0.0
    %1156 = vmatprep.subr.mxu0 0.0
    %1157 = vmatpush1.msra.mxu0 0.0
    %1158 = vmatprep.subr.mxu0 0.0
    %1159 = vmatpush1.msra.mxu0 0.0
    %1160 = vmatprep.subr.mxu0 0.0
    %1161 = vmatpush1.msra.mxu0 0.0
    %1162 = vmatprep.subr.mxu0 0.0
    %1163 = vmatpush1.msra.mxu0 0.0
    %1164 = vmatprep.subr.mxu0 0.0
    %1165 = vmatpush1.msra.mxu0 0.0
    %1166 = vmatprep.subr.mxu0 0.0
    %1167 = vmatpush1.msra.mxu0 0.0
    %1168 = vmatprep.subr.mxu0 0.0
    %1169 = vmatpush1.msra.mxu0 0.0
    %1170 = vmatprep.subr.mxu0 0.0
    %1171 = vmatpush1.msra.mxu0 0.0
    %1172 = vmatprep.subr.mxu0 0.0
    %1173 = vmatpush1.msra.mxu0 0.0
    %1174 = vmatprep.subr.mxu0 0.0
    %1175 = vmatpush1.msra.mxu0 0.0
    %1176 = vmatprep.subr.mxu0 0.0
    %1177 = vmatpush1.msra.mxu0 0.0
    %1178 = vmatprep.subr.mxu0 0.0
    %1179 = vmatpush1.msra.mxu0 0.0
    %1180 = vmatprep.subr.mxu0 0.0
    %1181 = vmatpush1.msra.mxu0 0.0
    %1182 = vmatprep.subr.mxu0 0.0
    %1183 = vmatpush1.msra.mxu0 0.0
    %1184 = vmatprep.mubr.f32.mxu0 0.0
    %1185 = vmatmul.mubr.f32.gmra.mrb[0].mxu0 %v1048
    %v1186 = vpop.f32.mrb[0].mxu0
    %v1187 = vadd.f32 0.0, %v1186
    %v1188 = vpop.f32.mrb[0].mxu0
    %1189 = vdwg.mxu0
    %1190 = vmatprep.subr.mxu0 0.0
    %1191 = vmatpush1.msra.mxu0 %v298
    %1192 = vmatprep.subr.mxu0 0.0
    %1193 = vmatpush1.msra.mxu0 %v299
    %1194 = vmatprep.subr.mxu0 0.0
    %1195 = vmatpush1.msra.mxu0 %v300
    %1196 = vmatprep.subr.mxu0 0.0
    %1197 = vmatpush1.msra.mxu0 %v301
    %1198 = vmatprep.subr.mxu0 0.0
    %1199 = vmatpush1.msra.mxu0 0.0
    %1200 = vmatprep.subr.mxu0 0.0
    %1201 = vmatpush1.msra.mxu0 0.0
    %1202 = vmatprep.subr.mxu0 0.0
    %1203 = vmatpush1.msra.mxu0 0.0
    %1204 = vmatprep.subr.mxu0 0.0
    %1205 = vmatpush1.msra.mxu0 0.0
    %1206 = vmatprep.subr.mxu0 0.0
    %1207 = vmatpush1.msra.mxu0 0.0
    %1208 = vmatprep.subr.mxu0 0.0
    %1209 = vmatpush1.msra.mxu0 0.0
    %1210 = vmatprep.subr.mxu0 0.0
    %1211 = vmatpush1.msra.mxu0 0.0
    %1212 = vmatprep.subr.mxu0 0.0
    %1213 = vmatpush1.msra.mxu0 0.0
    %1214 = vmatprep.subr.mxu0 0.0
    %1215 = vmatpush1.msra.mxu0 0.0
    %1216 = vmatprep.subr.mxu0 0.0
    %1217 = vmatpush1.msra.mxu0 0.0
    %1218 = vmatprep.subr.mxu0 0.0
    %1219 = vmatpush1.msra.mxu0 0.0
    %1220 = vmatprep.subr.mxu0 0.0
    %1221 = vmatpush1.msra.mxu0 0.0
    %1222 = vmatprep.subr.mxu0 0.0
    %1223 = vmatpush1.msra.mxu0 0.0
    %1224 = vmatprep.subr.mxu0 0.0
    %1225 = vmatpush1.msra.mxu0 0.0
    %1226 = vmatprep.subr.mxu0 0.0
    %1227 = vmatpush1.msra.mxu0 0.0
    %1228 = vmatprep.subr.mxu0 0.0
    %1229 = vmatpush1.msra.mxu0 0.0
    %1230 = vmatprep.subr.mxu0 0.0
    %1231 = vmatpush1.msra.mxu0 0.0
    %1232 = vmatprep.subr.mxu0 0.0
    %1233 = vmatpush1.msra.mxu0 0.0
    %1234 = vmatprep.subr.mxu0 0.0
    %1235 = vmatpush1.msra.mxu0 0.0
    %1236 = vmatprep.subr.mxu0 0.0
    %1237 = vmatpush1.msra.mxu0 0.0
    %1238 = vmatprep.subr.mxu0 0.0
    %1239 = vmatpush1.msra.mxu0 0.0
    %1240 = vmatprep.subr.mxu0 0.0
    %1241 = vmatpush1.msra.mxu0 0.0
    %1242 = vmatprep.subr.mxu0 0.0
    %1243 = vmatpush1.msra.mxu0 0.0
    %1244 = vmatprep.subr.mxu0 0.0
    %1245 = vmatpush1.msra.mxu0 0.0
    %1246 = vmatprep.subr.mxu0 0.0
    %1247 = vmatpush1.msra.mxu0 0.0
    %1248 = vmatprep.subr.mxu0 0.0
    %1249 = vmatpush1.msra.mxu0 0.0
    %1250 = vmatprep.subr.mxu0 0.0
    %1251 = vmatpush1.msra.mxu0 0.0
    %1252 = vmatprep.subr.mxu0 0.0
    %1253 = vmatpush1.msra.mxu0 0.0
    %1254 = vmatprep.mubr.f32.mxu0 0.0
    %1255 = vmatmul.mubr.f32.gmra.mrb[0].mxu0 %v1048
    %v1256 = vpop.f32.mrb[0].mxu0
    %v1257 = vadd.f32 %v704, %v1256
    %v1258 = vpop.f32.mrb[0].mxu0
    %1259 = vdwg.mxu0
    %v1261 = vrot.slane %v1117, 4
    %v1263 = vadd.f32 %v386, %v1261
    %v1264 = vxor.u32 %v1263, 2147483648
    %v1265 = vmul.f32 %v1264, 1.442695
    %v1266 = vpow.pop %v1265
    %v1267 = vadd.f32 %v1266, 1.0
    %v1268 = vrcp.pop %v1267
    %v1269 = vmul.f32 1.0, %v1268
    %v1271 = vrot.slane %v1187, 4
    %v1273 = vadd.f32 %v467, %v1271
    %v1274 = vxor.u32 %v1273, 2147483648
    %v1275 = vmul.f32 %v1274, 1.442695
    %v1276 = vpow.pop %v1275
    %v1277 = vadd.f32 %v1276, 1.0
    %v1278 = vrcp.pop %v1277
    %v1279 = vmul.f32 1.0, %v1278
    %v1281 = vrot.slane %v1257, 4
    %v1283 = vmul.f32 %v1269, %v1281
    %v1284 = vadd.f32 %v548, %v1283
    %v1285 = vtanh.pop %v1284
    %v1286 = vsub.f32 1.0, %v1279
    %v1287 = vmul.f32 %v1286, %v1285
    %v1288 = vrot.slane %v1043, 6
    %v1290 = vmul.f32 %v1279, %v1288
    %v1291 = vadd.f32 %v1287, %v1290
    %vm1292 = vcmask 259076
    %1293 = vst.msk [vmem:[#allocation2] sm:$0x30] %vm1292, %v1291
    %v1295 = vrot.slane %v1291, 4
    %v1296 = vsel %vm312, %v1295, 0
    %1298 = vmatprep.subr.mxu0 0.0
    %1299 = vmatpush1.msra.mxu0 %v290
    %1300 = vmatprep.subr.mxu0 0.0
    %1301 = vmatpush1.msra.mxu0 %v291
    %1302 = vmatprep.subr.mxu0 0.0
    %1303 = vmatpush1.msra.mxu0 %v292
    %1304 = vmatprep.subr.mxu0 0.0
    %1305 = vmatpush1.msra.mxu0 %v293
    %1306 = vmatprep.subr.mxu0 0.0
    %1307 = vmatpush1.msra.mxu0 0.0
    %1308 = vmatprep.subr.mxu0 0.0
    %1309 = vmatpush1.msra.mxu0 0.0
    %1310 = vmatprep.subr.mxu0 0.0
    %1311 = vmatpush1.msra.mxu0 0.0
    %1312 = vmatprep.subr.mxu0 0.0
    %1313 = vmatpush1.msra.mxu0 0.0
    %1314 = vmatprep.subr.mxu0 0.0
    %1315 = vmatpush1.msra.mxu0 0.0
    %1316 = vmatprep.subr.mxu0 0.0
    %1317 = vmatpush1.msra.mxu0 0.0
    %1318 = vmatprep.subr.mxu0 0.0
    %1319 = vmatpush1.msra.mxu0 0.0
    %1320 = vmatprep.subr.mxu0 0.0
    %1321 = vmatpush1.msra.mxu0 0.0
    %1322 = vmatprep.subr.mxu0 0.0
    %1323 = vmatpush1.msra.mxu0 0.0
    %1324 = vmatprep.subr.mxu0 0.0
    %1325 = vmatpush1.msra.mxu0 0.0
    %1326 = vmatprep.subr.mxu0 0.0
    %1327 = vmatpush1.msra.mxu0 0.0
    %1328 = vmatprep.subr.mxu0 0.0
    %1329 = vmatpush1.msra.mxu0 0.0
    %1330 = vmatprep.subr.mxu0 0.0
    %1331 = vmatpush1.msra.mxu0 0.0
    %1332 = vmatprep.subr.mxu0 0.0
    %1333 = vmatpush1.msra.mxu0 0.0
    %1334 = vmatprep.subr.mxu0 0.0
    %1335 = vmatpush1.msra.mxu0 0.0
    %1336 = vmatprep.subr.mxu0 0.0
    %1337 = vmatpush1.msra.mxu0 0.0
    %1338 = vmatprep.subr.mxu0 0.0
    %1339 = vmatpush1.msra.mxu0 0.0
    %1340 = vmatprep.subr.mxu0 0.0
    %1341 = vmatpush1.msra.mxu0 0.0
    %1342 = vmatprep.subr.mxu0 0.0
    %1343 = vmatpush1.msra.mxu0 0.0
    %1344 = vmatprep.subr.mxu0 0.0
    %1345 = vmatpush1.msra.mxu0 0.0
    %1346 = vmatprep.subr.mxu0 0.0
    %1347 = vmatpush1.msra.mxu0 0.0
    %1348 = vmatprep.subr.mxu0 0.0
    %1349 = vmatpush1.msra.mxu0 0.0
    %1350 = vmatprep.subr.mxu0 0.0
    %1351 = vmatpush1.msra.mxu0 0.0
    %1352 = vmatprep.subr.mxu0 0.0
    %1353 = vmatpush1.msra.mxu0 0.0
    %1354 = vmatprep.subr.mxu0 0.0
    %1355 = vmatpush1.msra.mxu0 0.0
    %1356 = vmatprep.subr.mxu0 0.0
    %1357 = vmatpush1.msra.mxu0 0.0
    %1358 = vmatprep.subr.mxu0 0.0
    %1359 = vmatpush1.msra.mxu0 0.0
    %1360 = vmatprep.subr.mxu0 0.0
    %1361 = vmatpush1.msra.mxu0 0.0
    %1362 = vmatprep.mubr.f32.mxu0 0.0
    %1363 = vmatmul.mubr.f32.gmra.mrb[0].mxu0 %v1296
    %v1364 = vpop.f32.mrb[0].mxu0
    %v1365 = vadd.f32 0.0, %v1364
    %v1366 = vpop.f32.mrb[0].mxu0
    %1367 = vdwg.mxu0
    %1368 = vmatprep.subr.mxu0 0.0
    %1369 = vmatpush1.msra.mxu0 %v294
    %1370 = vmatprep.subr.mxu0 0.0
    %1371 = vmatpush1.msra.mxu0 %v295
    %1372 = vmatprep.subr.mxu0 0.0
    %1373 = vmatpush1.msra.mxu0 %v296
    %1374 = vmatprep.subr.mxu0 0.0
    %1375 = vmatpush1.msra.mxu0 %v297
    %1376 = vmatprep.subr.mxu0 0.0
    %1377 = vmatpush1.msra.mxu0 0.0
    %1378 = vmatprep.subr.mxu0 0.0
    %1379 = vmatpush1.msra.mxu0 0.0
    %1380 = vmatprep.subr.mxu0 0.0
    %1381 = vmatpush1.msra.mxu0 0.0
    %1382 = vmatprep.subr.mxu0 0.0
    %1383 = vmatpush1.msra.mxu0 0.0
    %1384 = vmatprep.subr.mxu0 0.0
    %1385 = vmatpush1.msra.mxu0 0.0
    %1386 = vmatprep.subr.mxu0 0.0
    %1387 = vmatpush1.msra.mxu0 0.0
    %1388 = vmatprep.subr.mxu0 0.0
    %1389 = vmatpush1.msra.mxu0 0.0
    %1390 = vmatprep.subr.mxu0 0.0
    %1391 = vmatpush1.msra.mxu0 0.0
    %1392 = vmatprep.subr.mxu0 0.0
    %1393 = vmatpush1.msra.mxu0 0.0
    %1394 = vmatprep.subr.mxu0 0.0
    %1395 = vmatpush1.msra.mxu0 0.0
    %1396 = vmatprep.subr.mxu0 0.0
    %1397 = vmatpush1.msra.mxu0 0.0
    %1398 = vmatprep.subr.mxu0 0.0
    %1399 = vmatpush1.msra.mxu0 0.0
    %1400 = vmatprep.subr.mxu0 0.0
    %1401 = vmatpush1.msra.mxu0 0.0
    %1402 = vmatprep.subr.mxu0 0.0
    %1403 = vmatpush1.msra.mxu0 0.0
    %1404 = vmatprep.subr.mxu0 0.0
    %1405 = vmatpush1.msra.mxu0 0.0
    %1406 = vmatprep.subr.mxu0 0.0
    %1407 = vmatpush1.msra.mxu0 0.0
    %1408 = vmatprep.subr.mxu0 0.0
    %1409 = vmatpush1.msra.mxu0 0.0
    %1410 = vmatprep.subr.mxu0 0.0
    %1411 = vmatpush1.msra.mxu0 0.0
    %1412 = vmatprep.subr.mxu0 0.0
    %1413 = vmatpush1.msra.mxu0 0.0
    %1414 = vmatprep.subr.mxu0 0.0
    %1415 = vmatpush1.msra.mxu0 0.0
    %1416 = vmatprep.subr.mxu0 0.0
    %1417 = vmatpush1.msra.mxu0 0.0
    %1418 = vmatprep.subr.mxu0 0.0
    %1419 = vmatpush1.msra.mxu0 0.0
    %1420 = vmatprep.subr.mxu0 0.0
    %1421 = vmatpush1.msra.mxu0 0.0
    %1422 = vmatprep.subr.mxu0 0.0
    %1423 = vmatpush1.msra.mxu0 0.0
    %1424 = vmatprep.subr.mxu0 0.0
    %1425 = vmatpush1.msra.mxu0 0.0
    %1426 = vmatprep.subr.mxu0 0.0
    %1427 = vmatpush1.msra.mxu0 0.0
    %1428 = vmatprep.subr.mxu0 0.0
    %1429 = vmatpush1.msra.mxu0 0.0
    %1430 = vmatprep.subr.mxu0 0.0
    %1431 = vmatpush1.msra.mxu0 0.0
    %1432 = vmatprep.mubr.f32.mxu0 0.0
    %1433 = vmatmul.mubr.f32.gmra.mrb[0].mxu0 %v1296
    %v1434 = vpop.f32.mrb[0].mxu0
    %v1435 = vadd.f32 0.0, %v1434
    %v1436 = vpop.f32.mrb[0].mxu0
    %1437 = vdwg.mxu0
    %1438 = vmatprep.subr.mxu0 0.0
    %1439 = vmatpush1.msra.mxu0 %v298
    %1440 = vmatprep.subr.mxu0 0.0
    %1441 = vmatpush1.msra.mxu0 %v299
    %1442 = vmatprep.subr.mxu0 0.0
    %1443 = vmatpush1.msra.mxu0 %v300
    %1444 = vmatprep.subr.mxu0 0.0
    %1445 = vmatpush1.msra.mxu0 %v301
    %1446 = vmatprep.subr.mxu0 0.0
    %1447 = vmatpush1.msra.mxu0 0.0
    %1448 = vmatprep.subr.mxu0 0.0
    %1449 = vmatpush1.msra.mxu0 0.0
    %1450 = vmatprep.subr.mxu0 0.0
    %1451 = vmatpush1.msra.mxu0 0.0
    %1452 = vmatprep.subr.mxu0 0.0
    %1453 = vmatpush1.msra.mxu0 0.0
    %1454 = vmatprep.subr.mxu0 0.0
    %1455 = vmatpush1.msra.mxu0 0.0
    %1456 = vmatprep.subr.mxu0 0.0
    %1457 = vmatpush1.msra.mxu0 0.0
    %1458 = vmatprep.subr.mxu0 0.0
    %1459 = vmatpush1.msra.mxu0 0.0
    %1460 = vmatprep.subr.mxu0 0.0
    %1461 = vmatpush1.msra.mxu0 0.0
    %1462 = vmatprep.subr.mxu0 0.0
    %1463 = vmatpush1.msra.mxu0 0.0
    %1464 = vmatprep.subr.mxu0 0.0
    %1465 = vmatpush1.msra.mxu0 0.0
    %1466 = vmatprep.subr.mxu0 0.0
    %1467 = vmatpush1.msra.mxu0 0.0
    %1468 = vmatprep.subr.mxu0 0.0
    %1469 = vmatpush1.msra.mxu0 0.0
    %1470 = vmatprep.subr.mxu0 0.0
    %1471 = vmatpush1.msra.mxu0 0.0
    %1472 = vmatprep.subr.mxu0 0.0
    %1473 = vmatpush1.msra.mxu0 0.0
    %1474 = vmatprep.subr.mxu0 0.0
    %1475 = vmatpush1.msra.mxu0 0.0
    %1476 = vmatprep.subr.mxu0 0.0
    %1477 = vmatpush1.msra.mxu0 0.0
    %1478 = vmatprep.subr.mxu0 0.0
    %1479 = vmatpush1.msra.mxu0 0.0
    %1480 = vmatprep.subr.mxu0 0.0
    %1481 = vmatpush1.msra.mxu0 0.0
    %1482 = vmatprep.subr.mxu0 0.0
    %1483 = vmatpush1.msra.mxu0 0.0
    %1484 = vmatprep.subr.mxu0 0.0
    %1485 = vmatpush1.msra.mxu0 0.0
    %1486 = vmatprep.subr.mxu0 0.0
    %1487 = vmatpush1.msra.mxu0 0.0
    %1488 = vmatprep.subr.mxu0 0.0
    %1489 = vmatpush1.msra.mxu0 0.0
    %1490 = vmatprep.subr.mxu0 0.0
    %1491 = vmatpush1.msra.mxu0 0.0
    %1492 = vmatprep.subr.mxu0 0.0
    %1493 = vmatpush1.msra.mxu0 0.0
    %1494 = vmatprep.subr.mxu0 0.0
    %1495 = vmatpush1.msra.mxu0 0.0
    %1496 = vmatprep.subr.mxu0 0.0
    %1497 = vmatpush1.msra.mxu0 0.0
    %1498 = vmatprep.subr.mxu0 0.0
    %1499 = vmatpush1.msra.mxu0 0.0
    %1500 = vmatprep.subr.mxu0 0.0
    %1501 = vmatpush1.msra.mxu0 0.0
    %1502 = vmatprep.mubr.f32.mxu0 0.0
    %1503 = vmatmul.mubr.f32.gmra.mrb[0].mxu0 %v1296
    %v1504 = vpop.f32.mrb[0].mxu0
    %v1505 = vadd.f32 %v704, %v1504
    %v1506 = vpop.f32.mrb[0].mxu0
    %1507 = vdwg.mxu0
    %v1509 = vrot.slane %v1365, 2
    %v1511 = vadd.f32 %v386, %v1509
    %v1512 = vxor.u32 %v1511, 2147483648
    %v1513 = vmul.f32 %v1512, 1.442695
    %v1514 = vpow.pop %v1513
    %v1515 = vadd.f32 %v1514, 1.0
    %v1516 = vrcp.pop %v1515
    %v1517 = vmul.f32 1.0, %v1516
    %v1519 = vrot.slane %v1435, 2
    %v1521 = vadd.f32 %v467, %v1519
    %v1522 = vxor.u32 %v1521, 2147483648
    %v1523 = vmul.f32 %v1522, 1.442695
    %v1524 = vpow.pop %v1523
    %v1525 = vadd.f32 %v1524, 1.0
    %v1526 = vrcp.pop %v1525
    %v1527 = vmul.f32 1.0, %v1526
    %v1529 = vrot.slane %v1505, 2
    %v1531 = vmul.f32 %v1517, %v1529
    %v1532 = vadd.f32 %v548, %v1531
    %v1533 = vtanh.pop %v1532
    %v1534 = vsub.f32 1.0, %v1527
    %v1535 = vmul.f32 %v1534, %v1533
    %v1536 = vrot.slane %v1291, 6
    %v1538 = vmul.f32 %v1527, %v1536
    %v1539 = vadd.f32 %v1535, %v1538
    %vm1540 = vcmask 261126
    %1541 = vst.msk [vmem:[#allocation2] sm:$0xc0] %vm1540, %v1539
    %v1543 = vrot.slane %v1539, 6
    %v1544 = vsel %vm312, %v1543, 0
    %1546 = vmatprep.subr.mxu0 0.0
    %1547 = vmatpush1.msra.mxu0 %v290
    %1548 = vmatprep.subr.mxu0 0.0
    %1549 = vmatpush1.msra.mxu0 %v291
    %1550 = vmatprep.subr.mxu0 0.0
    %1551 = vmatpush1.msra.mxu0 %v292
    %1552 = vmatprep.subr.mxu0 0.0
    %1553 = vmatpush1.msra.mxu0 %v293
    %1554 = vmatprep.subr.mxu0 0.0
    %1555 = vmatpush1.msra.mxu0 0.0
    %1556 = vmatprep.subr.mxu0 0.0
    %1557 = vmatpush1.msra.mxu0 0.0
    %1558 = vmatprep.subr.mxu0 0.0
    %1559 = vmatpush1.msra.mxu0 0.0
    %1560 = vmatprep.subr.mxu0 0.0
    %1561 = vmatpush1.msra.mxu0 0.0
    %1562 = vmatprep.subr.mxu0 0.0
    %1563 = vmatpush1.msra.mxu0 0.0
    %1564 = vmatprep.subr.mxu0 0.0
    %1565 = vmatpush1.msra.mxu0 0.0
    %1566 = vmatprep.subr.mxu0 0.0
    %1567 = vmatpush1.msra.mxu0 0.0
    %1568 = vmatprep.subr.mxu0 0.0
    %1569 = vmatpush1.msra.mxu0 0.0
    %1570 = vmatprep.subr.mxu0 0.0
    %1571 = vmatpush1.msra.mxu0 0.0
    %1572 = vmatprep.subr.mxu0 0.0
    %1573 = vmatpush1.msra.mxu0 0.0
    %1574 = vmatprep.subr.mxu0 0.0
    %1575 = vmatpush1.msra.mxu0 0.0
    %1576 = vmatprep.subr.mxu0 0.0
    %1577 = vmatpush1.msra.mxu0 0.0
    %1578 = vmatprep.subr.mxu0 0.0
    %1579 = vmatpush1.msra.mxu0 0.0
    %1580 = vmatprep.subr.mxu0 0.0
    %1581 = vmatpush1.msra.mxu0 0.0
    %1582 = vmatprep.subr.mxu0 0.0
    %1583 = vmatpush1.msra.mxu0 0.0
    %1584 = vmatprep.subr.mxu0 0.0
    %1585 = vmatpush1.msra.mxu0 0.0
    %1586 = vmatprep.subr.mxu0 0.0
    %1587 = vmatpush1.msra.mxu0 0.0
    %1588 = vmatprep.subr.mxu0 0.0
    %1589 = vmatpush1.msra.mxu0 0.0
    %1590 = vmatprep.subr.mxu0 0.0
    %1591 = vmatpush1.msra.mxu0 0.0
    %1592 = vmatprep.subr.mxu0 0.0
    %1593 = vmatpush1.msra.mxu0 0.0
    %1594 = vmatprep.subr.mxu0 0.0
    %1595 = vmatpush1.msra.mxu0 0.0
    %1596 = vmatprep.subr.mxu0 0.0
    %1597 = vmatpush1.msra.mxu0 0.0
    %1598 = vmatprep.subr.mxu0 0.0
    %1599 = vmatpush1.msra.mxu0 0.0
    %1600 = vmatprep.subr.mxu0 0.0
    %1601 = vmatpush1.msra.mxu0 0.0
    %1602 = vmatprep.subr.mxu0 0.0
    %1603 = vmatpush1.msra.mxu0 0.0
    %1604 = vmatprep.subr.mxu0 0.0
    %1605 = vmatpush1.msra.mxu0 0.0
    %1606 = vmatprep.subr.mxu0 0.0
    %1607 = vmatpush1.msra.mxu0 0.0
    %1608 = vmatprep.subr.mxu0 0.0
    %1609 = vmatpush1.msra.mxu0 0.0
    %1610 = vmatprep.mubr.f32.mxu0 0.0
    %1611 = vmatmul.mubr.f32.gmra.mrb[0].mxu0 %v1544
    %v1612 = vpop.f32.mrb[0].mxu0
    %v1613 = vadd.f32 0.0, %v1612
    %v1614 = vpop.f32.mrb[0].mxu0
    %1615 = vdwg.mxu0
    %1616 = vmatprep.subr.mxu0 0.0
    %1617 = vmatpush1.msra.mxu0 %v294
    %1618 = vmatprep.subr.mxu0 0.0
    %1619 = vmatpush1.msra.mxu0 %v295
    %1620 = vmatprep.subr.mxu0 0.0
    %1621 = vmatpush1.msra.mxu0 %v296
    %1622 = vmatprep.subr.mxu0 0.0
    %1623 = vmatpush1.msra.mxu0 %v297
    %1624 = vmatprep.subr.mxu0 0.0
    %1625 = vmatpush1.msra.mxu0 0.0
    %1626 = vmatprep.subr.mxu0 0.0
    %1627 = vmatpush1.msra.mxu0 0.0
    %1628 = vmatprep.subr.mxu0 0.0
    %1629 = vmatpush1.msra.mxu0 0.0
    %1630 = vmatprep.subr.mxu0 0.0
    %1631 = vmatpush1.msra.mxu0 0.0
    %1632 = vmatprep.subr.mxu0 0.0
    %1633 = vmatpush1.msra.mxu0 0.0
    %1634 = vmatprep.subr.mxu0 0.0
    %1635 = vmatpush1.msra.mxu0 0.0
    %1636 = vmatprep.subr.mxu0 0.0
    %1637 = vmatpush1.msra.mxu0 0.0
    %1638 = vmatprep.subr.mxu0 0.0
    %1639 = vmatpush1.msra.mxu0 0.0
    %1640 = vmatprep.subr.mxu0 0.0
    %1641 = vmatpush1.msra.mxu0 0.0
    %1642 = vmatprep.subr.mxu0 0.0
    %1643 = vmatpush1.msra.mxu0 0.0
    %1644 = vmatprep.subr.mxu0 0.0
    %1645 = vmatpush1.msra.mxu0 0.0
    %1646 = vmatprep.subr.mxu0 0.0
    %1647 = vmatpush1.msra.mxu0 0.0
    %1648 = vmatprep.subr.mxu0 0.0
    %1649 = vmatpush1.msra.mxu0 0.0
    %1650 = vmatprep.subr.mxu0 0.0
    %1651 = vmatpush1.msra.mxu0 0.0
    %1652 = vmatprep.subr.mxu0 0.0
    %1653 = vmatpush1.msra.mxu0 0.0
    %1654 = vmatprep.subr.mxu0 0.0
    %1655 = vmatpush1.msra.mxu0 0.0
    %1656 = vmatprep.subr.mxu0 0.0
    %1657 = vmatpush1.msra.mxu0 0.0
    %1658 = vmatprep.subr.mxu0 0.0
    %1659 = vmatpush1.msra.mxu0 0.0
    %1660 = vmatprep.subr.mxu0 0.0
    %1661 = vmatpush1.msra.mxu0 0.0
    %1662 = vmatprep.subr.mxu0 0.0
    %1663 = vmatpush1.msra.mxu0 0.0
    %1664 = vmatprep.subr.mxu0 0.0
    %1665 = vmatpush1.msra.mxu0 0.0
    %1666 = vmatprep.subr.mxu0 0.0
    %1667 = vmatpush1.msra.mxu0 0.0
    %1668 = vmatprep.subr.mxu0 0.0
    %1669 = vmatpush1.msra.mxu0 0.0
    %1670 = vmatprep.subr.mxu0 0.0
    %1671 = vmatpush1.msra.mxu0 0.0
    %1672 = vmatprep.subr.mxu0 0.0
    %1673 = vmatpush1.msra.mxu0 0.0
    %1674 = vmatprep.subr.mxu0 0.0
    %1675 = vmatpush1.msra.mxu0 0.0
    %1676 = vmatprep.subr.mxu0 0.0
    %1677 = vmatpush1.msra.mxu0 0.0
    %1678 = vmatprep.subr.mxu0 0.0
    %1679 = vmatpush1.msra.mxu0 0.0
    %1680 = vmatprep.mubr.f32.mxu0 0.0
    %1681 = vmatmul.mubr.f32.gmra.mrb[0].mxu0 %v1544
    %v1682 = vpop.f32.mrb[0].mxu0
    %v1683 = vadd.f32 0.0, %v1682
    %v1684 = vpop.f32.mrb[0].mxu0
    %1685 = vdwg.mxu0
    %1686 = vmatprep.subr.mxu0 0.0
    %1687 = vmatpush1.msra.mxu0 %v298
    %1688 = vmatprep.subr.mxu0 0.0
    %1689 = vmatpush1.msra.mxu0 %v299
    %1690 = vmatprep.subr.mxu0 0.0
    %1691 = vmatpush1.msra.mxu0 %v300
    %1692 = vmatprep.subr.mxu0 0.0
    %1693 = vmatpush1.msra.mxu0 %v301
    %1694 = vmatprep.subr.mxu0 0.0
    %1695 = vmatpush1.msra.mxu0 0.0
    %1696 = vmatprep.subr.mxu0 0.0
    %1697 = vmatpush1.msra.mxu0 0.0
    %1698 = vmatprep.subr.mxu0 0.0
    %1699 = vmatpush1.msra.mxu0 0.0
    %1700 = vmatprep.subr.mxu0 0.0
    %1701 = vmatpush1.msra.mxu0 0.0
    %1702 = vmatprep.subr.mxu0 0.0
    %1703 = vmatpush1.msra.mxu0 0.0
    %1704 = vmatprep.subr.mxu0 0.0
    %1705 = vmatpush1.msra.mxu0 0.0
    %1706 = vmatprep.subr.mxu0 0.0
    %1707 = vmatpush1.msra.mxu0 0.0
    %1708 = vmatprep.subr.mxu0 0.0
    %1709 = vmatpush1.msra.mxu0 0.0
    %1710 = vmatprep.subr.mxu0 0.0
    %1711 = vmatpush1.msra.mxu0 0.0
    %1712 = vmatprep.subr.mxu0 0.0
    %1713 = vmatpush1.msra.mxu0 0.0
    %1714 = vmatprep.subr.mxu0 0.0
    %1715 = vmatpush1.msra.mxu0 0.0
    %1716 = vmatprep.subr.mxu0 0.0
    %1717 = vmatpush1.msra.mxu0 0.0
    %1718 = vmatprep.subr.mxu0 0.0
    %1719 = vmatpush1.msra.mxu0 0.0
    %1720 = vmatprep.subr.mxu0 0.0
    %1721 = vmatpush1.msra.mxu0 0.0
    %1722 = vmatprep.subr.mxu0 0.0
    %1723 = vmatpush1.msra.mxu0 0.0
    %1724 = vmatprep.subr.mxu0 0.0
    %1725 = vmatpush1.msra.mxu0 0.0
    %1726 = vmatprep.subr.mxu0 0.0
    %1727 = vmatpush1.msra.mxu0 0.0
    %1728 = vmatprep.subr.mxu0 0.0
    %1729 = vmatpush1.msra.mxu0 0.0
    %1730 = vmatprep.subr.mxu0 0.0
    %1731 = vmatpush1.msra.mxu0 0.0
    %1732 = vmatprep.subr.mxu0 0.0
    %1733 = vmatpush1.msra.mxu0 0.0
    %1734 = vmatprep.subr.mxu0 0.0
    %1735 = vmatpush1.msra.mxu0 0.0
    %1736 = vmatprep.subr.mxu0 0.0
    %1737 = vmatpush1.msra.mxu0 0.0
    %1738 = vmatprep.subr.mxu0 0.0
    %1739 = vmatpush1.msra.mxu0 0.0
    %1740 = vmatprep.subr.mxu0 0.0
    %1741 = vmatpush1.msra.mxu0 0.0
    %1742 = vmatprep.subr.mxu0 0.0
    %1743 = vmatpush1.msra.mxu0 0.0
    %1744 = vmatprep.subr.mxu0 0.0
    %1745 = vmatpush1.msra.mxu0 0.0
    %1746 = vmatprep.subr.mxu0 0.0
    %1747 = vmatpush1.msra.mxu0 0.0
    %1748 = vmatprep.subr.mxu0 0.0
    %1749 = vmatpush1.msra.mxu0 0.0
    %1750 = vmatprep.mubr.f32.mxu0 0.0
    %1751 = vmatmul.mubr.f32.gmra.mrb[0].mxu0 %v1544
    %v1752 = vpop.f32.mrb[0].mxu0
    %v1753 = vadd.f32 %v704, %v1752
    %v1754 = vpop.f32.mrb[0].mxu0
    %1755 = vdwg.mxu0
    %v1756 = vadd.f32 %v391, %v1613
    %v1757 = vxor.u32 %v1756, 2147483648
    %v1758 = vmul.f32 %v1757, 1.442695
    %v1759 = vpow.pop %v1758
    %v1760 = vadd.f32 %v1759, 1.0
    %v1761 = vrcp.pop %v1760
    %v1762 = vmul.f32 1.0, %v1761
    %v1763 = vadd.f32 %v472, %v1683
    %v1764 = vxor.u32 %v1763, 2147483648
    %v1765 = vmul.f32 %v1764, 1.442695
    %v1766 = vpow.pop %v1765
    %v1767 = vadd.f32 %v1766, 1.0
    %v1768 = vrcp.pop %v1767
    %v1769 = vmul.f32 1.0, %v1768
    %v1770 = vmul.f32 %v1762, %v1753
    %v1771 = vadd.f32 %v553, %v1770
    %v1772 = vtanh.pop %v1771
    %v1773 = vsub.f32 1.0, %v1769
    %v1774 = vmul.f32 %v1773, %v1772
    %v1776 = vmul.f32 %v1769, %v1543
    %v1777 = vadd.f32 %v1774, %v1776
    %1778 = vst.msk [vmem:[#allocation2 + $0x8] sm:$0x3] %vm797, %v1777
    %v1780 = vsel %vm312, %v1777, 0
    %1782 = vmatprep.subr.mxu0 0.0
    %1783 = vmatpush1.msra.mxu0 %v290
    %1784 = vmatprep.subr.mxu0 0.0
    %1785 = vmatpush1.msra.mxu0 %v291
    %1786 = vmatprep.subr.mxu0 0.0
    %1787 = vmatpush1.msra.mxu0 %v292
    %1788 = vmatprep.subr.mxu0 0.0
    %1789 = vmatpush1.msra.mxu0 %v293
    %1790 = vmatprep.subr.mxu0 0.0
    %1791 = vmatpush1.msra.mxu0 0.0
    %1792 = vmatprep.subr.mxu0 0.0
    %1793 = vmatpush1.msra.mxu0 0.0
    %1794 = vmatprep.subr.mxu0 0.0
    %1795 = vmatpush1.msra.mxu0 0.0
    %1796 = vmatprep.subr.mxu0 0.0
    %1797 = vmatpush1.msra.mxu0 0.0
    %1798 = vmatprep.subr.mxu0 0.0
    %1799 = vmatpush1.msra.mxu0 0.0
    %1800 = vmatprep.subr.mxu0 0.0
    %1801 = vmatpush1.msra.mxu0 0.0
    %1802 = vmatprep.subr.mxu0 0.0
    %1803 = vmatpush1.msra.mxu0 0.0
    %1804 = vmatprep.subr.mxu0 0.0
    %1805 = vmatpush1.msra.mxu0 0.0
    %1806 = vmatprep.subr.mxu0 0.0
    %1807 = vmatpush1.msra.mxu0 0.0
    %1808 = vmatprep.subr.mxu0 0.0
    %1809 = vmatpush1.msra.mxu0 0.0
    %1810 = vmatprep.subr.mxu0 0.0
    %1811 = vmatpush1.msra.mxu0 0.0
    %1812 = vmatprep.subr.mxu0 0.0
    %1813 = vmatpush1.msra.mxu0 0.0
    %1814 = vmatprep.subr.mxu0 0.0
    %1815 = vmatpush1.msra.mxu0 0.0
    %1816 = vmatprep.subr.mxu0 0.0
    %1817 = vmatpush1.msra.mxu0 0.0
    %1818 = vmatprep.subr.mxu0 0.0
    %1819 = vmatpush1.msra.mxu0 0.0
    %1820 = vmatprep.subr.mxu0 0.0
    %1821 = vmatpush1.msra.mxu0 0.0
    %1822 = vmatprep.subr.mxu0 0.0
    %1823 = vmatpush1.msra.mxu0 0.0
    %1824 = vmatprep.subr.mxu0 0.0
    %1825 = vmatpush1.msra.mxu0 0.0
    %1826 = vmatprep.subr.mxu0 0.0
    %1827 = vmatpush1.msra.mxu0 0.0
    %1828 = vmatprep.subr.mxu0 0.0
    %1829 = vmatpush1.msra.mxu0 0.0
    %1830 = vmatprep.subr.mxu0 0.0
    %1831 = vmatpush1.msra.mxu0 0.0
    %1832 = vmatprep.subr.mxu0 0.0
    %1833 = vmatpush1.msra.mxu0 0.0
    %1834 = vmatprep.subr.mxu0 0.0
    %1835 = vmatpush1.msra.mxu0 0.0
    %1836 = vmatprep.subr.mxu0 0.0
    %1837 = vmatpush1.msra.mxu0 0.0
    %1838 = vmatprep.subr.mxu0 0.0
    %1839 = vmatpush1.msra.mxu0 0.0
    %1840 = vmatprep.subr.mxu0 0.0
    %1841 = vmatpush1.msra.mxu0 0.0
    %1842 = vmatprep.subr.mxu0 0.0
    %1843 = vmatpush1.msra.mxu0 0.0
    %1844 = vmatprep.subr.mxu0 0.0
    %1845 = vmatpush1.msra.mxu0 0.0
    %1846 = vmatprep.mubr.f32.mxu0 0.0
    %1847 = vmatmul.mubr.f32.gmra.mrb[0].mxu0 %v1780
    %v1848 = vpop.f32.mrb[0].mxu0
    %v1849 = vadd.f32 0.0, %v1848
    %v1850 = vpop.f32.mrb[0].mxu0
    %1851 = vdwg.mxu0
    %1852 = vmatprep.subr.mxu0 0.0
    %1853 = vmatpush1.msra.mxu0 %v294
    %1854 = vmatprep.subr.mxu0 0.0
    %1855 = vmatpush1.msra.mxu0 %v295
    %1856 = vmatprep.subr.mxu0 0.0
    %1857 = vmatpush1.msra.mxu0 %v296
    %1858 = vmatprep.subr.mxu0 0.0
    %1859 = vmatpush1.msra.mxu0 %v297
    %1860 = vmatprep.subr.mxu0 0.0
    %1861 = vmatpush1.msra.mxu0 0.0
    %1862 = vmatprep.subr.mxu0 0.0
    %1863 = vmatpush1.msra.mxu0 0.0
    %1864 = vmatprep.subr.mxu0 0.0
    %1865 = vmatpush1.msra.mxu0 0.0
    %1866 = vmatprep.subr.mxu0 0.0
    %1867 = vmatpush1.msra.mxu0 0.0
    %1868 = vmatprep.subr.mxu0 0.0
    %1869 = vmatpush1.msra.mxu0 0.0
    %1870 = vmatprep.subr.mxu0 0.0
    %1871 = vmatpush1.msra.mxu0 0.0
    %1872 = vmatprep.subr.mxu0 0.0
    %1873 = vmatpush1.msra.mxu0 0.0
    %1874 = vmatprep.subr.mxu0 0.0
    %1875 = vmatpush1.msra.mxu0 0.0
    %1876 = vmatprep.subr.mxu0 0.0
    %1877 = vmatpush1.msra.mxu0 0.0
    %1878 = vmatprep.subr.mxu0 0.0
    %1879 = vmatpush1.msra.mxu0 0.0
    %1880 = vmatprep.subr.mxu0 0.0
    %1881 = vmatpush1.msra.mxu0 0.0
    %1882 = vmatprep.subr.mxu0 0.0
    %1883 = vmatpush1.msra.mxu0 0.0
    %1884 = vmatprep.subr.mxu0 0.0
    %1885 = vmatpush1.msra.mxu0 0.0
    %1886 = vmatprep.subr.mxu0 0.0
    %1887 = vmatpush1.msra.mxu0 0.0
    %1888 = vmatprep.subr.mxu0 0.0
    %1889 = vmatpush1.msra.mxu0 0.0
    %1890 = vmatprep.subr.mxu0 0.0
    %1891 = vmatpush1.msra.mxu0 0.0
    %1892 = vmatprep.subr.mxu0 0.0
    %1893 = vmatpush1.msra.mxu0 0.0
    %1894 = vmatprep.subr.mxu0 0.0
    %1895 = vmatpush1.msra.mxu0 0.0
    %1896 = vmatprep.subr.mxu0 0.0
    %1897 = vmatpush1.msra.mxu0 0.0
    %1898 = vmatprep.subr.mxu0 0.0
    %1899 = vmatpush1.msra.mxu0 0.0
    %1900 = vmatprep.subr.mxu0 0.0
    %1901 = vmatpush1.msra.mxu0 0.0
    %1902 = vmatprep.subr.mxu0 0.0
    %1903 = vmatpush1.msra.mxu0 0.0
    %1904 = vmatprep.subr.mxu0 0.0
    %1905 = vmatpush1.msra.mxu0 0.0
    %1906 = vmatprep.subr.mxu0 0.0
    %1907 = vmatpush1.msra.mxu0 0.0
    %1908 = vmatprep.subr.mxu0 0.0
    %1909 = vmatpush1.msra.mxu0 0.0
    %1910 = vmatprep.subr.mxu0 0.0
    %1911 = vmatpush1.msra.mxu0 0.0
    %1912 = vmatprep.subr.mxu0 0.0
    %1913 = vmatpush1.msra.mxu0 0.0
    %1914 = vmatprep.subr.mxu0 0.0
    %1915 = vmatpush1.msra.mxu0 0.0
    %1916 = vmatprep.mubr.f32.mxu0 0.0
    %1917 = vmatmul.mubr.f32.gmra.mrb[0].mxu0 %v1780
    %v1918 = vpop.f32.mrb[0].mxu0
    %v1919 = vadd.f32 0.0, %v1918
    %v1920 = vpop.f32.mrb[0].mxu0
    %1921 = vdwg.mxu0
    %1922 = vmatprep.subr.mxu0 0.0
    %1923 = vmatpush1.msra.mxu0 %v298
    %1924 = vmatprep.subr.mxu0 0.0
    %1925 = vmatpush1.msra.mxu0 %v299
    %1926 = vmatprep.subr.mxu0 0.0
    %1927 = vmatpush1.msra.mxu0 %v300
    %1928 = vmatprep.subr.mxu0 0.0
    %1929 = vmatpush1.msra.mxu0 %v301
    %1930 = vmatprep.subr.mxu0 0.0
    %1931 = vmatpush1.msra.mxu0 0.0
    %1932 = vmatprep.subr.mxu0 0.0
    %1933 = vmatpush1.msra.mxu0 0.0
    %1934 = vmatprep.subr.mxu0 0.0
    %1935 = vmatpush1.msra.mxu0 0.0
    %1936 = vmatprep.subr.mxu0 0.0
    %1937 = vmatpush1.msra.mxu0 0.0
    %1938 = vmatprep.subr.mxu0 0.0
    %1939 = vmatpush1.msra.mxu0 0.0
    %1940 = vmatprep.subr.mxu0 0.0
    %1941 = vmatpush1.msra.mxu0 0.0
    %1942 = vmatprep.subr.mxu0 0.0
    %1943 = vmatpush1.msra.mxu0 0.0
    %1944 = vmatprep.subr.mxu0 0.0
    %1945 = vmatpush1.msra.mxu0 0.0
    %1946 = vmatprep.subr.mxu0 0.0
    %1947 = vmatpush1.msra.mxu0 0.0
    %1948 = vmatprep.subr.mxu0 0.0
    %1949 = vmatpush1.msra.mxu0 0.0
    %1950 = vmatprep.subr.mxu0 0.0
    %1951 = vmatpush1.msra.mxu0 0.0
    %1952 = vmatprep.subr.mxu0 0.0
    %1953 = vmatpush1.msra.mxu0 0.0
    %1954 = vmatprep.subr.mxu0 0.0
    %1955 = vmatpush1.msra.mxu0 0.0
    %1956 = vmatprep.subr.mxu0 0.0
    %1957 = vmatpush1.msra.mxu0 0.0
    %1958 = vmatprep.subr.mxu0 0.0
    %1959 = vmatpush1.msra.mxu0 0.0
    %1960 = vmatprep.subr.mxu0 0.0
    %1961 = vmatpush1.msra.mxu0 0.0
    %1962 = vmatprep.subr.mxu0 0.0
    %1963 = vmatpush1.msra.mxu0 0.0
    %1964 = vmatprep.subr.mxu0 0.0
    %1965 = vmatpush1.msra.mxu0 0.0
    %1966 = vmatprep.subr.mxu0 0.0
    %1967 = vmatpush1.msra.mxu0 0.0
    %1968 = vmatprep.subr.mxu0 0.0
    %1969 = vmatpush1.msra.mxu0 0.0
    %1970 = vmatprep.subr.mxu0 0.0
    %1971 = vmatpush1.msra.mxu0 0.0
    %1972 = vmatprep.subr.mxu0 0.0
    %1973 = vmatpush1.msra.mxu0 0.0
    %1974 = vmatprep.subr.mxu0 0.0
    %1975 = vmatpush1.msra.mxu0 0.0
    %1976 = vmatprep.subr.mxu0 0.0
    %1977 = vmatpush1.msra.mxu0 0.0
    %1978 = vmatprep.subr.mxu0 0.0
    %1979 = vmatpush1.msra.mxu0 0.0
    %1980 = vmatprep.subr.mxu0 0.0
    %1981 = vmatpush1.msra.mxu0 0.0
    %1982 = vmatprep.subr.mxu0 0.0
    %1983 = vmatpush1.msra.mxu0 0.0
    %1984 = vmatprep.subr.mxu0 0.0
    %1985 = vmatpush1.msra.mxu0 0.0
    %1986 = vmatprep.mubr.f32.mxu0 0.0
    %1987 = vmatmul.mubr.f32.gmra.mrb[0].mxu0 %v1780
    %v1988 = vpop.f32.mrb[0].mxu0
    %v1989 = vadd.f32 %v704, %v1988
    %v1990 = vpop.f32.mrb[0].mxu0
    %1991 = vdwg.mxu0
    %v1993 = vrot.slane %v1849, 6
    %v1995 = vadd.f32 %v391, %v1993
    %v1996 = vxor.u32 %v1995, 2147483648
    %v1997 = vmul.f32 %v1996, 1.442695
    %v1998 = vpow.pop %v1997
    %v1999 = vadd.f32 %v1998, 1.0
    %v2000 = vrcp.pop %v1999
    %v2001 = vmul.f32 1.0, %v2000
    %v2003 = vrot.slane %v1919, 6
    %v2005 = vadd.f32 %v472, %v2003
    %v2006 = vxor.u32 %v2005, 2147483648
    %v2007 = vmul.f32 %v2006, 1.442695
    %v2008 = vpow.pop %v2007
    %v2009 = vadd.f32 %v2008, 1.0
    %v2010 = vrcp.pop %v2009
    %v2011 = vmul.f32 1.0, %v2010
    %v2013 = vrot.slane %v1989, 6
    %v2015 = vmul.f32 %v2001, %v2013
    %v2016 = vadd.f32 %v553, %v2015
    %v2017 = vtanh.pop %v2016
    %v2018 = vsub.f32 1.0, %v2011
    %v2019 = vmul.f32 %v2018, %v2017
    %v2020 = vrot.slane %v1777, 6
    %v2022 = vmul.f32 %v2011, %v2020
    %v2023 = vadd.f32 %v2019, %v2022
    %2024 = vst.msk [vmem:[#allocation2 + $0x8] sm:$0xc] %vm1044, %v2023
    %v2026 = vrot.slane %v2023, 2
    %v2027 = vsel %vm312, %v2026, 0
    %2029 = vmatprep.subr.mxu0 0.0
    %2030 = vmatpush1.msra.mxu0 %v290
    %2031 = vmatprep.subr.mxu0 0.0
    %2032 = vmatpush1.msra.mxu0 %v291
    %2033 = vmatprep.subr.mxu0 0.0
    %2034 = vmatpush1.msra.mxu0 %v292
    %2035 = vmatprep.subr.mxu0 0.0
    %2036 = vmatpush1.msra.mxu0 %v293
    %2037 = vmatprep.subr.mxu0 0.0
    %2038 = vmatpush1.msra.mxu0 0.0
    %2039 = vmatprep.subr.mxu0 0.0
    %2040 = vmatpush1.msra.mxu0 0.0
    %2041 = vmatprep.subr.mxu0 0.0
    %2042 = vmatpush1.msra.mxu0 0.0
    %2043 = vmatprep.subr.mxu0 0.0
    %2044 = vmatpush1.msra.mxu0 0.0
    %2045 = vmatprep.subr.mxu0 0.0
    %2046 = vmatpush1.msra.mxu0 0.0
    %2047 = vmatprep.subr.mxu0 0.0
    %2048 = vmatpush1.msra.mxu0 0.0
    %2049 = vmatprep.subr.mxu0 0.0
    %2050 = vmatpush1.msra.mxu0 0.0
    %2051 = vmatprep.subr.mxu0 0.0
    %2052 = vmatpush1.msra.mxu0 0.0
    %2053 = vmatprep.subr.mxu0 0.0
    %2054 = vmatpush1.msra.mxu0 0.0
    %2055 = vmatprep.subr.mxu0 0.0
    %2056 = vmatpush1.msra.mxu0 0.0
    %2057 = vmatprep.subr.mxu0 0.0
    %2058 = vmatpush1.msra.mxu0 0.0
    %2059 = vmatprep.subr.mxu0 0.0
    %2060 = vmatpush1.msra.mxu0 0.0
    %2061 = vmatprep.subr.mxu0 0.0
    %2062 = vmatpush1.msra.mxu0 0.0
    %2063 = vmatprep.subr.mxu0 0.0
    %2064 = vmatpush1.msra.mxu0 0.0
    %2065 = vmatprep.subr.mxu0 0.0
    %2066 = vmatpush1.msra.mxu0 0.0
    %2067 = vmatprep.subr.mxu0 0.0
    %2068 = vmatpush1.msra.mxu0 0.0
    %2069 = vmatprep.subr.mxu0 0.0
    %2070 = vmatpush1.msra.mxu0 0.0
    %2071 = vmatprep.subr.mxu0 0.0
    %2072 = vmatpush1.msra.mxu0 0.0
    %2073 = vmatprep.subr.mxu0 0.0
    %2074 = vmatpush1.msra.mxu0 0.0
    %2075 = vmatprep.subr.mxu0 0.0
    %2076 = vmatpush1.msra.mxu0 0.0
    %2077 = vmatprep.subr.mxu0 0.0
    %2078 = vmatpush1.msra.mxu0 0.0
    %2079 = vmatprep.subr.mxu0 0.0
    %2080 = vmatpush1.msra.mxu0 0.0
    %2081 = vmatprep.subr.mxu0 0.0
    %2082 = vmatpush1.msra.mxu0 0.0
    %2083 = vmatprep.subr.mxu0 0.0
    %2084 = vmatpush1.msra.mxu0 0.0
    %2085 = vmatprep.subr.mxu0 0.0
    %2086 = vmatpush1.msra.mxu0 0.0
    %2087 = vmatprep.subr.mxu0 0.0
    %2088 = vmatpush1.msra.mxu0 0.0
    %2089 = vmatprep.subr.mxu0 0.0
    %2090 = vmatpush1.msra.mxu0 0.0
    %2091 = vmatprep.subr.mxu0 0.0
    %2092 = vmatpush1.msra.mxu0 0.0
    %2093 = vmatprep.mubr.f32.mxu0 0.0
    %2094 = vmatmul.mubr.f32.gmra.mrb[0].mxu0 %v2027
    %v2095 = vpop.f32.mrb[0].mxu0
    %v2096 = vadd.f32 0.0, %v2095
    %v2097 = vpop.f32.mrb[0].mxu0
    %2098 = vdwg.mxu0
    %2099 = vmatprep.subr.mxu0 0.0
    %2100 = vmatpush1.msra.mxu0 %v294
    %2101 = vmatprep.subr.mxu0 0.0
    %2102 = vmatpush1.msra.mxu0 %v295
    %2103 = vmatprep.subr.mxu0 0.0
    %2104 = vmatpush1.msra.mxu0 %v296
    %2105 = vmatprep.subr.mxu0 0.0
    %2106 = vmatpush1.msra.mxu0 %v297
    %2107 = vmatprep.subr.mxu0 0.0
    %2108 = vmatpush1.msra.mxu0 0.0
    %2109 = vmatprep.subr.mxu0 0.0
    %2110 = vmatpush1.msra.mxu0 0.0
    %2111 = vmatprep.subr.mxu0 0.0
    %2112 = vmatpush1.msra.mxu0 0.0
    %2113 = vmatprep.subr.mxu0 0.0
    %2114 = vmatpush1.msra.mxu0 0.0
    %2115 = vmatprep.subr.mxu0 0.0
    %2116 = vmatpush1.msra.mxu0 0.0
    %2117 = vmatprep.subr.mxu0 0.0
    %2118 = vmatpush1.msra.mxu0 0.0
    %2119 = vmatprep.subr.mxu0 0.0
    %2120 = vmatpush1.msra.mxu0 0.0
    %2121 = vmatprep.subr.mxu0 0.0
    %2122 = vmatpush1.msra.mxu0 0.0
    %2123 = vmatprep.subr.mxu0 0.0
    %2124 = vmatpush1.msra.mxu0 0.0
    %2125 = vmatprep.subr.mxu0 0.0
    %2126 = vmatpush1.msra.mxu0 0.0
    %2127 = vmatprep.subr.mxu0 0.0
    %2128 = vmatpush1.msra.mxu0 0.0
    %2129 = vmatprep.subr.mxu0 0.0
    %2130 = vmatpush1.msra.mxu0 0.0
    %2131 = vmatprep.subr.mxu0 0.0
    %2132 = vmatpush1.msra.mxu0 0.0
    %2133 = vmatprep.subr.mxu0 0.0
    %2134 = vmatpush1.msra.mxu0 0.0
    %2135 = vmatprep.subr.mxu0 0.0
    %2136 = vmatpush1.msra.mxu0 0.0
    %2137 = vmatprep.subr.mxu0 0.0
    %2138 = vmatpush1.msra.mxu0 0.0
    %2139 = vmatprep.subr.mxu0 0.0
    %2140 = vmatpush1.msra.mxu0 0.0
    %2141 = vmatprep.subr.mxu0 0.0
    %2142 = vmatpush1.msra.mxu0 0.0
    %2143 = vmatprep.subr.mxu0 0.0
    %2144 = vmatpush1.msra.mxu0 0.0
    %2145 = vmatprep.subr.mxu0 0.0
    %2146 = vmatpush1.msra.mxu0 0.0
    %2147 = vmatprep.subr.mxu0 0.0
    %2148 = vmatpush1.msra.mxu0 0.0
    %2149 = vmatprep.subr.mxu0 0.0
    %2150 = vmatpush1.msra.mxu0 0.0
    %2151 = vmatprep.subr.mxu0 0.0
    %2152 = vmatpush1.msra.mxu0 0.0
    %2153 = vmatprep.subr.mxu0 0.0
    %2154 = vmatpush1.msra.mxu0 0.0
    %2155 = vmatprep.subr.mxu0 0.0
    %2156 = vmatpush1.msra.mxu0 0.0
    %2157 = vmatprep.subr.mxu0 0.0
    %2158 = vmatpush1.msra.mxu0 0.0
    %2159 = vmatprep.subr.mxu0 0.0
    %2160 = vmatpush1.msra.mxu0 0.0
    %2161 = vmatprep.subr.mxu0 0.0
    %2162 = vmatpush1.msra.mxu0 0.0
    %2163 = vmatprep.mubr.f32.mxu0 0.0
    %2164 = vmatmul.mubr.f32.gmra.mrb[0].mxu0 %v2027
    %v2165 = vpop.f32.mrb[0].mxu0
    %v2166 = vadd.f32 0.0, %v2165
    %v2167 = vpop.f32.mrb[0].mxu0
    %2168 = vdwg.mxu0
    %2169 = vmatprep.subr.mxu0 0.0
    %2170 = vmatpush1.msra.mxu0 %v298
    %2171 = vmatprep.subr.mxu0 0.0
    %2172 = vmatpush1.msra.mxu0 %v299
    %2173 = vmatprep.subr.mxu0 0.0
    %2174 = vmatpush1.msra.mxu0 %v300
    %2175 = vmatprep.subr.mxu0 0.0
    %2176 = vmatpush1.msra.mxu0 %v301
    %2177 = vmatprep.subr.mxu0 0.0
    %2178 = vmatpush1.msra.mxu0 0.0
    %2179 = vmatprep.subr.mxu0 0.0
    %2180 = vmatpush1.msra.mxu0 0.0
    %2181 = vmatprep.subr.mxu0 0.0
    %2182 = vmatpush1.msra.mxu0 0.0
    %2183 = vmatprep.subr.mxu0 0.0
    %2184 = vmatpush1.msra.mxu0 0.0
    %2185 = vmatprep.subr.mxu0 0.0
    %2186 = vmatpush1.msra.mxu0 0.0
    %2187 = vmatprep.subr.mxu0 0.0
    %2188 = vmatpush1.msra.mxu0 0.0
    %2189 = vmatprep.subr.mxu0 0.0
    %2190 = vmatpush1.msra.mxu0 0.0
    %2191 = vmatprep.subr.mxu0 0.0
    %2192 = vmatpush1.msra.mxu0 0.0
    %2193 = vmatprep.subr.mxu0 0.0
    %2194 = vmatpush1.msra.mxu0 0.0
    %2195 = vmatprep.subr.mxu0 0.0
    %2196 = vmatpush1.msra.mxu0 0.0
    %2197 = vmatprep.subr.mxu0 0.0
    %2198 = vmatpush1.msra.mxu0 0.0
    %2199 = vmatprep.subr.mxu0 0.0
    %2200 = vmatpush1.msra.mxu0 0.0
    %2201 = vmatprep.subr.mxu0 0.0
    %2202 = vmatpush1.msra.mxu0 0.0
    %2203 = vmatprep.subr.mxu0 0.0
    %2204 = vmatpush1.msra.mxu0 0.0
    %2205 = vmatprep.subr.mxu0 0.0
    %2206 = vmatpush1.msra.mxu0 0.0
    %2207 = vmatprep.subr.mxu0 0.0
    %2208 = vmatpush1.msra.mxu0 0.0
    %2209 = vmatprep.subr.mxu0 0.0
    %2210 = vmatpush1.msra.mxu0 0.0
    %2211 = vmatprep.subr.mxu0 0.0
    %2212 = vmatpush1.msra.mxu0 0.0
    %2213 = vmatprep.subr.mxu0 0.0
    %2214 = vmatpush1.msra.mxu0 0.0
    %2215 = vmatprep.subr.mxu0 0.0
    %2216 = vmatpush1.msra.mxu0 0.0
    %2217 = vmatprep.subr.mxu0 0.0
    %2218 = vmatpush1.msra.mxu0 0.0
    %2219 = vmatprep.subr.mxu0 0.0
    %2220 = vmatpush1.msra.mxu0 0.0
    %2221 = vmatprep.subr.mxu0 0.0
    %2222 = vmatpush1.msra.mxu0 0.0
    %2223 = vmatprep.subr.mxu0 0.0
    %2224 = vmatpush1.msra.mxu0 0.0
    %2225 = vmatprep.subr.mxu0 0.0
    %2226 = vmatpush1.msra.mxu0 0.0
    %2227 = vmatprep.subr.mxu0 0.0
    %2228 = vmatpush1.msra.mxu0 0.0
    %2229 = vmatprep.subr.mxu0 0.0
    %2230 = vmatpush1.msra.mxu0 0.0
    %2231 = vmatprep.subr.mxu0 0.0
    %2232 = vmatpush1.msra.mxu0 0.0
    %2233 = vmatprep.mubr.f32.mxu0 0.0
    %2234 = vmatmul.mubr.f32.gmra.mrb[0].mxu0 %v2027
    %v2235 = vpop.f32.mrb[0].mxu0
    %v2236 = vadd.f32 %v704, %v2235
    %v2237 = vpop.f32.mrb[0].mxu0
    %2238 = vdwg.mxu0
    %v2240 = vrot.slane %v2096, 4
    %v2242 = vadd.f32 %v391, %v2240
    %v2243 = vxor.u32 %v2242, 2147483648
    %v2244 = vmul.f32 %v2243, 1.442695
    %v2245 = vpow.pop %v2244
    %v2246 = vadd.f32 %v2245, 1.0
    %v2247 = vrcp.pop %v2246
    %v2248 = vmul.f32 1.0, %v2247
    %v2250 = vrot.slane %v2166, 4
    %v2252 = vadd.f32 %v472, %v2250
    %v2253 = vxor.u32 %v2252, 2147483648
    %v2254 = vmul.f32 %v2253, 1.442695
    %v2255 = vpow.pop %v2254
    %v2256 = vadd.f32 %v2255, 1.0
    %v2257 = vrcp.pop %v2256
    %v2258 = vmul.f32 1.0, %v2257
    %v2260 = vrot.slane %v2236, 4
    %v2262 = vmul.f32 %v2248, %v2260
    %v2263 = vadd.f32 %v553, %v2262
    %v2264 = vtanh.pop %v2263
    %v2265 = vsub.f32 1.0, %v2258
    %v2266 = vmul.f32 %v2265, %v2264
    %v2267 = vrot.slane %v2023, 6
    %v2269 = vmul.f32 %v2258, %v2267
    %v2270 = vadd.f32 %v2266, %v2269
    %2271 = vst.msk [vmem:[#allocation2 + $0x8] sm:$0x30] %vm1292, %v2270
    %v2273 = vrot.slane %v2270, 4
    %v2274 = vsel %vm312, %v2273, 0
    %2276 = vmatprep.subr.mxu0 0.0
    %2277 = vmatpush1.msra.mxu0 %v290
    %2278 = vmatprep.subr.mxu0 0.0
    %2279 = vmatpush1.msra.mxu0 %v291
    %2280 = vmatprep.subr.mxu0 0.0
    %2281 = vmatpush1.msra.mxu0 %v292
    %2282 = vmatprep.subr.mxu0 0.0
    %2283 = vmatpush1.msra.mxu0 %v293
    %2284 = vmatprep.subr.mxu0 0.0
    %2285 = vmatpush1.msra.mxu0 0.0
    %2286 = vmatprep.subr.mxu0 0.0
    %2287 = vmatpush1.msra.mxu0 0.0
    %2288 = vmatprep.subr.mxu0 0.0
    %2289 = vmatpush1.msra.mxu0 0.0
    %2290 = vmatprep.subr.mxu0 0.0
    %2291 = vmatpush1.msra.mxu0 0.0
    %2292 = vmatprep.subr.mxu0 0.0
    %2293 = vmatpush1.msra.mxu0 0.0
    %2294 = vmatprep.subr.mxu0 0.0
    %2295 = vmatpush1.msra.mxu0 0.0
    %2296 = vmatprep.subr.mxu0 0.0
    %2297 = vmatpush1.msra.mxu0 0.0
    %2298 = vmatprep.subr.mxu0 0.0
    %2299 = vmatpush1.msra.mxu0 0.0
    %2300 = vmatprep.subr.mxu0 0.0
    %2301 = vmatpush1.msra.mxu0 0.0
    %2302 = vmatprep.subr.mxu0 0.0
    %2303 = vmatpush1.msra.mxu0 0.0
    %2304 = vmatprep.subr.mxu0 0.0
    %2305 = vmatpush1.msra.mxu0 0.0
    %2306 = vmatprep.subr.mxu0 0.0
    %2307 = vmatpush1.msra.mxu0 0.0
    %2308 = vmatprep.subr.mxu0 0.0
    %2309 = vmatpush1.msra.mxu0 0.0
    %2310 = vmatprep.subr.mxu0 0.0
    %2311 = vmatpush1.msra.mxu0 0.0
    %2312 = vmatprep.subr.mxu0 0.0
    %2313 = vmatpush1.msra.mxu0 0.0
    %2314 = vmatprep.subr.mxu0 0.0
    %2315 = vmatpush1.msra.mxu0 0.0
    %2316 = vmatprep.subr.mxu0 0.0
    %2317 = vmatpush1.msra.mxu0 0.0
    %2318 = vmatprep.subr.mxu0 0.0
    %2319 = vmatpush1.msra.mxu0 0.0
    %2320 = vmatprep.subr.mxu0 0.0
    %2321 = vmatpush1.msra.mxu0 0.0
    %2322 = vmatprep.subr.mxu0 0.0
    %2323 = vmatpush1.msra.mxu0 0.0
    %2324 = vmatprep.subr.mxu0 0.0
    %2325 = vmatpush1.msra.mxu0 0.0
    %2326 = vmatprep.subr.mxu0 0.0
    %2327 = vmatpush1.msra.mxu0 0.0
    %2328 = vmatprep.subr.mxu0 0.0
    %2329 = vmatpush1.msra.mxu0 0.0
    %2330 = vmatprep.subr.mxu0 0.0
    %2331 = vmatpush1.msra.mxu0 0.0
    %2332 = vmatprep.subr.mxu0 0.0
    %2333 = vmatpush1.msra.mxu0 0.0
    %2334 = vmatprep.subr.mxu0 0.0
    %2335 = vmatpush1.msra.mxu0 0.0
    %2336 = vmatprep.subr.mxu0 0.0
    %2337 = vmatpush1.msra.mxu0 0.0
    %2338 = vmatprep.subr.mxu0 0.0
    %2339 = vmatpush1.msra.mxu0 0.0
    %2340 = vmatprep.mubr.f32.mxu0 0.0
    %2341 = vmatmul.mubr.f32.gmra.mrb[0].mxu0 %v2274
    %v2342 = vpop.f32.mrb[0].mxu0
    %v2343 = vadd.f32 0.0, %v2342
    %v2344 = vpop.f32.mrb[0].mxu0
    %2345 = vdwg.mxu0
    %2346 = vmatprep.subr.mxu0 0.0
    %2347 = vmatpush1.msra.mxu0 %v294
    %2348 = vmatprep.subr.mxu0 0.0
    %2349 = vmatpush1.msra.mxu0 %v295
    %2350 = vmatprep.subr.mxu0 0.0
    %2351 = vmatpush1.msra.mxu0 %v296
    %2352 = vmatprep.subr.mxu0 0.0
    %2353 = vmatpush1.msra.mxu0 %v297
    %2354 = vmatprep.subr.mxu0 0.0
    %2355 = vmatpush1.msra.mxu0 0.0
    %2356 = vmatprep.subr.mxu0 0.0
    %2357 = vmatpush1.msra.mxu0 0.0
    %2358 = vmatprep.subr.mxu0 0.0
    %2359 = vmatpush1.msra.mxu0 0.0
    %2360 = vmatprep.subr.mxu0 0.0
    %2361 = vmatpush1.msra.mxu0 0.0
    %2362 = vmatprep.subr.mxu0 0.0
    %2363 = vmatpush1.msra.mxu0 0.0
    %2364 = vmatprep.subr.mxu0 0.0
    %2365 = vmatpush1.msra.mxu0 0.0
    %2366 = vmatprep.subr.mxu0 0.0
    %2367 = vmatpush1.msra.mxu0 0.0
    %2368 = vmatprep.subr.mxu0 0.0
    %2369 = vmatpush1.msra.mxu0 0.0
    %2370 = vmatprep.subr.mxu0 0.0
    %2371 = vmatpush1.msra.mxu0 0.0
    %2372 = vmatprep.subr.mxu0 0.0
    %2373 = vmatpush1.msra.mxu0 0.0
    %2374 = vmatprep.subr.mxu0 0.0
    %2375 = vmatpush1.msra.mxu0 0.0
    %2376 = vmatprep.subr.mxu0 0.0
    %2377 = vmatpush1.msra.mxu0 0.0
    %2378 = vmatprep.subr.mxu0 0.0
    %2379 = vmatpush1.msra.mxu0 0.0
    %2380 = vmatprep.subr.mxu0 0.0
    %2381 = vmatpush1.msra.mxu0 0.0
    %2382 = vmatprep.subr.mxu0 0.0
    %2383 = vmatpush1.msra.mxu0 0.0
    %2384 = vmatprep.subr.mxu0 0.0
    %2385 = vmatpush1.msra.mxu0 0.0
    %2386 = vmatprep.subr.mxu0 0.0
    %2387 = vmatpush1.msra.mxu0 0.0
    %2388 = vmatprep.subr.mxu0 0.0
    %2389 = vmatpush1.msra.mxu0 0.0
    %2390 = vmatprep.subr.mxu0 0.0
    %2391 = vmatpush1.msra.mxu0 0.0
    %2392 = vmatprep.subr.mxu0 0.0
    %2393 = vmatpush1.msra.mxu0 0.0
    %2394 = vmatprep.subr.mxu0 0.0
    %2395 = vmatpush1.msra.mxu0 0.0
    %2396 = vmatprep.subr.mxu0 0.0
    %2397 = vmatpush1.msra.mxu0 0.0
    %2398 = vmatprep.subr.mxu0 0.0
    %2399 = vmatpush1.msra.mxu0 0.0
    %2400 = vmatprep.subr.mxu0 0.0
    %2401 = vmatpush1.msra.mxu0 0.0
    %2402 = vmatprep.subr.mxu0 0.0
    %2403 = vmatpush1.msra.mxu0 0.0
    %2404 = vmatprep.subr.mxu0 0.0
    %2405 = vmatpush1.msra.mxu0 0.0
    %2406 = vmatprep.subr.mxu0 0.0
    %2407 = vmatpush1.msra.mxu0 0.0
    %2408 = vmatprep.subr.mxu0 0.0
    %2409 = vmatpush1.msra.mxu0 0.0
    %2410 = vmatprep.mubr.f32.mxu0 0.0
    %2411 = vmatmul.mubr.f32.gmra.mrb[0].mxu0 %v2274
    %v2412 = vpop.f32.mrb[0].mxu0
    %v2413 = vadd.f32 0.0, %v2412
    %v2414 = vpop.f32.mrb[0].mxu0
    %2415 = vdwg.mxu0
    %2416 = vmatprep.subr.mxu0 0.0
    %2417 = vmatpush1.msra.mxu0 %v298
    %2418 = vmatprep.subr.mxu0 0.0
    %2419 = vmatpush1.msra.mxu0 %v299
    %2420 = vmatprep.subr.mxu0 0.0
    %2421 = vmatpush1.msra.mxu0 %v300
    %2422 = vmatprep.subr.mxu0 0.0
    %2423 = vmatpush1.msra.mxu0 %v301
    %2424 = vmatprep.subr.mxu0 0.0
    %2425 = vmatpush1.msra.mxu0 0.0
    %2426 = vmatprep.subr.mxu0 0.0
    %2427 = vmatpush1.msra.mxu0 0.0
    %2428 = vmatprep.subr.mxu0 0.0
    %2429 = vmatpush1.msra.mxu0 0.0
    %2430 = vmatprep.subr.mxu0 0.0
    %2431 = vmatpush1.msra.mxu0 0.0
    %2432 = vmatprep.subr.mxu0 0.0
    %2433 = vmatpush1.msra.mxu0 0.0
    %2434 = vmatprep.subr.mxu0 0.0
    %2435 = vmatpush1.msra.mxu0 0.0
    %2436 = vmatprep.subr.mxu0 0.0
    %2437 = vmatpush1.msra.mxu0 0.0
    %2438 = vmatprep.subr.mxu0 0.0
    %2439 = vmatpush1.msra.mxu0 0.0
    %2440 = vmatprep.subr.mxu0 0.0
    %2441 = vmatpush1.msra.mxu0 0.0
    %2442 = vmatprep.subr.mxu0 0.0
    %2443 = vmatpush1.msra.mxu0 0.0
    %2444 = vmatprep.subr.mxu0 0.0
    %2445 = vmatpush1.msra.mxu0 0.0
    %2446 = vmatprep.subr.mxu0 0.0
    %2447 = vmatpush1.msra.mxu0 0.0
    %2448 = vmatprep.subr.mxu0 0.0
    %2449 = vmatpush1.msra.mxu0 0.0
    %2450 = vmatprep.subr.mxu0 0.0
    %2451 = vmatpush1.msra.mxu0 0.0
    %2452 = vmatprep.subr.mxu0 0.0
    %2453 = vmatpush1.msra.mxu0 0.0
    %2454 = vmatprep.subr.mxu0 0.0
    %2455 = vmatpush1.msra.mxu0 0.0
    %2456 = vmatprep.subr.mxu0 0.0
    %2457 = vmatpush1.msra.mxu0 0.0
    %2458 = vmatprep.subr.mxu0 0.0
    %2459 = vmatpush1.msra.mxu0 0.0
    %2460 = vmatprep.subr.mxu0 0.0
    %2461 = vmatpush1.msra.mxu0 0.0
    %2462 = vmatprep.subr.mxu0 0.0
    %2463 = vmatpush1.msra.mxu0 0.0
    %2464 = vmatprep.subr.mxu0 0.0
    %2465 = vmatpush1.msra.mxu0 0.0
    %2466 = vmatprep.subr.mxu0 0.0
    %2467 = vmatpush1.msra.mxu0 0.0
    %2468 = vmatprep.subr.mxu0 0.0
    %2469 = vmatpush1.msra.mxu0 0.0
    %2470 = vmatprep.subr.mxu0 0.0
    %2471 = vmatpush1.msra.mxu0 0.0
    %2472 = vmatprep.subr.mxu0 0.0
    %2473 = vmatpush1.msra.mxu0 0.0
    %2474 = vmatprep.subr.mxu0 0.0
    %2475 = vmatpush1.msra.mxu0 0.0
    %2476 = vmatprep.subr.mxu0 0.0
    %2477 = vmatpush1.msra.mxu0 0.0
    %2478 = vmatprep.subr.mxu0 0.0
    %2479 = vmatpush1.msra.mxu0 0.0
    %2480 = vmatprep.mubr.f32.mxu0 0.0
    %2481 = vmatmul.mubr.f32.gmra.mrb[0].mxu0 %v2274
    %v2482 = vpop.f32.mrb[0].mxu0
    %v2483 = vadd.f32 %v704, %v2482
    %v2484 = vpop.f32.mrb[0].mxu0
    %2485 = vdwg.mxu0
    %v2487 = vrot.slane %v2343, 2
    %v2489 = vadd.f32 %v391, %v2487
    %v2490 = vxor.u32 %v2489, 2147483648
    %v2491 = vmul.f32 %v2490, 1.442695
    %v2492 = vpow.pop %v2491
    %v2493 = vadd.f32 %v2492, 1.0
    %v2494 = vrcp.pop %v2493
    %v2495 = vmul.f32 1.0, %v2494
    %v2497 = vrot.slane %v2413, 2
    %v2499 = vadd.f32 %v472, %v2497
    %v2500 = vxor.u32 %v2499, 2147483648
    %v2501 = vmul.f32 %v2500, 1.442695
    %v2502 = vpow.pop %v2501
    %v2503 = vadd.f32 %v2502, 1.0
    %v2504 = vrcp.pop %v2503
    %v2505 = vmul.f32 1.0, %v2504
    %v2507 = vrot.slane %v2483, 2
    %v2509 = vmul.f32 %v2495, %v2507
    %v2510 = vadd.f32 %v553, %v2509
    %v2511 = vtanh.pop %v2510
    %v2512 = vsub.f32 1.0, %v2505
    %v2513 = vmul.f32 %v2512, %v2511
    %v2514 = vrot.slane %v2270, 6
    %v2516 = vmul.f32 %v2505, %v2514
    %v2517 = vadd.f32 %v2513, %v2516
    %2518 = vst.msk [vmem:[#allocation2 + $0x8] sm:$0xc0] %vm1540, %v2517
    %2519 = vst.msk [vmem:[#allocation28 - $0x6] sm:$0xc0] %vm1540, %v2517
    %v2520 = vld [vmem:[#allocation2] sm:$0xff]
    %v2521 = vld [vmem:[#allocation2 + $0x8] sm:$0xff]
    %v2522 = vld [vmem:[#allocation20] sm:$0xff]
    %v2523 = vld [vmem:[#allocation20 + $0x8] sm:$0xff]
    %v2524 = vld [vmem:[#allocation20 + $0x10] sm:$0xff]
    %v2525 = vld [vmem:[#allocation20 + $0x18] sm:$0xff]
    %v2526 = vld [vmem:[%s13] sm:$0xff]
    %v2527 = vld [vmem:[%s13 + $0x8] sm:$0xff]
    %v2528 = vld [vmem:[%s13 + $0x10] sm:$0xff]
    %v2529 = vld [vmem:[%s13 + $0x18] sm:$0xff]
    %v2530 = vld [vmem:[#allocation21] sm:$0xff]
    %v2531 = vld [vmem:[#allocation21 + $0x8] sm:$0xff]
    %v2532 = vld [vmem:[#allocation21 + $0x10] sm:$0xff]
    %v2533 = vld [vmem:[#allocation21 + $0x18] sm:$0xff]
    %v2534 = vld [vmem:[#allocation23] sm:$0xff]
    %v2535 = vld [vmem:[#allocation23 + $0x8] sm:$0xff]
    %v2536 = vld [vmem:[#allocation23 + $0x10] sm:$0xff]
    %v2537 = vld [vmem:[#allocation23 + $0x18] sm:$0xff]
    %v2538 = vld [vmem:[#allocation24] sm:$0xff]
    %v2539 = vld [vmem:[#allocation24 + $0x8] sm:$0xff]
    %v2540 = vld [vmem:[#allocation24 + $0x10] sm:$0xff]
    %v2541 = vld [vmem:[#allocation24 + $0x18] sm:$0xff]
    %v2542 = vld [vmem:[#allocation26] sm:$0xff]
    %v2543 = vld [vmem:[#allocation26 + $0x8] sm:$0xff]
    %v2544 = vld [vmem:[#allocation26 + $0x10] sm:$0xff]
    %v2545 = vld [vmem:[#allocation26 + $0x18] sm:$0xff]
    %v2546 = vld [vmem:[%s18] sm:$0x1]
    %v2547 = vld [vmem:[%s19] sm:$0x1]
    %v2548 = vld [vmem:[%s20] sm:$0x1]
    %v2549 = vld [vmem:[%s21] sm:$0x1]
    %v2551 = vlaneseq
    %v2552 = vshrl.u32 %v2551, 7
    %v2553 = vsub.s32 0, %v2552
    %v2554 = vrot.slane %v2546, %v2553
    %v2557 = vsel %vm312, %v2520, 0
    %v2560 = vsel %vm312, %v2521, 0
    %2562 = vmatprep.subr.mxu0 0.0
    %2563 = vmatpush1.msra.mxu0 %v2522
    %2564 = vmatprep.subr.mxu0 0.0
    %2565 = vmatpush1.msra.mxu0 %v2523
    %2566 = vmatprep.subr.mxu0 0.0
    %2567 = vmatpush1.msra.mxu0 %v2524
    %2568 = vmatprep.subr.mxu0 0.0
    %2569 = vmatpush1.msra.mxu0 %v2525
    %2570 = vmatprep.subr.mxu0 0.0
    %2571 = vmatpush1.msra.mxu0 0.0
    %2572 = vmatprep.subr.mxu0 0.0
    %2573 = vmatpush1.msra.mxu0 0.0
    %2574 = vmatprep.subr.mxu0 0.0
    %2575 = vmatpush1.msra.mxu0 0.0
    %2576 = vmatprep.subr.mxu0 0.0
    %2577 = vmatpush1.msra.mxu0 0.0
    %2578 = vmatprep.subr.mxu0 0.0
    %2579 = vmatpush1.msra.mxu0 0.0
    %2580 = vmatprep.subr.mxu0 0.0
    %2581 = vmatpush1.msra.mxu0 0.0
    %2582 = vmatprep.subr.mxu0 0.0
    %2583 = vmatpush1.msra.mxu0 0.0
    %2584 = vmatprep.subr.mxu0 0.0
    %2585 = vmatpush1.msra.mxu0 0.0
    %2586 = vmatprep.subr.mxu0 0.0
    %2587 = vmatpush1.msra.mxu0 0.0
    %2588 = vmatprep.subr.mxu0 0.0
    %2589 = vmatpush1.msra.mxu0 0.0
    %2590 = vmatprep.subr.mxu0 0.0
    %2591 = vmatpush1.msra.mxu0 0.0
    %2592 = vmatprep.subr.mxu0 0.0
    %2593 = vmatpush1.msra.mxu0 0.0
    %2594 = vmatprep.subr.mxu0 0.0
    %2595 = vmatpush1.msra.mxu0 0.0
    %2596 = vmatprep.subr.mxu0 0.0
    %2597 = vmatpush1.msra.mxu0 0.0
    %2598 = vmatprep.subr.mxu0 0.0
    %2599 = vmatpush1.msra.mxu0 0.0
    %2600 = vmatprep.subr.mxu0 0.0
    %2601 = vmatpush1.msra.mxu0 0.0
    %2602 = vmatprep.subr.mxu0 0.0
    %2603 = vmatpush1.msra.mxu0 0.0
    %2604 = vmatprep.subr.mxu0 0.0
    %2605 = vmatpush1.msra.mxu0 0.0
    %2606 = vmatprep.subr.mxu0 0.0
    %2607 = vmatpush1.msra.mxu0 0.0
    %2608 = vmatprep.subr.mxu0 0.0
    %2609 = vmatpush1.msra.mxu0 0.0
    %2610 = vmatprep.subr.mxu0 0.0
    %2611 = vmatpush1.msra.mxu0 0.0
    %2612 = vmatprep.subr.mxu0 0.0
    %2613 = vmatpush1.msra.mxu0 0.0
    %2614 = vmatprep.subr.mxu0 0.0
    %2615 = vmatpush1.msra.mxu0 0.0
    %2616 = vmatprep.subr.mxu0 0.0
    %2617 = vmatpush1.msra.mxu0 0.0
    %2618 = vmatprep.subr.mxu0 0.0
    %2619 = vmatpush1.msra.mxu0 0.0
    %2620 = vmatprep.subr.mxu0 0.0
    %2621 = vmatpush1.msra.mxu0 0.0
    %2622 = vmatprep.subr.mxu0 0.0
    %2623 = vmatpush1.msra.mxu0 0.0
    %2624 = vmatprep.subr.mxu0 0.0
    %2625 = vmatpush1.msra.mxu0 0.0
    %2626 = vmatprep.mubr.f32.mxu0 0.0
    %2627 = vmatmul.mubr.f32.gmra.mrb[0].mxu0 %v2557
    %v2628 = vpop.f32.mrb[0].mxu0
    %v2629 = vadd.f32 %v2554, %v2628
    %v2630 = vpop.f32.mrb[0].mxu0
    %2631 = vmatprep.mubr.f32.mxu0 0.0
    %2632 = vmatmul.mubr.f32.gmra.mrb[0].mxu0 %v2560
    %v2633 = vpop.f32.mrb[0].mxu0
    %v2634 = vadd.f32 %v2554, %v2633
    %v2635 = vpop.f32.mrb[0].mxu0
    %2636 = vdwg.mxu0
    %v2638 = vlaneseq
    %v2639 = vshrl.u32 %v2638, 7
    %v2640 = vsub.s32 0, %v2639
    %v2641 = vrot.slane %v2547, %v2640
    %2643 = vmatprep.subr.mxu0 0.0
    %2644 = vmatpush1.msra.mxu0 %v2526
    %2645 = vmatprep.subr.mxu0 0.0
    %2646 = vmatpush1.msra.mxu0 %v2527
    %2647 = vmatprep.subr.mxu0 0.0
    %2648 = vmatpush1.msra.mxu0 %v2528
    %2649 = vmatprep.subr.mxu0 0.0
    %2650 = vmatpush1.msra.mxu0 %v2529
    %2651 = vmatprep.subr.mxu0 0.0
    %2652 = vmatpush1.msra.mxu0 0.0
    %2653 = vmatprep.subr.mxu0 0.0
    %2654 = vmatpush1.msra.mxu0 0.0
    %2655 = vmatprep.subr.mxu0 0.0
    %2656 = vmatpush1.msra.mxu0 0.0
    %2657 = vmatprep.subr.mxu0 0.0
    %2658 = vmatpush1.msra.mxu0 0.0
    %2659 = vmatprep.subr.mxu0 0.0
    %2660 = vmatpush1.msra.mxu0 0.0
    %2661 = vmatprep.subr.mxu0 0.0
    %2662 = vmatpush1.msra.mxu0 0.0
    %2663 = vmatprep.subr.mxu0 0.0
    %2664 = vmatpush1.msra.mxu0 0.0
    %2665 = vmatprep.subr.mxu0 0.0
    %2666 = vmatpush1.msra.mxu0 0.0
    %2667 = vmatprep.subr.mxu0 0.0
    %2668 = vmatpush1.msra.mxu0 0.0
    %2669 = vmatprep.subr.mxu0 0.0
    %2670 = vmatpush1.msra.mxu0 0.0
    %2671 = vmatprep.subr.mxu0 0.0
    %2672 = vmatpush1.msra.mxu0 0.0
    %2673 = vmatprep.subr.mxu0 0.0
    %2674 = vmatpush1.msra.mxu0 0.0
    %2675 = vmatprep.subr.mxu0 0.0
    %2676 = vmatpush1.msra.mxu0 0.0
    %2677 = vmatprep.subr.mxu0 0.0
    %2678 = vmatpush1.msra.mxu0 0.0
    %2679 = vmatprep.subr.mxu0 0.0
    %2680 = vmatpush1.msra.mxu0 0.0
    %2681 = vmatprep.subr.mxu0 0.0
    %2682 = vmatpush1.msra.mxu0 0.0
    %2683 = vmatprep.subr.mxu0 0.0
    %2684 = vmatpush1.msra.mxu0 0.0
    %2685 = vmatprep.subr.mxu0 0.0
    %2686 = vmatpush1.msra.mxu0 0.0
    %2687 = vmatprep.subr.mxu0 0.0
    %2688 = vmatpush1.msra.mxu0 0.0
    %2689 = vmatprep.subr.mxu0 0.0
    %2690 = vmatpush1.msra.mxu0 0.0
    %2691 = vmatprep.subr.mxu0 0.0
    %2692 = vmatpush1.msra.mxu0 0.0
    %2693 = vmatprep.subr.mxu0 0.0
    %2694 = vmatpush1.msra.mxu0 0.0
    %2695 = vmatprep.subr.mxu0 0.0
    %2696 = vmatpush1.msra.mxu0 0.0
    %2697 = vmatprep.subr.mxu0 0.0
    %2698 = vmatpush1.msra.mxu0 0.0
    %2699 = vmatprep.subr.mxu0 0.0
    %2700 = vmatpush1.msra.mxu0 0.0
    %2701 = vmatprep.subr.mxu0 0.0
    %2702 = vmatpush1.msra.mxu0 0.0
    %2703 = vmatprep.subr.mxu0 0.0
    %2704 = vmatpush1.msra.mxu0 0.0
    %2705 = vmatprep.subr.mxu0 0.0
    %2706 = vmatpush1.msra.mxu0 0.0
    %2707 = vmatprep.mubr.f32.mxu0 0.0
    %2708 = vmatmul.mubr.f32.gmra.mrb[0].mxu0 %v2557
    %v2709 = vpop.f32.mrb[0].mxu0
    %v2710 = vadd.f32 %v2641, %v2709
    %v2711 = vpop.f32.mrb[0].mxu0
    %2712 = vmatprep.mubr.f32.mxu0 0.0
    %2713 = vmatmul.mubr.f32.gmra.mrb[0].mxu0 %v2560
    %v2714 = vpop.f32.mrb[0].mxu0
    %v2715 = vadd.f32 %v2641, %v2714
    %v2716 = vpop.f32.mrb[0].mxu0
    %2717 = vdwg.mxu0
    %v2719 = vlaneseq
    %v2720 = vshrl.u32 %v2719, 7
    %v2721 = vsub.s32 0, %v2720
    %v2722 = vrot.slane %v2548, %v2721
    %2724 = vmatprep.subr.mxu0 0.0
    %2725 = vmatpush1.msra.mxu0 %v2530
    %2726 = vmatprep.subr.mxu0 0.0
    %2727 = vmatpush1.msra.mxu0 %v2531
    %2728 = vmatprep.subr.mxu0 0.0
    %2729 = vmatpush1.msra.mxu0 %v2532
    %2730 = vmatprep.subr.mxu0 0.0
    %2731 = vmatpush1.msra.mxu0 %v2533
    %2732 = vmatprep.subr.mxu0 0.0
    %2733 = vmatpush1.msra.mxu0 0.0
    %2734 = vmatprep.subr.mxu0 0.0
    %2735 = vmatpush1.msra.mxu0 0.0
    %2736 = vmatprep.subr.mxu0 0.0
    %2737 = vmatpush1.msra.mxu0 0.0
    %2738 = vmatprep.subr.mxu0 0.0
    %2739 = vmatpush1.msra.mxu0 0.0
    %2740 = vmatprep.subr.mxu0 0.0
    %2741 = vmatpush1.msra.mxu0 0.0
    %2742 = vmatprep.subr.mxu0 0.0
    %2743 = vmatpush1.msra.mxu0 0.0
    %2744 = vmatprep.subr.mxu0 0.0
    %2745 = vmatpush1.msra.mxu0 0.0
    %2746 = vmatprep.subr.mxu0 0.0
    %2747 = vmatpush1.msra.mxu0 0.0
    %2748 = vmatprep.subr.mxu0 0.0
    %2749 = vmatpush1.msra.mxu0 0.0
    %2750 = vmatprep.subr.mxu0 0.0
    %2751 = vmatpush1.msra.mxu0 0.0
    %2752 = vmatprep.subr.mxu0 0.0
    %2753 = vmatpush1.msra.mxu0 0.0
    %2754 = vmatprep.subr.mxu0 0.0
    %2755 = vmatpush1.msra.mxu0 0.0
    %2756 = vmatprep.subr.mxu0 0.0
    %2757 = vmatpush1.msra.mxu0 0.0
    %2758 = vmatprep.subr.mxu0 0.0
    %2759 = vmatpush1.msra.mxu0 0.0
    %2760 = vmatprep.subr.mxu0 0.0
    %2761 = vmatpush1.msra.mxu0 0.0
    %2762 = vmatprep.subr.mxu0 0.0
    %2763 = vmatpush1.msra.mxu0 0.0
    %2764 = vmatprep.subr.mxu0 0.0
    %2765 = vmatpush1.msra.mxu0 0.0
    %2766 = vmatprep.subr.mxu0 0.0
    %2767 = vmatpush1.msra.mxu0 0.0
    %2768 = vmatprep.subr.mxu0 0.0
    %2769 = vmatpush1.msra.mxu0 0.0
    %2770 = vmatprep.subr.mxu0 0.0
    %2771 = vmatpush1.msra.mxu0 0.0
    %2772 = vmatprep.subr.mxu0 0.0
    %2773 = vmatpush1.msra.mxu0 0.0
    %2774 = vmatprep.subr.mxu0 0.0
    %2775 = vmatpush1.msra.mxu0 0.0
    %2776 = vmatprep.subr.mxu0 0.0
    %2777 = vmatpush1.msra.mxu0 0.0
    %2778 = vmatprep.subr.mxu0 0.0
    %2779 = vmatpush1.msra.mxu0 0.0
    %2780 = vmatprep.subr.mxu0 0.0
    %2781 = vmatpush1.msra.mxu0 0.0
    %2782 = vmatprep.subr.mxu0 0.0
    %2783 = vmatpush1.msra.mxu0 0.0
    %2784 = vmatprep.subr.mxu0 0.0
    %2785 = vmatpush1.msra.mxu0 0.0
    %2786 = vmatprep.subr.mxu0 0.0
    %2787 = vmatpush1.msra.mxu0 0.0
    %2788 = vmatprep.mubr.f32.mxu0 0.0
    %2789 = vmatmul.mubr.f32.gmra.mrb[0].mxu0 %v2557
    %v2790 = vpop.f32.mrb[0].mxu0
    %v2791 = vadd.f32 %v2722, %v2790
    %v2792 = vpop.f32.mrb[0].mxu0
    %2793 = vmatprep.mubr.f32.mxu0 0.0
    %2794 = vmatmul.mubr.f32.gmra.mrb[0].mxu0 %v2560
    %v2795 = vpop.f32.mrb[0].mxu0
    %v2796 = vadd.f32 %v2722, %v2795
    %v2797 = vpop.f32.mrb[0].mxu0
    %2798 = vdwg.mxu0
    %s2799 = scalar_lea.vmem [#allocation6], 2
    %v2800 = vld [vmem:[%s2799] sm:$0x3]
    %v2802 = vsel %vm312, %v2800, 0
    %2804 = vmatprep.subr.mxu0 0.0
    %2805 = vmatpush1.msra.mxu0 %v2534
    %2806 = vmatprep.subr.mxu0 0.0
    %2807 = vmatpush1.msra.mxu0 %v2535
    %2808 = vmatprep.subr.mxu0 0.0
    %2809 = vmatpush1.msra.mxu0 %v2536
    %2810 = vmatprep.subr.mxu0 0.0
    %2811 = vmatpush1.msra.mxu0 %v2537
    %2812 = vmatprep.subr.mxu0 0.0
    %2813 = vmatpush1.msra.mxu0 0.0
    %2814 = vmatprep.subr.mxu0 0.0
    %2815 = vmatpush1.msra.mxu0 0.0
    %2816 = vmatprep.subr.mxu0 0.0
    %2817 = vmatpush1.msra.mxu0 0.0
    %2818 = vmatprep.subr.mxu0 0.0
    %2819 = vmatpush1.msra.mxu0 0.0
    %2820 = vmatprep.subr.mxu0 0.0
    %2821 = vmatpush1.msra.mxu0 0.0
    %2822 = vmatprep.subr.mxu0 0.0
    %2823 = vmatpush1.msra.mxu0 0.0
    %2824 = vmatprep.subr.mxu0 0.0
    %2825 = vmatpush1.msra.mxu0 0.0
    %2826 = vmatprep.subr.mxu0 0.0
    %2827 = vmatpush1.msra.mxu0 0.0
    %2828 = vmatprep.subr.mxu0 0.0
    %2829 = vmatpush1.msra.mxu0 0.0
    %2830 = vmatprep.subr.mxu0 0.0
    %2831 = vmatpush1.msra.mxu0 0.0
    %2832 = vmatprep.subr.mxu0 0.0
    %2833 = vmatpush1.msra.mxu0 0.0
    %2834 = vmatprep.subr.mxu0 0.0
    %2835 = vmatpush1.msra.mxu0 0.0
    %2836 = vmatprep.subr.mxu0 0.0
    %2837 = vmatpush1.msra.mxu0 0.0
    %2838 = vmatprep.subr.mxu0 0.0
    %2839 = vmatpush1.msra.mxu0 0.0
    %2840 = vmatprep.subr.mxu0 0.0
    %2841 = vmatpush1.msra.mxu0 0.0
    %2842 = vmatprep.subr.mxu0 0.0
    %2843 = vmatpush1.msra.mxu0 0.0
    %2844 = vmatprep.subr.mxu0 0.0
    %2845 = vmatpush1.msra.mxu0 0.0
    %2846 = vmatprep.subr.mxu0 0.0
    %2847 = vmatpush1.msra.mxu0 0.0
    %2848 = vmatprep.subr.mxu0 0.0
    %2849 = vmatpush1.msra.mxu0 0.0
    %2850 = vmatprep.subr.mxu0 0.0
    %2851 = vmatpush1.msra.mxu0 0.0
    %2852 = vmatprep.subr.mxu0 0.0
    %2853 = vmatpush1.msra.mxu0 0.0
    %2854 = vmatprep.subr.mxu0 0.0
    %2855 = vmatpush1.msra.mxu0 0.0
    %2856 = vmatprep.subr.mxu0 0.0
    %2857 = vmatpush1.msra.mxu0 0.0
    %2858 = vmatprep.subr.mxu0 0.0
    %2859 = vmatpush1.msra.mxu0 0.0
    %2860 = vmatprep.subr.mxu0 0.0
    %2861 = vmatpush1.msra.mxu0 0.0
    %2862 = vmatprep.subr.mxu0 0.0
    %2863 = vmatpush1.msra.mxu0 0.0
    %2864 = vmatprep.subr.mxu0 0.0
    %2865 = vmatpush1.msra.mxu0 0.0
    %2866 = vmatprep.subr.mxu0 0.0
    %2867 = vmatpush1.msra.mxu0 0.0
    %2868 = vmatprep.mubr.f32.mxu0 0.0
    %2869 = vmatmul.mubr.f32.gmra.mrb[0].mxu0 %v2802
    %v2870 = vpop.f32.mrb[0].mxu0
    %v2871 = vadd.f32 0.0, %v2870
    %v2872 = vpop.f32.mrb[0].mxu0
    %2873 = vdwg.mxu0
    %2874 = vmatprep.subr.mxu0 0.0
    %2875 = vmatpush1.msra.mxu0 %v2538
    %2876 = vmatprep.subr.mxu0 0.0
    %2877 = vmatpush1.msra.mxu0 %v2539
    %2878 = vmatprep.subr.mxu0 0.0
    %2879 = vmatpush1.msra.mxu0 %v2540
    %2880 = vmatprep.subr.mxu0 0.0
    %2881 = vmatpush1.msra.mxu0 %v2541
    %2882 = vmatprep.subr.mxu0 0.0
    %2883 = vmatpush1.msra.mxu0 0.0
    %2884 = vmatprep.subr.mxu0 0.0
    %2885 = vmatpush1.msra.mxu0 0.0
    %2886 = vmatprep.subr.mxu0 0.0
    %2887 = vmatpush1.msra.mxu0 0.0
    %2888 = vmatprep.subr.mxu0 0.0
    %2889 = vmatpush1.msra.mxu0 0.0
    %2890 = vmatprep.subr.mxu0 0.0
    %2891 = vmatpush1.msra.mxu0 0.0
    %2892 = vmatprep.subr.mxu0 0.0
    %2893 = vmatpush1.msra.mxu0 0.0
    %2894 = vmatprep.subr.mxu0 0.0
    %2895 = vmatpush1.msra.mxu0 0.0
    %2896 = vmatprep.subr.mxu0 0.0
    %2897 = vmatpush1.msra.mxu0 0.0
    %2898 = vmatprep.subr.mxu0 0.0
    %2899 = vmatpush1.msra.mxu0 0.0
    %2900 = vmatprep.subr.mxu0 0.0
    %2901 = vmatpush1.msra.mxu0 0.0
    %2902 = vmatprep.subr.mxu0 0.0
    %2903 = vmatpush1.msra.mxu0 0.0
    %2904 = vmatprep.subr.mxu0 0.0
    %2905 = vmatpush1.msra.mxu0 0.0
    %2906 = vmatprep.subr.mxu0 0.0
    %2907 = vmatpush1.msra.mxu0 0.0
    %2908 = vmatprep.subr.mxu0 0.0
    %2909 = vmatpush1.msra.mxu0 0.0
    %2910 = vmatprep.subr.mxu0 0.0
    %2911 = vmatpush1.msra.mxu0 0.0
    %2912 = vmatprep.subr.mxu0 0.0
    %2913 = vmatpush1.msra.mxu0 0.0
    %2914 = vmatprep.subr.mxu0 0.0
    %2915 = vmatpush1.msra.mxu0 0.0
    %2916 = vmatprep.subr.mxu0 0.0
    %2917 = vmatpush1.msra.mxu0 0.0
    %2918 = vmatprep.subr.mxu0 0.0
    %2919 = vmatpush1.msra.mxu0 0.0
    %2920 = vmatprep.subr.mxu0 0.0
    %2921 = vmatpush1.msra.mxu0 0.0
    %2922 = vmatprep.subr.mxu0 0.0
    %2923 = vmatpush1.msra.mxu0 0.0
    %2924 = vmatprep.subr.mxu0 0.0
    %2925 = vmatpush1.msra.mxu0 0.0
    %2926 = vmatprep.subr.mxu0 0.0
    %2927 = vmatpush1.msra.mxu0 0.0
    %2928 = vmatprep.subr.mxu0 0.0
    %2929 = vmatpush1.msra.mxu0 0.0
    %2930 = vmatprep.subr.mxu0 0.0
    %2931 = vmatpush1.msra.mxu0 0.0
    %2932 = vmatprep.subr.mxu0 0.0
    %2933 = vmatpush1.msra.mxu0 0.0
    %2934 = vmatprep.subr.mxu0 0.0
    %2935 = vmatpush1.msra.mxu0 0.0
    %2936 = vmatprep.subr.mxu0 0.0
    %2937 = vmatpush1.msra.mxu0 0.0
    %2938 = vmatprep.mubr.f32.mxu0 0.0
    %2939 = vmatmul.mubr.f32.gmra.mrb[0].mxu0 %v2802
    %v2940 = vpop.f32.mrb[0].mxu0
    %v2941 = vadd.f32 0.0, %v2940
    %v2942 = vpop.f32.mrb[0].mxu0
    %2943 = vdwg.mxu0
    %v2945 = vlaneseq
    %v2946 = vshrl.u32 %v2945, 7
    %v2947 = vsub.s32 0, %v2946
    %v2948 = vrot.slane %v2549, %v2947
    %2950 = vmatprep.subr.mxu0 0.0
    %2951 = vmatpush1.msra.mxu0 %v2542
    %2952 = vmatprep.subr.mxu0 0.0
    %2953 = vmatpush1.msra.mxu0 %v2543
    %2954 = vmatprep.subr.mxu0 0.0
    %2955 = vmatpush1.msra.mxu0 %v2544
    %2956 = vmatprep.subr.mxu0 0.0
    %2957 = vmatpush1.msra.mxu0 %v2545
    %2958 = vmatprep.subr.mxu0 0.0
    %2959 = vmatpush1.msra.mxu0 0.0
    %2960 = vmatprep.subr.mxu0 0.0
    %2961 = vmatpush1.msra.mxu0 0.0
    %2962 = vmatprep.subr.mxu0 0.0
    %2963 = vmatpush1.msra.mxu0 0.0
    %2964 = vmatprep.subr.mxu0 0.0
    %2965 = vmatpush1.msra.mxu0 0.0
    %2966 = vmatprep.subr.mxu0 0.0
    %2967 = vmatpush1.msra.mxu0 0.0
    %2968 = vmatprep.subr.mxu0 0.0
    %2969 = vmatpush1.msra.mxu0 0.0
    %2970 = vmatprep.subr.mxu0 0.0
    %2971 = vmatpush1.msra.mxu0 0.0
    %2972 = vmatprep.subr.mxu0 0.0
    %2973 = vmatpush1.msra.mxu0 0.0
    %2974 = vmatprep.subr.mxu0 0.0
    %2975 = vmatpush1.msra.mxu0 0.0
    %2976 = vmatprep.subr.mxu0 0.0
    %2977 = vmatpush1.msra.mxu0 0.0
    %2978 = vmatprep.subr.mxu0 0.0
    %2979 = vmatpush1.msra.mxu0 0.0
    %2980 = vmatprep.subr.mxu0 0.0
    %2981 = vmatpush1.msra.mxu0 0.0
    %2982 = vmatprep.subr.mxu0 0.0
    %2983 = vmatpush1.msra.mxu0 0.0
    %2984 = vmatprep.subr.mxu0 0.0
    %2985 = vmatpush1.msra.mxu0 0.0
    %2986 = vmatprep.subr.mxu0 0.0
    %2987 = vmatpush1.msra.mxu0 0.0
    %2988 = vmatprep.subr.mxu0 0.0
    %2989 = vmatpush1.msra.mxu0 0.0
    %2990 = vmatprep.subr.mxu0 0.0
    %2991 = vmatpush1.msra.mxu0 0.0
    %2992 = vmatprep.subr.mxu0 0.0
    %2993 = vmatpush1.msra.mxu0 0.0
    %2994 = vmatprep.subr.mxu0 0.0
    %2995 = vmatpush1.msra.mxu0 0.0
    %2996 = vmatprep.subr.mxu0 0.0
    %2997 = vmatpush1.msra.mxu0 0.0
    %2998 = vmatprep.subr.mxu0 0.0
    %2999 = vmatpush1.msra.mxu0 0.0
    %3000 = vmatprep.subr.mxu0 0.0
    %3001 = vmatpush1.msra.mxu0 0.0
    %3002 = vmatprep.subr.mxu0 0.0
    %3003 = vmatpush1.msra.mxu0 0.0
    %3004 = vmatprep.subr.mxu0 0.0
    %3005 = vmatpush1.msra.mxu0 0.0
    %3006 = vmatprep.subr.mxu0 0.0
    %3007 = vmatpush1.msra.mxu0 0.0
    %3008 = vmatprep.subr.mxu0 0.0
    %3009 = vmatpush1.msra.mxu0 0.0
    %3010 = vmatprep.subr.mxu0 0.0
    %3011 = vmatpush1.msra.mxu0 0.0
    %3012 = vmatprep.subr.mxu0 0.0
    %3013 = vmatpush1.msra.mxu0 0.0
    %3014 = vmatprep.mubr.f32.mxu0 0.0
    %3015 = vmatmul.mubr.f32.gmra.mrb[0].mxu0 %v2802
    %v3016 = vpop.f32.mrb[0].mxu0
    %v3017 = vadd.f32 %v2948, %v3016
    %v3018 = vpop.f32.mrb[0].mxu0
    %3019 = vdwg.mxu0
    %v3020 = vadd.f32 %v2629, %v2871
    %v3021 = vxor.u32 %v3020, 2147483648
    %v3022 = vmul.f32 %v3021, 1.442695
    %v3023 = vpow.pop %v3022
    %v3024 = vadd.f32 %v3023, 1.0
    %v3025 = vrcp.pop %v3024
    %v3026 = vmul.f32 1.0, %v3025
    %v3027 = vadd.f32 %v2710, %v2941
    %v3028 = vxor.u32 %v3027, 2147483648
    %v3029 = vmul.f32 %v3028, 1.442695
    %v3030 = vpow.pop %v3029
    %v3031 = vadd.f32 %v3030, 1.0
    %v3032 = vrcp.pop %v3031
    %v3033 = vmul.f32 1.0, %v3032
    %v3034 = vmul.f32 %v3026, %v3017
    %v3035 = vadd.f32 %v2791, %v3034
    %v3036 = vtanh.pop %v3035
    %v3037 = vsub.f32 1.0, %v3033
    %v3038 = vmul.f32 %v3037, %v3036
    %v3039 = vmul.f32 %v3033, %v2800
    %v3040 = vadd.f32 %v3038, %v3039
    %3041 = vst.msk [vmem:[#allocation2] sm:$0x3] %vm797, %v3040
    %v3043 = vsel %vm312, %v3040, 0
    %3045 = vmatprep.subr.mxu0 0.0
    %3046 = vmatpush1.msra.mxu0 %v2534
    %3047 = vmatprep.subr.mxu0 0.0
    %3048 = vmatpush1.msra.mxu0 %v2535
    %3049 = vmatprep.subr.mxu0 0.0
    %3050 = vmatpush1.msra.mxu0 %v2536
    %3051 = vmatprep.subr.mxu0 0.0
    %3052 = vmatpush1.msra.mxu0 %v2537
    %3053 = vmatprep.subr.mxu0 0.0
    %3054 = vmatpush1.msra.mxu0 0.0
    %3055 = vmatprep.subr.mxu0 0.0
    %3056 = vmatpush1.msra.mxu0 0.0
    %3057 = vmatprep.subr.mxu0 0.0
    %3058 = vmatpush1.msra.mxu0 0.0
    %3059 = vmatprep.subr.mxu0 0.0
    %3060 = vmatpush1.msra.mxu0 0.0
    %3061 = vmatprep.subr.mxu0 0.0
    %3062 = vmatpush1.msra.mxu0 0.0
    %3063 = vmatprep.subr.mxu0 0.0
    %3064 = vmatpush1.msra.mxu0 0.0
    %3065 = vmatprep.subr.mxu0 0.0
    %3066 = vmatpush1.msra.mxu0 0.0
    %3067 = vmatprep.subr.mxu0 0.0
    %3068 = vmatpush1.msra.mxu0 0.0
    %3069 = vmatprep.subr.mxu0 0.0
    %3070 = vmatpush1.msra.mxu0 0.0
    %3071 = vmatprep.subr.mxu0 0.0
    %3072 = vmatpush1.msra.mxu0 0.0
    %3073 = vmatprep.subr.mxu0 0.0
    %3074 = vmatpush1.msra.mxu0 0.0
    %3075 = vmatprep.subr.mxu0 0.0
    %3076 = vmatpush1.msra.mxu0 0.0
    %3077 = vmatprep.subr.mxu0 0.0
    %3078 = vmatpush1.msra.mxu0 0.0
    %3079 = vmatprep.subr.mxu0 0.0
    %3080 = vmatpush1.msra.mxu0 0.0
    %3081 = vmatprep.subr.mxu0 0.0
    %3082 = vmatpush1.msra.mxu0 0.0
    %3083 = vmatprep.subr.mxu0 0.0
    %3084 = vmatpush1.msra.mxu0 0.0
    %3085 = vmatprep.subr.mxu0 0.0
    %3086 = vmatpush1.msra.mxu0 0.0
    %3087 = vmatprep.subr.mxu0 0.0
    %3088 = vmatpush1.msra.mxu0 0.0
    %3089 = vmatprep.subr.mxu0 0.0
    %3090 = vmatpush1.msra.mxu0 0.0
    %3091 = vmatprep.subr.mxu0 0.0
    %3092 = vmatpush1.msra.mxu0 0.0
    %3093 = vmatprep.subr.mxu0 0.0
    %3094 = vmatpush1.msra.mxu0 0.0
    %3095 = vmatprep.subr.mxu0 0.0
    %3096 = vmatpush1.msra.mxu0 0.0
    %3097 = vmatprep.subr.mxu0 0.0
    %3098 = vmatpush1.msra.mxu0 0.0
    %3099 = vmatprep.subr.mxu0 0.0
    %3100 = vmatpush1.msra.mxu0 0.0
    %3101 = vmatprep.subr.mxu0 0.0
    %3102 = vmatpush1.msra.mxu0 0.0
    %3103 = vmatprep.subr.mxu0 0.0
    %3104 = vmatpush1.msra.mxu0 0.0
    %3105 = vmatprep.subr.mxu0 0.0
    %3106 = vmatpush1.msra.mxu0 0.0
    %3107 = vmatprep.subr.mxu0 0.0
    %3108 = vmatpush1.msra.mxu0 0.0
    %3109 = vmatprep.mubr.f32.mxu0 0.0
    %3110 = vmatmul.mubr.f32.gmra.mrb[0].mxu0 %v3043
    %v3111 = vpop.f32.mrb[0].mxu0
    %v3112 = vadd.f32 0.0, %v3111
    %v3113 = vpop.f32.mrb[0].mxu0
    %3114 = vdwg.mxu0
    %3115 = vmatprep.subr.mxu0 0.0
    %3116 = vmatpush1.msra.mxu0 %v2538
    %3117 = vmatprep.subr.mxu0 0.0
    %3118 = vmatpush1.msra.mxu0 %v2539
    %3119 = vmatprep.subr.mxu0 0.0
    %3120 = vmatpush1.msra.mxu0 %v2540
    %3121 = vmatprep.subr.mxu0 0.0
    %3122 = vmatpush1.msra.mxu0 %v2541
    %3123 = vmatprep.subr.mxu0 0.0
    %3124 = vmatpush1.msra.mxu0 0.0
    %3125 = vmatprep.subr.mxu0 0.0
    %3126 = vmatpush1.msra.mxu0 0.0
    %3127 = vmatprep.subr.mxu0 0.0
    %3128 = vmatpush1.msra.mxu0 0.0
    %3129 = vmatprep.subr.mxu0 0.0
    %3130 = vmatpush1.msra.mxu0 0.0
    %3131 = vmatprep.subr.mxu0 0.0
    %3132 = vmatpush1.msra.mxu0 0.0
    %3133 = vmatprep.subr.mxu0 0.0
    %3134 = vmatpush1.msra.mxu0 0.0
    %3135 = vmatprep.subr.mxu0 0.0
    %3136 = vmatpush1.msra.mxu0 0.0
    %3137 = vmatprep.subr.mxu0 0.0
    %3138 = vmatpush1.msra.mxu0 0.0
    %3139 = vmatprep.subr.mxu0 0.0
    %3140 = vmatpush1.msra.mxu0 0.0
    %3141 = vmatprep.subr.mxu0 0.0
    %3142 = vmatpush1.msra.mxu0 0.0
    %3143 = vmatprep.subr.mxu0 0.0
    %3144 = vmatpush1.msra.mxu0 0.0
    %3145 = vmatprep.subr.mxu0 0.0
    %3146 = vmatpush1.msra.mxu0 0.0
    %3147 = vmatprep.subr.mxu0 0.0
    %3148 = vmatpush1.msra.mxu0 0.0
    %3149 = vmatprep.subr.mxu0 0.0
    %3150 = vmatpush1.msra.mxu0 0.0
    %3151 = vmatprep.subr.mxu0 0.0
    %3152 = vmatpush1.msra.mxu0 0.0
    %3153 = vmatprep.subr.mxu0 0.0
    %3154 = vmatpush1.msra.mxu0 0.0
    %3155 = vmatprep.subr.mxu0 0.0
    %3156 = vmatpush1.msra.mxu0 0.0
    %3157 = vmatprep.subr.mxu0 0.0
    %3158 = vmatpush1.msra.mxu0 0.0
    %3159 = vmatprep.subr.mxu0 0.0
    %3160 = vmatpush1.msra.mxu0 0.0
    %3161 = vmatprep.subr.mxu0 0.0
    %3162 = vmatpush1.msra.mxu0 0.0
    %3163 = vmatprep.subr.mxu0 0.0
    %3164 = vmatpush1.msra.mxu0 0.0
    %3165 = vmatprep.subr.mxu0 0.0
    %3166 = vmatpush1.msra.mxu0 0.0
    %3167 = vmatprep.subr.mxu0 0.0
    %3168 = vmatpush1.msra.mxu0 0.0
    %3169 = vmatprep.subr.mxu0 0.0
    %3170 = vmatpush1.msra.mxu0 0.0
    %3171 = vmatprep.subr.mxu0 0.0
    %3172 = vmatpush1.msra.mxu0 0.0
    %3173 = vmatprep.subr.mxu0 0.0
    %3174 = vmatpush1.msra.mxu0 0.0
    %3175 = vmatprep.subr.mxu0 0.0
    %3176 = vmatpush1.msra.mxu0 0.0
    %3177 = vmatprep.subr.mxu0 0.0
    %3178 = vmatpush1.msra.mxu0 0.0
    %3179 = vmatprep.mubr.f32.mxu0 0.0
    %3180 = vmatmul.mubr.f32.gmra.mrb[0].mxu0 %v3043
    %v3181 = vpop.f32.mrb[0].mxu0
    %v3182 = vadd.f32 0.0, %v3181
    %v3183 = vpop.f32.mrb[0].mxu0
    %3184 = vdwg.mxu0
    %3185 = vmatprep.subr.mxu0 0.0
    %3186 = vmatpush1.msra.mxu0 %v2542
    %3187 = vmatprep.subr.mxu0 0.0
    %3188 = vmatpush1.msra.mxu0 %v2543
    %3189 = vmatprep.subr.mxu0 0.0
    %3190 = vmatpush1.msra.mxu0 %v2544
    %3191 = vmatprep.subr.mxu0 0.0
    %3192 = vmatpush1.msra.mxu0 %v2545
    %3193 = vmatprep.subr.mxu0 0.0
    %3194 = vmatpush1.msra.mxu0 0.0
    %3195 = vmatprep.subr.mxu0 0.0
    %3196 = vmatpush1.msra.mxu0 0.0
    %3197 = vmatprep.subr.mxu0 0.0
    %3198 = vmatpush1.msra.mxu0 0.0
    %3199 = vmatprep.subr.mxu0 0.0
    %3200 = vmatpush1.msra.mxu0 0.0
    %3201 = vmatprep.subr.mxu0 0.0
    %3202 = vmatpush1.msra.mxu0 0.0
    %3203 = vmatprep.subr.mxu0 0.0
    %3204 = vmatpush1.msra.mxu0 0.0
    %3205 = vmatprep.subr.mxu0 0.0
    %3206 = vmatpush1.msra.mxu0 0.0
    %3207 = vmatprep.subr.mxu0 0.0
    %3208 = vmatpush1.msra.mxu0 0.0
    %3209 = vmatprep.subr.mxu0 0.0
    %3210 = vmatpush1.msra.mxu0 0.0
    %3211 = vmatprep.subr.mxu0 0.0
    %3212 = vmatpush1.msra.mxu0 0.0
    %3213 = vmatprep.subr.mxu0 0.0
    %3214 = vmatpush1.msra.mxu0 0.0
    %3215 = vmatprep.subr.mxu0 0.0
    %3216 = vmatpush1.msra.mxu0 0.0
    %3217 = vmatprep.subr.mxu0 0.0
    %3218 = vmatpush1.msra.mxu0 0.0
    %3219 = vmatprep.subr.mxu0 0.0
    %3220 = vmatpush1.msra.mxu0 0.0
    %3221 = vmatprep.subr.mxu0 0.0
    %3222 = vmatpush1.msra.mxu0 0.0
    %3223 = vmatprep.subr.mxu0 0.0
    %3224 = vmatpush1.msra.mxu0 0.0
    %3225 = vmatprep.subr.mxu0 0.0
    %3226 = vmatpush1.msra.mxu0 0.0
    %3227 = vmatprep.subr.mxu0 0.0
    %3228 = vmatpush1.msra.mxu0 0.0
    %3229 = vmatprep.subr.mxu0 0.0
    %3230 = vmatpush1.msra.mxu0 0.0
    %3231 = vmatprep.subr.mxu0 0.0
    %3232 = vmatpush1.msra.mxu0 0.0
    %3233 = vmatprep.subr.mxu0 0.0
    %3234 = vmatpush1.msra.mxu0 0.0
    %3235 = vmatprep.subr.mxu0 0.0
    %3236 = vmatpush1.msra.mxu0 0.0
    %3237 = vmatprep.subr.mxu0 0.0
    %3238 = vmatpush1.msra.mxu0 0.0
    %3239 = vmatprep.subr.mxu0 0.0
    %3240 = vmatpush1.msra.mxu0 0.0
    %3241 = vmatprep.subr.mxu0 0.0
    %3242 = vmatpush1.msra.mxu0 0.0
    %3243 = vmatprep.subr.mxu0 0.0
    %3244 = vmatpush1.msra.mxu0 0.0
    %3245 = vmatprep.subr.mxu0 0.0
    %3246 = vmatpush1.msra.mxu0 0.0
    %3247 = vmatprep.subr.mxu0 0.0
    %3248 = vmatpush1.msra.mxu0 0.0
    %3249 = vmatprep.mubr.f32.mxu0 0.0
    %3250 = vmatmul.mubr.f32.gmra.mrb[0].mxu0 %v3043
    %v3251 = vpop.f32.mrb[0].mxu0
    %v3252 = vadd.f32 %v2948, %v3251
    %v3253 = vpop.f32.mrb[0].mxu0
    %3254 = vdwg.mxu0
    %v3256 = vrot.slane %v3112, 6
    %v3258 = vadd.f32 %v2629, %v3256
    %v3259 = vxor.u32 %v3258, 2147483648
    %v3260 = vmul.f32 %v3259, 1.442695
    %v3261 = vpow.pop %v3260
    %v3262 = vadd.f32 %v3261, 1.0
    %v3263 = vrcp.pop %v3262
    %v3264 = vmul.f32 1.0, %v3263
    %v3266 = vrot.slane %v3182, 6
    %v3268 = vadd.f32 %v2710, %v3266
    %v3269 = vxor.u32 %v3268, 2147483648
    %v3270 = vmul.f32 %v3269, 1.442695
    %v3271 = vpow.pop %v3270
    %v3272 = vadd.f32 %v3271, 1.0
    %v3273 = vrcp.pop %v3272
    %v3274 = vmul.f32 1.0, %v3273
    %v3276 = vrot.slane %v3252, 6
    %v3278 = vmul.f32 %v3264, %v3276
    %v3279 = vadd.f32 %v2791, %v3278
    %v3280 = vtanh.pop %v3279
    %v3281 = vsub.f32 1.0, %v3274
    %v3282 = vmul.f32 %v3281, %v3280
    %v3283 = vrot.slane %v3040, 6
    %v3285 = vmul.f32 %v3274, %v3283
    %v3286 = vadd.f32 %v3282, %v3285
    %3287 = vst.msk [vmem:[#allocation2] sm:$0xc] %vm1044, %v3286
    %v3289 = vrot.slane %v3286, 2
    %v3290 = vsel %vm312, %v3289, 0
    %3292 = vmatprep.subr.mxu0 0.0
    %3293 = vmatpush1.msra.mxu0 %v2534
    %3294 = vmatprep.subr.mxu0 0.0
    %3295 = vmatpush1.msra.mxu0 %v2535
    %3296 = vmatprep.subr.mxu0 0.0
    %3297 = vmatpush1.msra.mxu0 %v2536
    %3298 = vmatprep.subr.mxu0 0.0
    %3299 = vmatpush1.msra.mxu0 %v2537
    %3300 = vmatprep.subr.mxu0 0.0
    %3301 = vmatpush1.msra.mxu0 0.0
    %3302 = vmatprep.subr.mxu0 0.0
    %3303 = vmatpush1.msra.mxu0 0.0
    %3304 = vmatprep.subr.mxu0 0.0
    %3305 = vmatpush1.msra.mxu0 0.0
    %3306 = vmatprep.subr.mxu0 0.0
    %3307 = vmatpush1.msra.mxu0 0.0
    %3308 = vmatprep.subr.mxu0 0.0
    %3309 = vmatpush1.msra.mxu0 0.0
    %3310 = vmatprep.subr.mxu0 0.0
    %3311 = vmatpush1.msra.mxu0 0.0
    %3312 = vmatprep.subr.mxu0 0.0
    %3313 = vmatpush1.msra.mxu0 0.0
    %3314 = vmatprep.subr.mxu0 0.0
    %3315 = vmatpush1.msra.mxu0 0.0
    %3316 = vmatprep.subr.mxu0 0.0
    %3317 = vmatpush1.msra.mxu0 0.0
    %3318 = vmatprep.subr.mxu0 0.0
    %3319 = vmatpush1.msra.mxu0 0.0
    %3320 = vmatprep.subr.mxu0 0.0
    %3321 = vmatpush1.msra.mxu0 0.0
    %3322 = vmatprep.subr.mxu0 0.0
    %3323 = vmatpush1.msra.mxu0 0.0
    %3324 = vmatprep.subr.mxu0 0.0
    %3325 = vmatpush1.msra.mxu0 0.0
    %3326 = vmatprep.subr.mxu0 0.0
    %3327 = vmatpush1.msra.mxu0 0.0
    %3328 = vmatprep.subr.mxu0 0.0
    %3329 = vmatpush1.msra.mxu0 0.0
    %3330 = vmatprep.subr.mxu0 0.0
    %3331 = vmatpush1.msra.mxu0 0.0
    %3332 = vmatprep.subr.mxu0 0.0
    %3333 = vmatpush1.msra.mxu0 0.0
    %3334 = vmatprep.subr.mxu0 0.0
    %3335 = vmatpush1.msra.mxu0 0.0
    %3336 = vmatprep.subr.mxu0 0.0
    %3337 = vmatpush1.msra.mxu0 0.0
    %3338 = vmatprep.subr.mxu0 0.0
    %3339 = vmatpush1.msra.mxu0 0.0
    %3340 = vmatprep.subr.mxu0 0.0
    %3341 = vmatpush1.msra.mxu0 0.0
    %3342 = vmatprep.subr.mxu0 0.0
    %3343 = vmatpush1.msra.mxu0 0.0
    %3344 = vmatprep.subr.mxu0 0.0
    %3345 = vmatpush1.msra.mxu0 0.0
    %3346 = vmatprep.subr.mxu0 0.0
    %3347 = vmatpush1.msra.mxu0 0.0
    %3348 = vmatprep.subr.mxu0 0.0
    %3349 = vmatpush1.msra.mxu0 0.0
    %3350 = vmatprep.subr.mxu0 0.0
    %3351 = vmatpush1.msra.mxu0 0.0
    %3352 = vmatprep.subr.mxu0 0.0
    %3353 = vmatpush1.msra.mxu0 0.0
    %3354 = vmatprep.subr.mxu0 0.0
    %3355 = vmatpush1.msra.mxu0 0.0
    %3356 = vmatprep.mubr.f32.mxu0 0.0
    %3357 = vmatmul.mubr.f32.gmra.mrb[0].mxu0 %v3290
    %v3358 = vpop.f32.mrb[0].mxu0
    %v3359 = vadd.f32 0.0, %v3358
    %v3360 = vpop.f32.mrb[0].mxu0
    %3361 = vdwg.mxu0
    %3362 = vmatprep.subr.mxu0 0.0
    %3363 = vmatpush1.msra.mxu0 %v2538
    %3364 = vmatprep.subr.mxu0 0.0
    %3365 = vmatpush1.msra.mxu0 %v2539
    %3366 = vmatprep.subr.mxu0 0.0
    %3367 = vmatpush1.msra.mxu0 %v2540
    %3368 = vmatprep.subr.mxu0 0.0
    %3369 = vmatpush1.msra.mxu0 %v2541
    %3370 = vmatprep.subr.mxu0 0.0
    %3371 = vmatpush1.msra.mxu0 0.0
    %3372 = vmatprep.subr.mxu0 0.0
    %3373 = vmatpush1.msra.mxu0 0.0
    %3374 = vmatprep.subr.mxu0 0.0
    %3375 = vmatpush1.msra.mxu0 0.0
    %3376 = vmatprep.subr.mxu0 0.0
    %3377 = vmatpush1.msra.mxu0 0.0
    %3378 = vmatprep.subr.mxu0 0.0
    %3379 = vmatpush1.msra.mxu0 0.0
    %3380 = vmatprep.subr.mxu0 0.0
    %3381 = vmatpush1.msra.mxu0 0.0
    %3382 = vmatprep.subr.mxu0 0.0
    %3383 = vmatpush1.msra.mxu0 0.0
    %3384 = vmatprep.subr.mxu0 0.0
    %3385 = vmatpush1.msra.mxu0 0.0
    %3386 = vmatprep.subr.mxu0 0.0
    %3387 = vmatpush1.msra.mxu0 0.0
    %3388 = vmatprep.subr.mxu0 0.0
    %3389 = vmatpush1.msra.mxu0 0.0
    %3390 = vmatprep.subr.mxu0 0.0
    %3391 = vmatpush1.msra.mxu0 0.0
    %3392 = vmatprep.subr.mxu0 0.0
    %3393 = vmatpush1.msra.mxu0 0.0
    %3394 = vmatprep.subr.mxu0 0.0
    %3395 = vmatpush1.msra.mxu0 0.0
    %3396 = vmatprep.subr.mxu0 0.0
    %3397 = vmatpush1.msra.mxu0 0.0
    %3398 = vmatprep.subr.mxu0 0.0
    %3399 = vmatpush1.msra.mxu0 0.0
    %3400 = vmatprep.subr.mxu0 0.0
    %3401 = vmatpush1.msra.mxu0 0.0
    %3402 = vmatprep.subr.mxu0 0.0
    %3403 = vmatpush1.msra.mxu0 0.0
    %3404 = vmatprep.subr.mxu0 0.0
    %3405 = vmatpush1.msra.mxu0 0.0
    %3406 = vmatprep.subr.mxu0 0.0
    %3407 = vmatpush1.msra.mxu0 0.0
    %3408 = vmatprep.subr.mxu0 0.0
    %3409 = vmatpush1.msra.mxu0 0.0
    %3410 = vmatprep.subr.mxu0 0.0
    %3411 = vmatpush1.msra.mxu0 0.0
    %3412 = vmatprep.subr.mxu0 0.0
    %3413 = vmatpush1.msra.mxu0 0.0
    %3414 = vmatprep.subr.mxu0 0.0
    %3415 = vmatpush1.msra.mxu0 0.0
    %3416 = vmatprep.subr.mxu0 0.0
    %3417 = vmatpush1.msra.mxu0 0.0
    %3418 = vmatprep.subr.mxu0 0.0
    %3419 = vmatpush1.msra.mxu0 0.0
    %3420 = vmatprep.subr.mxu0 0.0
    %3421 = vmatpush1.msra.mxu0 0.0
    %3422 = vmatprep.subr.mxu0 0.0
    %3423 = vmatpush1.msra.mxu0 0.0
    %3424 = vmatprep.subr.mxu0 0.0
    %3425 = vmatpush1.msra.mxu0 0.0
    %3426 = vmatprep.mubr.f32.mxu0 0.0
    %3427 = vmatmul.mubr.f32.gmra.mrb[0].mxu0 %v3290
    %v3428 = vpop.f32.mrb[0].mxu0
    %v3429 = vadd.f32 0.0, %v3428
    %v3430 = vpop.f32.mrb[0].mxu0
    %3431 = vdwg.mxu0
    %3432 = vmatprep.subr.mxu0 0.0
    %3433 = vmatpush1.msra.mxu0 %v2542
    %3434 = vmatprep.subr.mxu0 0.0
    %3435 = vmatpush1.msra.mxu0 %v2543
    %3436 = vmatprep.subr.mxu0 0.0
    %3437 = vmatpush1.msra.mxu0 %v2544
    %3438 = vmatprep.subr.mxu0 0.0
    %3439 = vmatpush1.msra.mxu0 %v2545
    %3440 = vmatprep.subr.mxu0 0.0
    %3441 = vmatpush1.msra.mxu0 0.0
    %3442 = vmatprep.subr.mxu0 0.0
    %3443 = vmatpush1.msra.mxu0 0.0
    %3444 = vmatprep.subr.mxu0 0.0
    %3445 = vmatpush1.msra.mxu0 0.0
    %3446 = vmatprep.subr.mxu0 0.0
    %3447 = vmatpush1.msra.mxu0 0.0
    %3448 = vmatprep.subr.mxu0 0.0
    %3449 = vmatpush1.msra.mxu0 0.0
    %3450 = vmatprep.subr.mxu0 0.0
    %3451 = vmatpush1.msra.mxu0 0.0
    %3452 = vmatprep.subr.mxu0 0.0
    %3453 = vmatpush1.msra.mxu0 0.0
    %3454 = vmatprep.subr.mxu0 0.0
    %3455 = vmatpush1.msra.mxu0 0.0
    %3456 = vmatprep.subr.mxu0 0.0
    %3457 = vmatpush1.msra.mxu0 0.0
    %3458 = vmatprep.subr.mxu0 0.0
    %3459 = vmatpush1.msra.mxu0 0.0
    %3460 = vmatprep.subr.mxu0 0.0
    %3461 = vmatpush1.msra.mxu0 0.0
    %3462 = vmatprep.subr.mxu0 0.0
    %3463 = vmatpush1.msra.mxu0 0.0
    %3464 = vmatprep.subr.mxu0 0.0
    %3465 = vmatpush1.msra.mxu0 0.0
    %3466 = vmatprep.subr.mxu0 0.0
    %3467 = vmatpush1.msra.mxu0 0.0
    %3468 = vmatprep.subr.mxu0 0.0
    %3469 = vmatpush1.msra.mxu0 0.0
    %3470 = vmatprep.subr.mxu0 0.0
    %3471 = vmatpush1.msra.mxu0 0.0
    %3472 = vmatprep.subr.mxu0 0.0
    %3473 = vmatpush1.msra.mxu0 0.0
    %3474 = vmatprep.subr.mxu0 0.0
    %3475 = vmatpush1.msra.mxu0 0.0
    %3476 = vmatprep.subr.mxu0 0.0
    %3477 = vmatpush1.msra.mxu0 0.0
    %3478 = vmatprep.subr.mxu0 0.0
    %3479 = vmatpush1.msra.mxu0 0.0
    %3480 = vmatprep.subr.mxu0 0.0
    %3481 = vmatpush1.msra.mxu0 0.0
    %3482 = vmatprep.subr.mxu0 0.0
    %3483 = vmatpush1.msra.mxu0 0.0
    %3484 = vmatprep.subr.mxu0 0.0
    %3485 = vmatpush1.msra.mxu0 0.0
    %3486 = vmatprep.subr.mxu0 0.0
    %3487 = vmatpush1.msra.mxu0 0.0
    %3488 = vmatprep.subr.mxu0 0.0
    %3489 = vmatpush1.msra.mxu0 0.0
    %3490 = vmatprep.subr.mxu0 0.0
    %3491 = vmatpush1.msra.mxu0 0.0
    %3492 = vmatprep.subr.mxu0 0.0
    %3493 = vmatpush1.msra.mxu0 0.0
    %3494 = vmatprep.subr.mxu0 0.0
    %3495 = vmatpush1.msra.mxu0 0.0
    %3496 = vmatprep.mubr.f32.mxu0 0.0
    %3497 = vmatmul.mubr.f32.gmra.mrb[0].mxu0 %v3290
    %v3498 = vpop.f32.mrb[0].mxu0
    %v3499 = vadd.f32 %v2948, %v3498
    %v3500 = vpop.f32.mrb[0].mxu0
    %3501 = vdwg.mxu0
    %v3503 = vrot.slane %v3359, 4
    %v3505 = vadd.f32 %v2629, %v3503
    %v3506 = vxor.u32 %v3505, 2147483648
    %v3507 = vmul.f32 %v3506, 1.442695
    %v3508 = vpow.pop %v3507
    %v3509 = vadd.f32 %v3508, 1.0
    %v3510 = vrcp.pop %v3509
    %v3511 = vmul.f32 1.0, %v3510
    %v3513 = vrot.slane %v3429, 4
    %v3515 = vadd.f32 %v2710, %v3513
    %v3516 = vxor.u32 %v3515, 2147483648
    %v3517 = vmul.f32 %v3516, 1.442695
    %v3518 = vpow.pop %v3517
    %v3519 = vadd.f32 %v3518, 1.0
    %v3520 = vrcp.pop %v3519
    %v3521 = vmul.f32 1.0, %v3520
    %v3523 = vrot.slane %v3499, 4
    %v3525 = vmul.f32 %v3511, %v3523
    %v3526 = vadd.f32 %v2791, %v3525
    %v3527 = vtanh.pop %v3526
    %v3528 = vsub.f32 1.0, %v3521
    %v3529 = vmul.f32 %v3528, %v3527
    %v3530 = vrot.slane %v3286, 6
    %v3532 = vmul.f32 %v3521, %v3530
    %v3533 = vadd.f32 %v3529, %v3532
    %3534 = vst.msk [vmem:[#allocation2] sm:$0x30] %vm1292, %v3533
    %v3536 = vrot.slane %v3533, 4
    %v3537 = vsel %vm312, %v3536, 0
    %3539 = vmatprep.subr.mxu0 0.0
    %3540 = vmatpush1.msra.mxu0 %v2534
    %3541 = vmatprep.subr.mxu0 0.0
    %3542 = vmatpush1.msra.mxu0 %v2535
    %3543 = vmatprep.subr.mxu0 0.0
    %3544 = vmatpush1.msra.mxu0 %v2536
    %3545 = vmatprep.subr.mxu0 0.0
    %3546 = vmatpush1.msra.mxu0 %v2537
    %3547 = vmatprep.subr.mxu0 0.0
    %3548 = vmatpush1.msra.mxu0 0.0
    %3549 = vmatprep.subr.mxu0 0.0
    %3550 = vmatpush1.msra.mxu0 0.0
    %3551 = vmatprep.subr.mxu0 0.0
    %3552 = vmatpush1.msra.mxu0 0.0
    %3553 = vmatprep.subr.mxu0 0.0
    %3554 = vmatpush1.msra.mxu0 0.0
    %3555 = vmatprep.subr.mxu0 0.0
    %3556 = vmatpush1.msra.mxu0 0.0
    %3557 = vmatprep.subr.mxu0 0.0
    %3558 = vmatpush1.msra.mxu0 0.0
    %3559 = vmatprep.subr.mxu0 0.0
    %3560 = vmatpush1.msra.mxu0 0.0
    %3561 = vmatprep.subr.mxu0 0.0
    %3562 = vmatpush1.msra.mxu0 0.0
    %3563 = vmatprep.subr.mxu0 0.0
    %3564 = vmatpush1.msra.mxu0 0.0
    %3565 = vmatprep.subr.mxu0 0.0
    %3566 = vmatpush1.msra.mxu0 0.0
    %3567 = vmatprep.subr.mxu0 0.0
    %3568 = vmatpush1.msra.mxu0 0.0
    %3569 = vmatprep.subr.mxu0 0.0
    %3570 = vmatpush1.msra.mxu0 0.0
    %3571 = vmatprep.subr.mxu0 0.0
    %3572 = vmatpush1.msra.mxu0 0.0
    %3573 = vmatprep.subr.mxu0 0.0
    %3574 = vmatpush1.msra.mxu0 0.0
    %3575 = vmatprep.subr.mxu0 0.0
    %3576 = vmatpush1.msra.mxu0 0.0
    %3577 = vmatprep.subr.mxu0 0.0
    %3578 = vmatpush1.msra.mxu0 0.0
    %3579 = vmatprep.subr.mxu0 0.0
    %3580 = vmatpush1.msra.mxu0 0.0
    %3581 = vmatprep.subr.mxu0 0.0
    %3582 = vmatpush1.msra.mxu0 0.0
    %3583 = vmatprep.subr.mxu0 0.0
    %3584 = vmatpush1.msra.mxu0 0.0
    %3585 = vmatprep.subr.mxu0 0.0
    %3586 = vmatpush1.msra.mxu0 0.0
    %3587 = vmatprep.subr.mxu0 0.0
    %3588 = vmatpush1.msra.mxu0 0.0
    %3589 = vmatprep.subr.mxu0 0.0
    %3590 = vmatpush1.msra.mxu0 0.0
    %3591 = vmatprep.subr.mxu0 0.0
    %3592 = vmatpush1.msra.mxu0 0.0
    %3593 = vmatprep.subr.mxu0 0.0
    %3594 = vmatpush1.msra.mxu0 0.0
    %3595 = vmatprep.subr.mxu0 0.0
    %3596 = vmatpush1.msra.mxu0 0.0
    %3597 = vmatprep.subr.mxu0 0.0
    %3598 = vmatpush1.msra.mxu0 0.0
    %3599 = vmatprep.subr.mxu0 0.0
    %3600 = vmatpush1.msra.mxu0 0.0
    %3601 = vmatprep.subr.mxu0 0.0
    %3602 = vmatpush1.msra.mxu0 0.0
    %3603 = vmatprep.mubr.f32.mxu0 0.0
    %3604 = vmatmul.mubr.f32.gmra.mrb[0].mxu0 %v3537
    %v3605 = vpop.f32.mrb[0].mxu0
    %v3606 = vadd.f32 0.0, %v3605
    %v3607 = vpop.f32.mrb[0].mxu0
    %3608 = vdwg.mxu0
    %3609 = vmatprep.subr.mxu0 0.0
    %3610 = vmatpush1.msra.mxu0 %v2538
    %3611 = vmatprep.subr.mxu0 0.0
    %3612 = vmatpush1.msra.mxu0 %v2539
    %3613 = vmatprep.subr.mxu0 0.0
    %3614 = vmatpush1.msra.mxu0 %v2540
    %3615 = vmatprep.subr.mxu0 0.0
    %3616 = vmatpush1.msra.mxu0 %v2541
    %3617 = vmatprep.subr.mxu0 0.0
    %3618 = vmatpush1.msra.mxu0 0.0
    %3619 = vmatprep.subr.mxu0 0.0
    %3620 = vmatpush1.msra.mxu0 0.0
    %3621 = vmatprep.subr.mxu0 0.0
    %3622 = vmatpush1.msra.mxu0 0.0
    %3623 = vmatprep.subr.mxu0 0.0
    %3624 = vmatpush1.msra.mxu0 0.0
    %3625 = vmatprep.subr.mxu0 0.0
    %3626 = vmatpush1.msra.mxu0 0.0
    %3627 = vmatprep.subr.mxu0 0.0
    %3628 = vmatpush1.msra.mxu0 0.0
    %3629 = vmatprep.subr.mxu0 0.0
    %3630 = vmatpush1.msra.mxu0 0.0
    %3631 = vmatprep.subr.mxu0 0.0
    %3632 = vmatpush1.msra.mxu0 0.0
    %3633 = vmatprep.subr.mxu0 0.0
    %3634 = vmatpush1.msra.mxu0 0.0
    %3635 = vmatprep.subr.mxu0 0.0
    %3636 = vmatpush1.msra.mxu0 0.0
    %3637 = vmatprep.subr.mxu0 0.0
    %3638 = vmatpush1.msra.mxu0 0.0
    %3639 = vmatprep.subr.mxu0 0.0
    %3640 = vmatpush1.msra.mxu0 0.0
    %3641 = vmatprep.subr.mxu0 0.0
    %3642 = vmatpush1.msra.mxu0 0.0
    %3643 = vmatprep.subr.mxu0 0.0
    %3644 = vmatpush1.msra.mxu0 0.0
    %3645 = vmatprep.subr.mxu0 0.0
    %3646 = vmatpush1.msra.mxu0 0.0
    %3647 = vmatprep.subr.mxu0 0.0
    %3648 = vmatpush1.msra.mxu0 0.0
    %3649 = vmatprep.subr.mxu0 0.0
    %3650 = vmatpush1.msra.mxu0 0.0
    %3651 = vmatprep.subr.mxu0 0.0
    %3652 = vmatpush1.msra.mxu0 0.0
    %3653 = vmatprep.subr.mxu0 0.0
    %3654 = vmatpush1.msra.mxu0 0.0
    %3655 = vmatprep.subr.mxu0 0.0
    %3656 = vmatpush1.msra.mxu0 0.0
    %3657 = vmatprep.subr.mxu0 0.0
    %3658 = vmatpush1.msra.mxu0 0.0
    %3659 = vmatprep.subr.mxu0 0.0
    %3660 = vmatpush1.msra.mxu0 0.0
    %3661 = vmatprep.subr.mxu0 0.0
    %3662 = vmatpush1.msra.mxu0 0.0
    %3663 = vmatprep.subr.mxu0 0.0
    %3664 = vmatpush1.msra.mxu0 0.0
    %3665 = vmatprep.subr.mxu0 0.0
    %3666 = vmatpush1.msra.mxu0 0.0
    %3667 = vmatprep.subr.mxu0 0.0
    %3668 = vmatpush1.msra.mxu0 0.0
    %3669 = vmatprep.subr.mxu0 0.0
    %3670 = vmatpush1.msra.mxu0 0.0
    %3671 = vmatprep.subr.mxu0 0.0
    %3672 = vmatpush1.msra.mxu0 0.0
    %3673 = vmatprep.mubr.f32.mxu0 0.0
    %3674 = vmatmul.mubr.f32.gmra.mrb[0].mxu0 %v3537
    %v3675 = vpop.f32.mrb[0].mxu0
    %v3676 = vadd.f32 0.0, %v3675
    %v3677 = vpop.f32.mrb[0].mxu0
    %3678 = vdwg.mxu0
    %3679 = vmatprep.subr.mxu0 0.0
    %3680 = vmatpush1.msra.mxu0 %v2542
    %3681 = vmatprep.subr.mxu0 0.0
    %3682 = vmatpush1.msra.mxu0 %v2543
    %3683 = vmatprep.subr.mxu0 0.0
    %3684 = vmatpush1.msra.mxu0 %v2544
    %3685 = vmatprep.subr.mxu0 0.0
    %3686 = vmatpush1.msra.mxu0 %v2545
    %3687 = vmatprep.subr.mxu0 0.0
    %3688 = vmatpush1.msra.mxu0 0.0
    %3689 = vmatprep.subr.mxu0 0.0
    %3690 = vmatpush1.msra.mxu0 0.0
    %3691 = vmatprep.subr.mxu0 0.0
    %3692 = vmatpush1.msra.mxu0 0.0
    %3693 = vmatprep.subr.mxu0 0.0
    %3694 = vmatpush1.msra.mxu0 0.0
    %3695 = vmatprep.subr.mxu0 0.0
    %3696 = vmatpush1.msra.mxu0 0.0
    %3697 = vmatprep.subr.mxu0 0.0
    %3698 = vmatpush1.msra.mxu0 0.0
    %3699 = vmatprep.subr.mxu0 0.0
    %3700 = vmatpush1.msra.mxu0 0.0
    %3701 = vmatprep.subr.mxu0 0.0
    %3702 = vmatpush1.msra.mxu0 0.0
    %3703 = vmatprep.subr.mxu0 0.0
    %3704 = vmatpush1.msra.mxu0 0.0
    %3705 = vmatprep.subr.mxu0 0.0
    %3706 = vmatpush1.msra.mxu0 0.0
    %3707 = vmatprep.subr.mxu0 0.0
    %3708 = vmatpush1.msra.mxu0 0.0
    %3709 = vmatprep.subr.mxu0 0.0
    %3710 = vmatpush1.msra.mxu0 0.0
    %3711 = vmatprep.subr.mxu0 0.0
    %3712 = vmatpush1.msra.mxu0 0.0
    %3713 = vmatprep.subr.mxu0 0.0
    %3714 = vmatpush1.msra.mxu0 0.0
    %3715 = vmatprep.subr.mxu0 0.0
    %3716 = vmatpush1.msra.mxu0 0.0
    %3717 = vmatprep.subr.mxu0 0.0
    %3718 = vmatpush1.msra.mxu0 0.0
    %3719 = vmatprep.subr.mxu0 0.0
    %3720 = vmatpush1.msra.mxu0 0.0
    %3721 = vmatprep.subr.mxu0 0.0
    %3722 = vmatpush1.msra.mxu0 0.0
    %3723 = vmatprep.subr.mxu0 0.0
    %3724 = vmatpush1.msra.mxu0 0.0
    %3725 = vmatprep.subr.mxu0 0.0
    %3726 = vmatpush1.msra.mxu0 0.0
    %3727 = vmatprep.subr.mxu0 0.0
    %3728 = vmatpush1.msra.mxu0 0.0
    %3729 = vmatprep.subr.mxu0 0.0
    %3730 = vmatpush1.msra.mxu0 0.0
    %3731 = vmatprep.subr.mxu0 0.0
    %3732 = vmatpush1.msra.mxu0 0.0
    %3733 = vmatprep.subr.mxu0 0.0
    %3734 = vmatpush1.msra.mxu0 0.0
    %3735 = vmatprep.subr.mxu0 0.0
    %3736 = vmatpush1.msra.mxu0 0.0
    %3737 = vmatprep.subr.mxu0 0.0
    %3738 = vmatpush1.msra.mxu0 0.0
    %3739 = vmatprep.subr.mxu0 0.0
    %3740 = vmatpush1.msra.mxu0 0.0
    %3741 = vmatprep.subr.mxu0 0.0
    %3742 = vmatpush1.msra.mxu0 0.0
    %3743 = vmatprep.mubr.f32.mxu0 0.0
    %3744 = vmatmul.mubr.f32.gmra.mrb[0].mxu0 %v3537
    %v3745 = vpop.f32.mrb[0].mxu0
    %v3746 = vadd.f32 %v2948, %v3745
    %v3747 = vpop.f32.mrb[0].mxu0
    %3748 = vdwg.mxu0
    %v3750 = vrot.slane %v3606, 2
    %v3752 = vadd.f32 %v2629, %v3750
    %v3753 = vxor.u32 %v3752, 2147483648
    %v3754 = vmul.f32 %v3753, 1.442695
    %v3755 = vpow.pop %v3754
    %v3756 = vadd.f32 %v3755, 1.0
    %v3757 = vrcp.pop %v3756
    %v3758 = vmul.f32 1.0, %v3757
    %v3760 = vrot.slane %v3676, 2
    %v3762 = vadd.f32 %v2710, %v3760
    %v3763 = vxor.u32 %v3762, 2147483648
    %v3764 = vmul.f32 %v3763, 1.442695
    %v3765 = vpow.pop %v3764
    %v3766 = vadd.f32 %v3765, 1.0
    %v3767 = vrcp.pop %v3766
    %v3768 = vmul.f32 1.0, %v3767
    %v3770 = vrot.slane %v3746, 2
    %v3772 = vmul.f32 %v3758, %v3770
    %v3773 = vadd.f32 %v2791, %v3772
    %v3774 = vtanh.pop %v3773
    %v3775 = vsub.f32 1.0, %v3768
    %v3776 = vmul.f32 %v3775, %v3774
    %v3777 = vrot.slane %v3533, 6
    %v3779 = vmul.f32 %v3768, %v3777
    %v3780 = vadd.f32 %v3776, %v3779
    %3781 = vst.msk [vmem:[#allocation2] sm:$0xc0] %vm1540, %v3780
    %v3783 = vrot.slane %v3780, 6
    %v3784 = vsel %vm312, %v3783, 0
    %3786 = vmatprep.subr.mxu0 0.0
    %3787 = vmatpush1.msra.mxu0 %v2534
    %3788 = vmatprep.subr.mxu0 0.0
    %3789 = vmatpush1.msra.mxu0 %v2535
    %3790 = vmatprep.subr.mxu0 0.0
    %3791 = vmatpush1.msra.mxu0 %v2536
    %3792 = vmatprep.subr.mxu0 0.0
    %3793 = vmatpush1.msra.mxu0 %v2537
    %3794 = vmatprep.subr.mxu0 0.0
    %3795 = vmatpush1.msra.mxu0 0.0
    %3796 = vmatprep.subr.mxu0 0.0
    %3797 = vmatpush1.msra.mxu0 0.0
    %3798 = vmatprep.subr.mxu0 0.0
    %3799 = vmatpush1.msra.mxu0 0.0
    %3800 = vmatprep.subr.mxu0 0.0
    %3801 = vmatpush1.msra.mxu0 0.0
    %3802 = vmatprep.subr.mxu0 0.0
    %3803 = vmatpush1.msra.mxu0 0.0
    %3804 = vmatprep.subr.mxu0 0.0
    %3805 = vmatpush1.msra.mxu0 0.0
    %3806 = vmatprep.subr.mxu0 0.0
    %3807 = vmatpush1.msra.mxu0 0.0
    %3808 = vmatprep.subr.mxu0 0.0
    %3809 = vmatpush1.msra.mxu0 0.0
    %3810 = vmatprep.subr.mxu0 0.0
    %3811 = vmatpush1.msra.mxu0 0.0
    %3812 = vmatprep.subr.mxu0 0.0
    %3813 = vmatpush1.msra.mxu0 0.0
    %3814 = vmatprep.subr.mxu0 0.0
    %3815 = vmatpush1.msra.mxu0 0.0
    %3816 = vmatprep.subr.mxu0 0.0
    %3817 = vmatpush1.msra.mxu0 0.0
    %3818 = vmatprep.subr.mxu0 0.0
    %3819 = vmatpush1.msra.mxu0 0.0
    %3820 = vmatprep.subr.mxu0 0.0
    %3821 = vmatpush1.msra.mxu0 0.0
    %3822 = vmatprep.subr.mxu0 0.0
    %3823 = vmatpush1.msra.mxu0 0.0
    %3824 = vmatprep.subr.mxu0 0.0
    %3825 = vmatpush1.msra.mxu0 0.0
    %3826 = vmatprep.subr.mxu0 0.0
    %3827 = vmatpush1.msra.mxu0 0.0
    %3828 = vmatprep.subr.mxu0 0.0
    %3829 = vmatpush1.msra.mxu0 0.0
    %3830 = vmatprep.subr.mxu0 0.0
    %3831 = vmatpush1.msra.mxu0 0.0
    %3832 = vmatprep.subr.mxu0 0.0
    %3833 = vmatpush1.msra.mxu0 0.0
    %3834 = vmatprep.subr.mxu0 0.0
    %3835 = vmatpush1.msra.mxu0 0.0
    %3836 = vmatprep.subr.mxu0 0.0
    %3837 = vmatpush1.msra.mxu0 0.0
    %3838 = vmatprep.subr.mxu0 0.0
    %3839 = vmatpush1.msra.mxu0 0.0
    %3840 = vmatprep.subr.mxu0 0.0
    %3841 = vmatpush1.msra.mxu0 0.0
    %3842 = vmatprep.subr.mxu0 0.0
    %3843 = vmatpush1.msra.mxu0 0.0
    %3844 = vmatprep.subr.mxu0 0.0
    %3845 = vmatpush1.msra.mxu0 0.0
    %3846 = vmatprep.subr.mxu0 0.0
    %3847 = vmatpush1.msra.mxu0 0.0
    %3848 = vmatprep.subr.mxu0 0.0
    %3849 = vmatpush1.msra.mxu0 0.0
    %3850 = vmatprep.mubr.f32.mxu0 0.0
    %3851 = vmatmul.mubr.f32.gmra.mrb[0].mxu0 %v3784
    %v3852 = vpop.f32.mrb[0].mxu0
    %v3853 = vadd.f32 0.0, %v3852
    %v3854 = vpop.f32.mrb[0].mxu0
    %3855 = vdwg.mxu0
    %3856 = vmatprep.subr.mxu0 0.0
    %3857 = vmatpush1.msra.mxu0 %v2538
    %3858 = vmatprep.subr.mxu0 0.0
    %3859 = vmatpush1.msra.mxu0 %v2539
    %3860 = vmatprep.subr.mxu0 0.0
    %3861 = vmatpush1.msra.mxu0 %v2540
    %3862 = vmatprep.subr.mxu0 0.0
    %3863 = vmatpush1.msra.mxu0 %v2541
    %3864 = vmatprep.subr.mxu0 0.0
    %3865 = vmatpush1.msra.mxu0 0.0
    %3866 = vmatprep.subr.mxu0 0.0
    %3867 = vmatpush1.msra.mxu0 0.0
    %3868 = vmatprep.subr.mxu0 0.0
    %3869 = vmatpush1.msra.mxu0 0.0
    %3870 = vmatprep.subr.mxu0 0.0
    %3871 = vmatpush1.msra.mxu0 0.0
    %3872 = vmatprep.subr.mxu0 0.0
    %3873 = vmatpush1.msra.mxu0 0.0
    %3874 = vmatprep.subr.mxu0 0.0
    %3875 = vmatpush1.msra.mxu0 0.0
    %3876 = vmatprep.subr.mxu0 0.0
    %3877 = vmatpush1.msra.mxu0 0.0
    %3878 = vmatprep.subr.mxu0 0.0
    %3879 = vmatpush1.msra.mxu0 0.0
    %3880 = vmatprep.subr.mxu0 0.0
    %3881 = vmatpush1.msra.mxu0 0.0
    %3882 = vmatprep.subr.mxu0 0.0
    %3883 = vmatpush1.msra.mxu0 0.0
    %3884 = vmatprep.subr.mxu0 0.0
    %3885 = vmatpush1.msra.mxu0 0.0
    %3886 = vmatprep.subr.mxu0 0.0
    %3887 = vmatpush1.msra.mxu0 0.0
    %3888 = vmatprep.subr.mxu0 0.0
    %3889 = vmatpush1.msra.mxu0 0.0
    %3890 = vmatprep.subr.mxu0 0.0
    %3891 = vmatpush1.msra.mxu0 0.0
    %3892 = vmatprep.subr.mxu0 0.0
    %3893 = vmatpush1.msra.mxu0 0.0
    %3894 = vmatprep.subr.mxu0 0.0
    %3895 = vmatpush1.msra.mxu0 0.0
    %3896 = vmatprep.subr.mxu0 0.0
    %3897 = vmatpush1.msra.mxu0 0.0
    %3898 = vmatprep.subr.mxu0 0.0
    %3899 = vmatpush1.msra.mxu0 0.0
    %3900 = vmatprep.subr.mxu0 0.0
    %3901 = vmatpush1.msra.mxu0 0.0
    %3902 = vmatprep.subr.mxu0 0.0
    %3903 = vmatpush1.msra.mxu0 0.0
    %3904 = vmatprep.subr.mxu0 0.0
    %3905 = vmatpush1.msra.mxu0 0.0
    %3906 = vmatprep.subr.mxu0 0.0
    %3907 = vmatpush1.msra.mxu0 0.0
    %3908 = vmatprep.subr.mxu0 0.0
    %3909 = vmatpush1.msra.mxu0 0.0
    %3910 = vmatprep.subr.mxu0 0.0
    %3911 = vmatpush1.msra.mxu0 0.0
    %3912 = vmatprep.subr.mxu0 0.0
    %3913 = vmatpush1.msra.mxu0 0.0
    %3914 = vmatprep.subr.mxu0 0.0
    %3915 = vmatpush1.msra.mxu0 0.0
    %3916 = vmatprep.subr.mxu0 0.0
    %3917 = vmatpush1.msra.mxu0 0.0
    %3918 = vmatprep.subr.mxu0 0.0
    %3919 = vmatpush1.msra.mxu0 0.0
    %3920 = vmatprep.mubr.f32.mxu0 0.0
    %3921 = vmatmul.mubr.f32.gmra.mrb[0].mxu0 %v3784
    %v3922 = vpop.f32.mrb[0].mxu0
    %v3923 = vadd.f32 0.0, %v3922
    %v3924 = vpop.f32.mrb[0].mxu0
    %3925 = vdwg.mxu0
    %3926 = vmatprep.subr.mxu0 0.0
    %3927 = vmatpush1.msra.mxu0 %v2542
    %3928 = vmatprep.subr.mxu0 0.0
    %3929 = vmatpush1.msra.mxu0 %v2543
    %3930 = vmatprep.subr.mxu0 0.0
    %3931 = vmatpush1.msra.mxu0 %v2544
    %3932 = vmatprep.subr.mxu0 0.0
    %3933 = vmatpush1.msra.mxu0 %v2545
    %3934 = vmatprep.subr.mxu0 0.0
    %3935 = vmatpush1.msra.mxu0 0.0
    %3936 = vmatprep.subr.mxu0 0.0
    %3937 = vmatpush1.msra.mxu0 0.0
    %3938 = vmatprep.subr.mxu0 0.0
    %3939 = vmatpush1.msra.mxu0 0.0
    %3940 = vmatprep.subr.mxu0 0.0
    %3941 = vmatpush1.msra.mxu0 0.0
    %3942 = vmatprep.subr.mxu0 0.0
    %3943 = vmatpush1.msra.mxu0 0.0
    %3944 = vmatprep.subr.mxu0 0.0
    %3945 = vmatpush1.msra.mxu0 0.0
    %3946 = vmatprep.subr.mxu0 0.0
    %3947 = vmatpush1.msra.mxu0 0.0
    %3948 = vmatprep.subr.mxu0 0.0
    %3949 = vmatpush1.msra.mxu0 0.0
    %3950 = vmatprep.subr.mxu0 0.0
    %3951 = vmatpush1.msra.mxu0 0.0
    %3952 = vmatprep.subr.mxu0 0.0
    %3953 = vmatpush1.msra.mxu0 0.0
    %3954 = vmatprep.subr.mxu0 0.0
    %3955 = vmatpush1.msra.mxu0 0.0
    %3956 = vmatprep.subr.mxu0 0.0
    %3957 = vmatpush1.msra.mxu0 0.0
    %3958 = vmatprep.subr.mxu0 0.0
    %3959 = vmatpush1.msra.mxu0 0.0
    %3960 = vmatprep.subr.mxu0 0.0
    %3961 = vmatpush1.msra.mxu0 0.0
    %3962 = vmatprep.subr.mxu0 0.0
    %3963 = vmatpush1.msra.mxu0 0.0
    %3964 = vmatprep.subr.mxu0 0.0
    %3965 = vmatpush1.msra.mxu0 0.0
    %3966 = vmatprep.subr.mxu0 0.0
    %3967 = vmatpush1.msra.mxu0 0.0
    %3968 = vmatprep.subr.mxu0 0.0
    %3969 = vmatpush1.msra.mxu0 0.0
    %3970 = vmatprep.subr.mxu0 0.0
    %3971 = vmatpush1.msra.mxu0 0.0
    %3972 = vmatprep.subr.mxu0 0.0
    %3973 = vmatpush1.msra.mxu0 0.0
    %3974 = vmatprep.subr.mxu0 0.0
    %3975 = vmatpush1.msra.mxu0 0.0
    %3976 = vmatprep.subr.mxu0 0.0
    %3977 = vmatpush1.msra.mxu0 0.0
    %3978 = vmatprep.subr.mxu0 0.0
    %3979 = vmatpush1.msra.mxu0 0.0
    %3980 = vmatprep.subr.mxu0 0.0
    %3981 = vmatpush1.msra.mxu0 0.0
    %3982 = vmatprep.subr.mxu0 0.0
    %3983 = vmatpush1.msra.mxu0 0.0
    %3984 = vmatprep.subr.mxu0 0.0
    %3985 = vmatpush1.msra.mxu0 0.0
    %3986 = vmatprep.subr.mxu0 0.0
    %3987 = vmatpush1.msra.mxu0 0.0
    %3988 = vmatprep.subr.mxu0 0.0
    %3989 = vmatpush1.msra.mxu0 0.0
    %3990 = vmatprep.mubr.f32.mxu0 0.0
    %3991 = vmatmul.mubr.f32.gmra.mrb[0].mxu0 %v3784
    %v3992 = vpop.f32.mrb[0].mxu0
    %v3993 = vadd.f32 %v2948, %v3992
    %v3994 = vpop.f32.mrb[0].mxu0
    %3995 = vdwg.mxu0
    %v3996 = vadd.f32 %v2634, %v3853
    %v3997 = vxor.u32 %v3996, 2147483648
    %v3998 = vmul.f32 %v3997, 1.442695
    %v3999 = vpow.pop %v3998
    %v4000 = vadd.f32 %v3999, 1.0
    %v4001 = vrcp.pop %v4000
    %v4002 = vmul.f32 1.0, %v4001
    %v4003 = vadd.f32 %v2715, %v3923
    %v4004 = vxor.u32 %v4003, 2147483648
    %v4005 = vmul.f32 %v4004, 1.442695
    %v4006 = vpow.pop %v4005
    %v4007 = vadd.f32 %v4006, 1.0
    %v4008 = vrcp.pop %v4007
    %v4009 = vmul.f32 1.0, %v4008
    %v4010 = vmul.f32 %v4002, %v3993
    %v4011 = vadd.f32 %v2796, %v4010
    %v4012 = vtanh.pop %v4011
    %v4013 = vsub.f32 1.0, %v4009
    %v4014 = vmul.f32 %v4013, %v4012
    %v4016 = vmul.f32 %v4009, %v3783
    %v4017 = vadd.f32 %v4014, %v4016
    %4018 = vst.msk [vmem:[#allocation2 + $0x8] sm:$0x3] %vm797, %v4017
    %v4020 = vsel %vm312, %v4017, 0
    %4022 = vmatprep.subr.mxu0 0.0
    %4023 = vmatpush1.msra.mxu0 %v2534
    %4024 = vmatprep.subr.mxu0 0.0
    %4025 = vmatpush1.msra.mxu0 %v2535
    %4026 = vmatprep.subr.mxu0 0.0
    %4027 = vmatpush1.msra.mxu0 %v2536
    %4028 = vmatprep.subr.mxu0 0.0
    %4029 = vmatpush1.msra.mxu0 %v2537
    %4030 = vmatprep.subr.mxu0 0.0
    %4031 = vmatpush1.msra.mxu0 0.0
    %4032 = vmatprep.subr.mxu0 0.0
    %4033 = vmatpush1.msra.mxu0 0.0
    %4034 = vmatprep.subr.mxu0 0.0
    %4035 = vmatpush1.msra.mxu0 0.0
    %4036 = vmatprep.subr.mxu0 0.0
    %4037 = vmatpush1.msra.mxu0 0.0
    %4038 = vmatprep.subr.mxu0 0.0
    %4039 = vmatpush1.msra.mxu0 0.0
    %4040 = vmatprep.subr.mxu0 0.0
    %4041 = vmatpush1.msra.mxu0 0.0
    %4042 = vmatprep.subr.mxu0 0.0
    %4043 = vmatpush1.msra.mxu0 0.0
    %4044 = vmatprep.subr.mxu0 0.0
    %4045 = vmatpush1.msra.mxu0 0.0
    %4046 = vmatprep.subr.mxu0 0.0
    %4047 = vmatpush1.msra.mxu0 0.0
    %4048 = vmatprep.subr.mxu0 0.0
    %4049 = vmatpush1.msra.mxu0 0.0
    %4050 = vmatprep.subr.mxu0 0.0
    %4051 = vmatpush1.msra.mxu0 0.0
    %4052 = vmatprep.subr.mxu0 0.0
    %4053 = vmatpush1.msra.mxu0 0.0
    %4054 = vmatprep.subr.mxu0 0.0
    %4055 = vmatpush1.msra.mxu0 0.0
    %4056 = vmatprep.subr.mxu0 0.0
    %4057 = vmatpush1.msra.mxu0 0.0
    %4058 = vmatprep.subr.mxu0 0.0
    %4059 = vmatpush1.msra.mxu0 0.0
    %4060 = vmatprep.subr.mxu0 0.0
    %4061 = vmatpush1.msra.mxu0 0.0
    %4062 = vmatprep.subr.mxu0 0.0
    %4063 = vmatpush1.msra.mxu0 0.0
    %4064 = vmatprep.subr.mxu0 0.0
    %4065 = vmatpush1.msra.mxu0 0.0
    %4066 = vmatprep.subr.mxu0 0.0
    %4067 = vmatpush1.msra.mxu0 0.0
    %4068 = vmatprep.subr.mxu0 0.0
    %4069 = vmatpush1.msra.mxu0 0.0
    %4070 = vmatprep.subr.mxu0 0.0
    %4071 = vmatpush1.msra.mxu0 0.0
    %4072 = vmatprep.subr.mxu0 0.0
    %4073 = vmatpush1.msra.mxu0 0.0
    %4074 = vmatprep.subr.mxu0 0.0
    %4075 = vmatpush1.msra.mxu0 0.0
    %4076 = vmatprep.subr.mxu0 0.0
    %4077 = vmatpush1.msra.mxu0 0.0
    %4078 = vmatprep.subr.mxu0 0.0
    %4079 = vmatpush1.msra.mxu0 0.0
    %4080 = vmatprep.subr.mxu0 0.0
    %4081 = vmatpush1.msra.mxu0 0.0
    %4082 = vmatprep.subr.mxu0 0.0
    %4083 = vmatpush1.msra.mxu0 0.0
    %4084 = vmatprep.subr.mxu0 0.0
    %4085 = vmatpush1.msra.mxu0 0.0
    %4086 = vmatprep.mubr.f32.mxu0 0.0
    %4087 = vmatmul.mubr.f32.gmra.mrb[0].mxu0 %v4020
    %v4088 = vpop.f32.mrb[0].mxu0
    %v4089 = vadd.f32 0.0, %v4088
    %v4090 = vpop.f32.mrb[0].mxu0
    %4091 = vdwg.mxu0
    %4092 = vmatprep.subr.mxu0 0.0
    %4093 = vmatpush1.msra.mxu0 %v2538
    %4094 = vmatprep.subr.mxu0 0.0
    %4095 = vmatpush1.msra.mxu0 %v2539
    %4096 = vmatprep.subr.mxu0 0.0
    %4097 = vmatpush1.msra.mxu0 %v2540
    %4098 = vmatprep.subr.mxu0 0.0
    %4099 = vmatpush1.msra.mxu0 %v2541
    %4100 = vmatprep.subr.mxu0 0.0
    %4101 = vmatpush1.msra.mxu0 0.0
    %4102 = vmatprep.subr.mxu0 0.0
    %4103 = vmatpush1.msra.mxu0 0.0
    %4104 = vmatprep.subr.mxu0 0.0
    %4105 = vmatpush1.msra.mxu0 0.0
    %4106 = vmatprep.subr.mxu0 0.0
    %4107 = vmatpush1.msra.mxu0 0.0
    %4108 = vmatprep.subr.mxu0 0.0
    %4109 = vmatpush1.msra.mxu0 0.0
    %4110 = vmatprep.subr.mxu0 0.0
    %4111 = vmatpush1.msra.mxu0 0.0
    %4112 = vmatprep.subr.mxu0 0.0
    %4113 = vmatpush1.msra.mxu0 0.0
    %4114 = vmatprep.subr.mxu0 0.0
    %4115 = vmatpush1.msra.mxu0 0.0
    %4116 = vmatprep.subr.mxu0 0.0
    %4117 = vmatpush1.msra.mxu0 0.0
    %4118 = vmatprep.subr.mxu0 0.0
    %4119 = vmatpush1.msra.mxu0 0.0
    %4120 = vmatprep.subr.mxu0 0.0
    %4121 = vmatpush1.msra.mxu0 0.0
    %4122 = vmatprep.subr.mxu0 0.0
    %4123 = vmatpush1.msra.mxu0 0.0
    %4124 = vmatprep.subr.mxu0 0.0
    %4125 = vmatpush1.msra.mxu0 0.0
    %4126 = vmatprep.subr.mxu0 0.0
    %4127 = vmatpush1.msra.mxu0 0.0
    %4128 = vmatprep.subr.mxu0 0.0
    %4129 = vmatpush1.msra.mxu0 0.0
    %4130 = vmatprep.subr.mxu0 0.0
    %4131 = vmatpush1.msra.mxu0 0.0
    %4132 = vmatprep.subr.mxu0 0.0
    %4133 = vmatpush1.msra.mxu0 0.0
    %4134 = vmatprep.subr.mxu0 0.0
    %4135 = vmatpush1.msra.mxu0 0.0
    %4136 = vmatprep.subr.mxu0 0.0
    %4137 = vmatpush1.msra.mxu0 0.0
    %4138 = vmatprep.subr.mxu0 0.0
    %4139 = vmatpush1.msra.mxu0 0.0
    %4140 = vmatprep.subr.mxu0 0.0
    %4141 = vmatpush1.msra.mxu0 0.0
    %4142 = vmatprep.subr.mxu0 0.0
    %4143 = vmatpush1.msra.mxu0 0.0
    %4144 = vmatprep.subr.mxu0 0.0
    %4145 = vmatpush1.msra.mxu0 0.0
    %4146 = vmatprep.subr.mxu0 0.0
    %4147 = vmatpush1.msra.mxu0 0.0
    %4148 = vmatprep.subr.mxu0 0.0
    %4149 = vmatpush1.msra.mxu0 0.0
    %4150 = vmatprep.subr.mxu0 0.0
    %4151 = vmatpush1.msra.mxu0 0.0
    %4152 = vmatprep.subr.mxu0 0.0
    %4153 = vmatpush1.msra.mxu0 0.0
    %4154 = vmatprep.subr.mxu0 0.0
    %4155 = vmatpush1.msra.mxu0 0.0
    %4156 = vmatprep.mubr.f32.mxu0 0.0
    %4157 = vmatmul.mubr.f32.gmra.mrb[0].mxu0 %v4020
    %v4158 = vpop.f32.mrb[0].mxu0
    %v4159 = vadd.f32 0.0, %v4158
    %v4160 = vpop.f32.mrb[0].mxu0
    %4161 = vdwg.mxu0
    %4162 = vmatprep.subr.mxu0 0.0
    %4163 = vmatpush1.msra.mxu0 %v2542
    %4164 = vmatprep.subr.mxu0 0.0
    %4165 = vmatpush1.msra.mxu0 %v2543
    %4166 = vmatprep.subr.mxu0 0.0
    %4167 = vmatpush1.msra.mxu0 %v2544
    %4168 = vmatprep.subr.mxu0 0.0
    %4169 = vmatpush1.msra.mxu0 %v2545
    %4170 = vmatprep.subr.mxu0 0.0
    %4171 = vmatpush1.msra.mxu0 0.0
    %4172 = vmatprep.subr.mxu0 0.0
    %4173 = vmatpush1.msra.mxu0 0.0
    %4174 = vmatprep.subr.mxu0 0.0
    %4175 = vmatpush1.msra.mxu0 0.0
    %4176 = vmatprep.subr.mxu0 0.0
    %4177 = vmatpush1.msra.mxu0 0.0
    %4178 = vmatprep.subr.mxu0 0.0
    %4179 = vmatpush1.msra.mxu0 0.0
    %4180 = vmatprep.subr.mxu0 0.0
    %4181 = vmatpush1.msra.mxu0 0.0
    %4182 = vmatprep.subr.mxu0 0.0
    %4183 = vmatpush1.msra.mxu0 0.0
    %4184 = vmatprep.subr.mxu0 0.0
    %4185 = vmatpush1.msra.mxu0 0.0
    %4186 = vmatprep.subr.mxu0 0.0
    %4187 = vmatpush1.msra.mxu0 0.0
    %4188 = vmatprep.subr.mxu0 0.0
    %4189 = vmatpush1.msra.mxu0 0.0
    %4190 = vmatprep.subr.mxu0 0.0
    %4191 = vmatpush1.msra.mxu0 0.0
    %4192 = vmatprep.subr.mxu0 0.0
    %4193 = vmatpush1.msra.mxu0 0.0
    %4194 = vmatprep.subr.mxu0 0.0
    %4195 = vmatpush1.msra.mxu0 0.0
    %4196 = vmatprep.subr.mxu0 0.0
    %4197 = vmatpush1.msra.mxu0 0.0
    %4198 = vmatprep.subr.mxu0 0.0
    %4199 = vmatpush1.msra.mxu0 0.0
    %4200 = vmatprep.subr.mxu0 0.0
    %4201 = vmatpush1.msra.mxu0 0.0
    %4202 = vmatprep.subr.mxu0 0.0
    %4203 = vmatpush1.msra.mxu0 0.0
    %4204 = vmatprep.subr.mxu0 0.0
    %4205 = vmatpush1.msra.mxu0 0.0
    %4206 = vmatprep.subr.mxu0 0.0
    %4207 = vmatpush1.msra.mxu0 0.0
    %4208 = vmatprep.subr.mxu0 0.0
    %4209 = vmatpush1.msra.mxu0 0.0
    %4210 = vmatprep.subr.mxu0 0.0
    %4211 = vmatpush1.msra.mxu0 0.0
    %4212 = vmatprep.subr.mxu0 0.0
    %4213 = vmatpush1.msra.mxu0 0.0
    %4214 = vmatprep.subr.mxu0 0.0
    %4215 = vmatpush1.msra.mxu0 0.0
    %4216 = vmatprep.subr.mxu0 0.0
    %4217 = vmatpush1.msra.mxu0 0.0
    %4218 = vmatprep.subr.mxu0 0.0
    %4219 = vmatpush1.msra.mxu0 0.0
    %4220 = vmatprep.subr.mxu0 0.0
    %4221 = vmatpush1.msra.mxu0 0.0
    %4222 = vmatprep.subr.mxu0 0.0
    %4223 = vmatpush1.msra.mxu0 0.0
    %4224 = vmatprep.subr.mxu0 0.0
    %4225 = vmatpush1.msra.mxu0 0.0
    %4226 = vmatprep.mubr.f32.mxu0 0.0
    %4227 = vmatmul.mubr.f32.gmra.mrb[0].mxu0 %v4020
    %v4228 = vpop.f32.mrb[0].mxu0
    %v4229 = vadd.f32 %v2948, %v4228
    %v4230 = vpop.f32.mrb[0].mxu0
    %4231 = vdwg.mxu0
    %v4233 = vrot.slane %v4089, 6
    %v4235 = vadd.f32 %v2634, %v4233
    %v4236 = vxor.u32 %v4235, 2147483648
    %v4237 = vmul.f32 %v4236, 1.442695
    %v4238 = vpow.pop %v4237
    %v4239 = vadd.f32 %v4238, 1.0
    %v4240 = vrcp.pop %v4239
    %v4241 = vmul.f32 1.0, %v4240
    %v4243 = vrot.slane %v4159, 6
    %v4245 = vadd.f32 %v2715, %v4243
    %v4246 = vxor.u32 %v4245, 2147483648
    %v4247 = vmul.f32 %v4246, 1.442695
    %v4248 = vpow.pop %v4247
    %v4249 = vadd.f32 %v4248, 1.0
    %v4250 = vrcp.pop %v4249
    %v4251 = vmul.f32 1.0, %v4250
    %v4253 = vrot.slane %v4229, 6
    %v4255 = vmul.f32 %v4241, %v4253
    %v4256 = vadd.f32 %v2796, %v4255
    %v4257 = vtanh.pop %v4256
    %v4258 = vsub.f32 1.0, %v4251
    %v4259 = vmul.f32 %v4258, %v4257
    %v4260 = vrot.slane %v4017, 6
    %v4262 = vmul.f32 %v4251, %v4260
    %v4263 = vadd.f32 %v4259, %v4262
    %4264 = vst.msk [vmem:[#allocation2 + $0x8] sm:$0xc] %vm1044, %v4263
    %v4266 = vrot.slane %v4263, 2
    %v4267 = vsel %vm312, %v4266, 0
    %4269 = vmatprep.subr.mxu0 0.0
    %4270 = vmatpush1.msra.mxu0 %v2534
    %4271 = vmatprep.subr.mxu0 0.0
    %4272 = vmatpush1.msra.mxu0 %v2535
    %4273 = vmatprep.subr.mxu0 0.0
    %4274 = vmatpush1.msra.mxu0 %v2536
    %4275 = vmatprep.subr.mxu0 0.0
    %4276 = vmatpush1.msra.mxu0 %v2537
    %4277 = vmatprep.subr.mxu0 0.0
    %4278 = vmatpush1.msra.mxu0 0.0
    %4279 = vmatprep.subr.mxu0 0.0
    %4280 = vmatpush1.msra.mxu0 0.0
    %4281 = vmatprep.subr.mxu0 0.0
    %4282 = vmatpush1.msra.mxu0 0.0
    %4283 = vmatprep.subr.mxu0 0.0
    %4284 = vmatpush1.msra.mxu0 0.0
    %4285 = vmatprep.subr.mxu0 0.0
    %4286 = vmatpush1.msra.mxu0 0.0
    %4287 = vmatprep.subr.mxu0 0.0
    %4288 = vmatpush1.msra.mxu0 0.0
    %4289 = vmatprep.subr.mxu0 0.0
    %4290 = vmatpush1.msra.mxu0 0.0
    %4291 = vmatprep.subr.mxu0 0.0
    %4292 = vmatpush1.msra.mxu0 0.0
    %4293 = vmatprep.subr.mxu0 0.0
    %4294 = vmatpush1.msra.mxu0 0.0
    %4295 = vmatprep.subr.mxu0 0.0
    %4296 = vmatpush1.msra.mxu0 0.0
    %4297 = vmatprep.subr.mxu0 0.0
    %4298 = vmatpush1.msra.mxu0 0.0
    %4299 = vmatprep.subr.mxu0 0.0
    %4300 = vmatpush1.msra.mxu0 0.0
    %4301 = vmatprep.subr.mxu0 0.0
    %4302 = vmatpush1.msra.mxu0 0.0
    %4303 = vmatprep.subr.mxu0 0.0
    %4304 = vmatpush1.msra.mxu0 0.0
    %4305 = vmatprep.subr.mxu0 0.0
    %4306 = vmatpush1.msra.mxu0 0.0
    %4307 = vmatprep.subr.mxu0 0.0
    %4308 = vmatpush1.msra.mxu0 0.0
    %4309 = vmatprep.subr.mxu0 0.0
    %4310 = vmatpush1.msra.mxu0 0.0
    %4311 = vmatprep.subr.mxu0 0.0
    %4312 = vmatpush1.msra.mxu0 0.0
    %4313 = vmatprep.subr.mxu0 0.0
    %4314 = vmatpush1.msra.mxu0 0.0
    %4315 = vmatprep.subr.mxu0 0.0
    %4316 = vmatpush1.msra.mxu0 0.0
    %4317 = vmatprep.subr.mxu0 0.0
    %4318 = vmatpush1.msra.mxu0 0.0
    %4319 = vmatprep.subr.mxu0 0.0
    %4320 = vmatpush1.msra.mxu0 0.0
    %4321 = vmatprep.subr.mxu0 0.0
    %4322 = vmatpush1.msra.mxu0 0.0
    %4323 = vmatprep.subr.mxu0 0.0
    %4324 = vmatpush1.msra.mxu0 0.0
    %4325 = vmatprep.subr.mxu0 0.0
    %4326 = vmatpush1.msra.mxu0 0.0
    %4327 = vmatprep.subr.mxu0 0.0
    %4328 = vmatpush1.msra.mxu0 0.0
    %4329 = vmatprep.subr.mxu0 0.0
    %4330 = vmatpush1.msra.mxu0 0.0
    %4331 = vmatprep.subr.mxu0 0.0
    %4332 = vmatpush1.msra.mxu0 0.0
    %4333 = vmatprep.mubr.f32.mxu0 0.0
    %4334 = vmatmul.mubr.f32.gmra.mrb[0].mxu0 %v4267
    %v4335 = vpop.f32.mrb[0].mxu0
    %v4336 = vadd.f32 0.0, %v4335
    %v4337 = vpop.f32.mrb[0].mxu0
    %4338 = vdwg.mxu0
    %4339 = vmatprep.subr.mxu0 0.0
    %4340 = vmatpush1.msra.mxu0 %v2538
    %4341 = vmatprep.subr.mxu0 0.0
    %4342 = vmatpush1.msra.mxu0 %v2539
    %4343 = vmatprep.subr.mxu0 0.0
    %4344 = vmatpush1.msra.mxu0 %v2540
    %4345 = vmatprep.subr.mxu0 0.0
    %4346 = vmatpush1.msra.mxu0 %v2541
    %4347 = vmatprep.subr.mxu0 0.0
    %4348 = vmatpush1.msra.mxu0 0.0
    %4349 = vmatprep.subr.mxu0 0.0
    %4350 = vmatpush1.msra.mxu0 0.0
    %4351 = vmatprep.subr.mxu0 0.0
    %4352 = vmatpush1.msra.mxu0 0.0
    %4353 = vmatprep.subr.mxu0 0.0
    %4354 = vmatpush1.msra.mxu0 0.0
    %4355 = vmatprep.subr.mxu0 0.0
    %4356 = vmatpush1.msra.mxu0 0.0
    %4357 = vmatprep.subr.mxu0 0.0
    %4358 = vmatpush1.msra.mxu0 0.0
    %4359 = vmatprep.subr.mxu0 0.0
    %4360 = vmatpush1.msra.mxu0 0.0
    %4361 = vmatprep.subr.mxu0 0.0
    %4362 = vmatpush1.msra.mxu0 0.0
    %4363 = vmatprep.subr.mxu0 0.0
    %4364 = vmatpush1.msra.mxu0 0.0
    %4365 = vmatprep.subr.mxu0 0.0
    %4366 = vmatpush1.msra.mxu0 0.0
    %4367 = vmatprep.subr.mxu0 0.0
    %4368 = vmatpush1.msra.mxu0 0.0
    %4369 = vmatprep.subr.mxu0 0.0
    %4370 = vmatpush1.msra.mxu0 0.0
    %4371 = vmatprep.subr.mxu0 0.0
    %4372 = vmatpush1.msra.mxu0 0.0
    %4373 = vmatprep.subr.mxu0 0.0
    %4374 = vmatpush1.msra.mxu0 0.0
    %4375 = vmatprep.subr.mxu0 0.0
    %4376 = vmatpush1.msra.mxu0 0.0
    %4377 = vmatprep.subr.mxu0 0.0
    %4378 = vmatpush1.msra.mxu0 0.0
    %4379 = vmatprep.subr.mxu0 0.0
    %4380 = vmatpush1.msra.mxu0 0.0
    %4381 = vmatprep.subr.mxu0 0.0
    %4382 = vmatpush1.msra.mxu0 0.0
    %4383 = vmatprep.subr.mxu0 0.0
    %4384 = vmatpush1.msra.mxu0 0.0
    %4385 = vmatprep.subr.mxu0 0.0
    %4386 = vmatpush1.msra.mxu0 0.0
    %4387 = vmatprep.subr.mxu0 0.0
    %4388 = vmatpush1.msra.mxu0 0.0
    %4389 = vmatprep.subr.mxu0 0.0
    %4390 = vmatpush1.msra.mxu0 0.0
    %4391 = vmatprep.subr.mxu0 0.0
    %4392 = vmatpush1.msra.mxu0 0.0
    %4393 = vmatprep.subr.mxu0 0.0
    %4394 = vmatpush1.msra.mxu0 0.0
    %4395 = vmatprep.subr.mxu0 0.0
    %4396 = vmatpush1.msra.mxu0 0.0
    %4397 = vmatprep.subr.mxu0 0.0
    %4398 = vmatpush1.msra.mxu0 0.0
    %4399 = vmatprep.subr.mxu0 0.0
    %4400 = vmatpush1.msra.mxu0 0.0
    %4401 = vmatprep.subr.mxu0 0.0
    %4402 = vmatpush1.msra.mxu0 0.0
    %4403 = vmatprep.mubr.f32.mxu0 0.0
    %4404 = vmatmul.mubr.f32.gmra.mrb[0].mxu0 %v4267
    %v4405 = vpop.f32.mrb[0].mxu0
    %v4406 = vadd.f32 0.0, %v4405
    %v4407 = vpop.f32.mrb[0].mxu0
    %4408 = vdwg.mxu0
    %4409 = vmatprep.subr.mxu0 0.0
    %4410 = vmatpush1.msra.mxu0 %v2542
    %4411 = vmatprep.subr.mxu0 0.0
    %4412 = vmatpush1.msra.mxu0 %v2543
    %4413 = vmatprep.subr.mxu0 0.0
    %4414 = vmatpush1.msra.mxu0 %v2544
    %4415 = vmatprep.subr.mxu0 0.0
    %4416 = vmatpush1.msra.mxu0 %v2545
    %4417 = vmatprep.subr.mxu0 0.0
    %4418 = vmatpush1.msra.mxu0 0.0
    %4419 = vmatprep.subr.mxu0 0.0
    %4420 = vmatpush1.msra.mxu0 0.0
    %4421 = vmatprep.subr.mxu0 0.0
    %4422 = vmatpush1.msra.mxu0 0.0
    %4423 = vmatprep.subr.mxu0 0.0
    %4424 = vmatpush1.msra.mxu0 0.0
    %4425 = vmatprep.subr.mxu0 0.0
    %4426 = vmatpush1.msra.mxu0 0.0
    %4427 = vmatprep.subr.mxu0 0.0
    %4428 = vmatpush1.msra.mxu0 0.0
    %4429 = vmatprep.subr.mxu0 0.0
    %4430 = vmatpush1.msra.mxu0 0.0
    %4431 = vmatprep.subr.mxu0 0.0
    %4432 = vmatpush1.msra.mxu0 0.0
    %4433 = vmatprep.subr.mxu0 0.0
    %4434 = vmatpush1.msra.mxu0 0.0
    %4435 = vmatprep.subr.mxu0 0.0
    %4436 = vmatpush1.msra.mxu0 0.0
    %4437 = vmatprep.subr.mxu0 0.0
    %4438 = vmatpush1.msra.mxu0 0.0
    %4439 = vmatprep.subr.mxu0 0.0
    %4440 = vmatpush1.msra.mxu0 0.0
    %4441 = vmatprep.subr.mxu0 0.0
    %4442 = vmatpush1.msra.mxu0 0.0
    %4443 = vmatprep.subr.mxu0 0.0
    %4444 = vmatpush1.msra.mxu0 0.0
    %4445 = vmatprep.subr.mxu0 0.0
    %4446 = vmatpush1.msra.mxu0 0.0
    %4447 = vmatprep.subr.mxu0 0.0
    %4448 = vmatpush1.msra.mxu0 0.0
    %4449 = vmatprep.subr.mxu0 0.0
    %4450 = vmatpush1.msra.mxu0 0.0
    %4451 = vmatprep.subr.mxu0 0.0
    %4452 = vmatpush1.msra.mxu0 0.0
    %4453 = vmatprep.subr.mxu0 0.0
    %4454 = vmatpush1.msra.mxu0 0.0
    %4455 = vmatprep.subr.mxu0 0.0
    %4456 = vmatpush1.msra.mxu0 0.0
    %4457 = vmatprep.subr.mxu0 0.0
    %4458 = vmatpush1.msra.mxu0 0.0
    %4459 = vmatprep.subr.mxu0 0.0
    %4460 = vmatpush1.msra.mxu0 0.0
    %4461 = vmatprep.subr.mxu0 0.0
    %4462 = vmatpush1.msra.mxu0 0.0
    %4463 = vmatprep.subr.mxu0 0.0
    %4464 = vmatpush1.msra.mxu0 0.0
    %4465 = vmatprep.subr.mxu0 0.0
    %4466 = vmatpush1.msra.mxu0 0.0
    %4467 = vmatprep.subr.mxu0 0.0
    %4468 = vmatpush1.msra.mxu0 0.0
    %4469 = vmatprep.subr.mxu0 0.0
    %4470 = vmatpush1.msra.mxu0 0.0
    %4471 = vmatprep.subr.mxu0 0.0
    %4472 = vmatpush1.msra.mxu0 0.0
    %4473 = vmatprep.mubr.f32.mxu0 0.0
    %4474 = vmatmul.mubr.f32.gmra.mrb[0].mxu0 %v4267
    %v4475 = vpop.f32.mrb[0].mxu0
    %v4476 = vadd.f32 %v2948, %v4475
    %v4477 = vpop.f32.mrb[0].mxu0
    %4478 = vdwg.mxu0
    %v4480 = vrot.slane %v4336, 4
    %v4482 = vadd.f32 %v2634, %v4480
    %v4483 = vxor.u32 %v4482, 2147483648
    %v4484 = vmul.f32 %v4483, 1.442695
    %v4485 = vpow.pop %v4484
    %v4486 = vadd.f32 %v4485, 1.0
    %v4487 = vrcp.pop %v4486
    %v4488 = vmul.f32 1.0, %v4487
    %v4490 = vrot.slane %v4406, 4
    %v4492 = vadd.f32 %v2715, %v4490
    %v4493 = vxor.u32 %v4492, 2147483648
    %v4494 = vmul.f32 %v4493, 1.442695
    %v4495 = vpow.pop %v4494
    %v4496 = vadd.f32 %v4495, 1.0
    %v4497 = vrcp.pop %v4496
    %v4498 = vmul.f32 1.0, %v4497
    %v4500 = vrot.slane %v4476, 4
    %v4502 = vmul.f32 %v4488, %v4500
    %v4503 = vadd.f32 %v2796, %v4502
    %v4504 = vtanh.pop %v4503
    %v4505 = vsub.f32 1.0, %v4498
    %v4506 = vmul.f32 %v4505, %v4504
    %v4507 = vrot.slane %v4263, 6
    %v4509 = vmul.f32 %v4498, %v4507
    %v4510 = vadd.f32 %v4506, %v4509
    %4511 = vst.msk [vmem:[#allocation2 + $0x8] sm:$0x30] %vm1292, %v4510
    %v4513 = vrot.slane %v4510, 4
    %v4514 = vsel %vm312, %v4513, 0
    %4516 = vmatprep.subr.mxu0 0.0
    %4517 = vmatpush1.msra.mxu0 %v2534
    %4518 = vmatprep.subr.mxu0 0.0
    %4519 = vmatpush1.msra.mxu0 %v2535
    %4520 = vmatprep.subr.mxu0 0.0
    %4521 = vmatpush1.msra.mxu0 %v2536
    %4522 = vmatprep.subr.mxu0 0.0
    %4523 = vmatpush1.msra.mxu0 %v2537
    %4524 = vmatprep.subr.mxu0 0.0
    %4525 = vmatpush1.msra.mxu0 0.0
    %4526 = vmatprep.subr.mxu0 0.0
    %4527 = vmatpush1.msra.mxu0 0.0
    %4528 = vmatprep.subr.mxu0 0.0
    %4529 = vmatpush1.msra.mxu0 0.0
    %4530 = vmatprep.subr.mxu0 0.0
    %4531 = vmatpush1.msra.mxu0 0.0
    %4532 = vmatprep.subr.mxu0 0.0
    %4533 = vmatpush1.msra.mxu0 0.0
    %4534 = vmatprep.subr.mxu0 0.0
    %4535 = vmatpush1.msra.mxu0 0.0
    %4536 = vmatprep.subr.mxu0 0.0
    %4537 = vmatpush1.msra.mxu0 0.0
    %4538 = vmatprep.subr.mxu0 0.0
    %4539 = vmatpush1.msra.mxu0 0.0
    %4540 = vmatprep.subr.mxu0 0.0
    %4541 = vmatpush1.msra.mxu0 0.0
    %4542 = vmatprep.subr.mxu0 0.0
    %4543 = vmatpush1.msra.mxu0 0.0
    %4544 = vmatprep.subr.mxu0 0.0
    %4545 = vmatpush1.msra.mxu0 0.0
    %4546 = vmatprep.subr.mxu0 0.0
    %4547 = vmatpush1.msra.mxu0 0.0
    %4548 = vmatprep.subr.mxu0 0.0
    %4549 = vmatpush1.msra.mxu0 0.0
    %4550 = vmatprep.subr.mxu0 0.0
    %4551 = vmatpush1.msra.mxu0 0.0
    %4552 = vmatprep.subr.mxu0 0.0
    %4553 = vmatpush1.msra.mxu0 0.0
    %4554 = vmatprep.subr.mxu0 0.0
    %4555 = vmatpush1.msra.mxu0 0.0
    %4556 = vmatprep.subr.mxu0 0.0
    %4557 = vmatpush1.msra.mxu0 0.0
    %4558 = vmatprep.subr.mxu0 0.0
    %4559 = vmatpush1.msra.mxu0 0.0
    %4560 = vmatprep.subr.mxu0 0.0
    %4561 = vmatpush1.msra.mxu0 0.0
    %4562 = vmatprep.subr.mxu0 0.0
    %4563 = vmatpush1.msra.mxu0 0.0
    %4564 = vmatprep.subr.mxu0 0.0
    %4565 = vmatpush1.msra.mxu0 0.0
    %4566 = vmatprep.subr.mxu0 0.0
    %4567 = vmatpush1.msra.mxu0 0.0
    %4568 = vmatprep.subr.mxu0 0.0
    %4569 = vmatpush1.msra.mxu0 0.0
    %4570 = vmatprep.subr.mxu0 0.0
    %4571 = vmatpush1.msra.mxu0 0.0
    %4572 = vmatprep.subr.mxu0 0.0
    %4573 = vmatpush1.msra.mxu0 0.0
    %4574 = vmatprep.subr.mxu0 0.0
    %4575 = vmatpush1.msra.mxu0 0.0
    %4576 = vmatprep.subr.mxu0 0.0
    %4577 = vmatpush1.msra.mxu0 0.0
    %4578 = vmatprep.subr.mxu0 0.0
    %4579 = vmatpush1.msra.mxu0 0.0
    %4580 = vmatprep.mubr.f32.mxu0 0.0
    %4581 = vmatmul.mubr.f32.gmra.mrb[0].mxu0 %v4514
    %v4582 = vpop.f32.mrb[0].mxu0
    %v4583 = vadd.f32 0.0, %v4582
    %v4584 = vpop.f32.mrb[0].mxu0
    %4585 = vdwg.mxu0
    %4586 = vmatprep.subr.mxu0 0.0
    %4587 = vmatpush1.msra.mxu0 %v2538
    %4588 = vmatprep.subr.mxu0 0.0
    %4589 = vmatpush1.msra.mxu0 %v2539
    %4590 = vmatprep.subr.mxu0 0.0
    %4591 = vmatpush1.msra.mxu0 %v2540
    %4592 = vmatprep.subr.mxu0 0.0
    %4593 = vmatpush1.msra.mxu0 %v2541
    %4594 = vmatprep.subr.mxu0 0.0
    %4595 = vmatpush1.msra.mxu0 0.0
    %4596 = vmatprep.subr.mxu0 0.0
    %4597 = vmatpush1.msra.mxu0 0.0
    %4598 = vmatprep.subr.mxu0 0.0
    %4599 = vmatpush1.msra.mxu0 0.0
    %4600 = vmatprep.subr.mxu0 0.0
    %4601 = vmatpush1.msra.mxu0 0.0
    %4602 = vmatprep.subr.mxu0 0.0
    %4603 = vmatpush1.msra.mxu0 0.0
    %4604 = vmatprep.subr.mxu0 0.0
    %4605 = vmatpush1.msra.mxu0 0.0
    %4606 = vmatprep.subr.mxu0 0.0
    %4607 = vmatpush1.msra.mxu0 0.0
    %4608 = vmatprep.subr.mxu0 0.0
    %4609 = vmatpush1.msra.mxu0 0.0
    %4610 = vmatprep.subr.mxu0 0.0
    %4611 = vmatpush1.msra.mxu0 0.0
    %4612 = vmatprep.subr.mxu0 0.0
    %4613 = vmatpush1.msra.mxu0 0.0
    %4614 = vmatprep.subr.mxu0 0.0
    %4615 = vmatpush1.msra.mxu0 0.0
    %4616 = vmatprep.subr.mxu0 0.0
    %4617 = vmatpush1.msra.mxu0 0.0
    %4618 = vmatprep.subr.mxu0 0.0
    %4619 = vmatpush1.msra.mxu0 0.0
    %4620 = vmatprep.subr.mxu0 0.0
    %4621 = vmatpush1.msra.mxu0 0.0
    %4622 = vmatprep.subr.mxu0 0.0
    %4623 = vmatpush1.msra.mxu0 0.0
    %4624 = vmatprep.subr.mxu0 0.0
    %4625 = vmatpush1.msra.mxu0 0.0
    %4626 = vmatprep.subr.mxu0 0.0
    %4627 = vmatpush1.msra.mxu0 0.0
    %4628 = vmatprep.subr.mxu0 0.0
    %4629 = vmatpush1.msra.mxu0 0.0
    %4630 = vmatprep.subr.mxu0 0.0
    %4631 = vmatpush1.msra.mxu0 0.0
    %4632 = vmatprep.subr.mxu0 0.0
    %4633 = vmatpush1.msra.mxu0 0.0
    %4634 = vmatprep.subr.mxu0 0.0
    %4635 = vmatpush1.msra.mxu0 0.0
    %4636 = vmatprep.subr.mxu0 0.0
    %4637 = vmatpush1.msra.mxu0 0.0
    %4638 = vmatprep.subr.mxu0 0.0
    %4639 = vmatpush1.msra.mxu0 0.0
    %4640 = vmatprep.subr.mxu0 0.0
    %4641 = vmatpush1.msra.mxu0 0.0
    %4642 = vmatprep.subr.mxu0 0.0
    %4643 = vmatpush1.msra.mxu0 0.0
    %4644 = vmatprep.subr.mxu0 0.0
    %4645 = vmatpush1.msra.mxu0 0.0
    %4646 = vmatprep.subr.mxu0 0.0
    %4647 = vmatpush1.msra.mxu0 0.0
    %4648 = vmatprep.subr.mxu0 0.0
    %4649 = vmatpush1.msra.mxu0 0.0
    %4650 = vmatprep.mubr.f32.mxu0 0.0
    %4651 = vmatmul.mubr.f32.gmra.mrb[0].mxu0 %v4514
    %v4652 = vpop.f32.mrb[0].mxu0
    %v4653 = vadd.f32 0.0, %v4652
    %v4654 = vpop.f32.mrb[0].mxu0
    %4655 = vdwg.mxu0
    %4656 = vmatprep.subr.mxu0 0.0
    %4657 = vmatpush1.msra.mxu0 %v2542
    %4658 = vmatprep.subr.mxu0 0.0
    %4659 = vmatpush1.msra.mxu0 %v2543
    %4660 = vmatprep.subr.mxu0 0.0
    %4661 = vmatpush1.msra.mxu0 %v2544
    %4662 = vmatprep.subr.mxu0 0.0
    %4663 = vmatpush1.msra.mxu0 %v2545
    %4664 = vmatprep.subr.mxu0 0.0
    %4665 = vmatpush1.msra.mxu0 0.0
    %4666 = vmatprep.subr.mxu0 0.0
    %4667 = vmatpush1.msra.mxu0 0.0
    %4668 = vmatprep.subr.mxu0 0.0
    %4669 = vmatpush1.msra.mxu0 0.0
    %4670 = vmatprep.subr.mxu0 0.0
    %4671 = vmatpush1.msra.mxu0 0.0
    %4672 = vmatprep.subr.mxu0 0.0
    %4673 = vmatpush1.msra.mxu0 0.0
    %4674 = vmatprep.subr.mxu0 0.0
    %4675 = vmatpush1.msra.mxu0 0.0
    %4676 = vmatprep.subr.mxu0 0.0
    %4677 = vmatpush1.msra.mxu0 0.0
    %4678 = vmatprep.subr.mxu0 0.0
    %4679 = vmatpush1.msra.mxu0 0.0
    %4680 = vmatprep.subr.mxu0 0.0
    %4681 = vmatpush1.msra.mxu0 0.0
    %4682 = vmatprep.subr.mxu0 0.0
    %4683 = vmatpush1.msra.mxu0 0.0
    %4684 = vmatprep.subr.mxu0 0.0
    %4685 = vmatpush1.msra.mxu0 0.0
    %4686 = vmatprep.subr.mxu0 0.0
    %4687 = vmatpush1.msra.mxu0 0.0
    %4688 = vmatprep.subr.mxu0 0.0
    %4689 = vmatpush1.msra.mxu0 0.0
    %4690 = vmatprep.subr.mxu0 0.0
    %4691 = vmatpush1.msra.mxu0 0.0
    %4692 = vmatprep.subr.mxu0 0.0
    %4693 = vmatpush1.msra.mxu0 0.0
    %4694 = vmatprep.subr.mxu0 0.0
    %4695 = vmatpush1.msra.mxu0 0.0
    %4696 = vmatprep.subr.mxu0 0.0
    %4697 = vmatpush1.msra.mxu0 0.0
    %4698 = vmatprep.subr.mxu0 0.0
    %4699 = vmatpush1.msra.mxu0 0.0
    %4700 = vmatprep.subr.mxu0 0.0
    %4701 = vmatpush1.msra.mxu0 0.0
    %4702 = vmatprep.subr.mxu0 0.0
    %4703 = vmatpush1.msra.mxu0 0.0
    %4704 = vmatprep.subr.mxu0 0.0
    %4705 = vmatpush1.msra.mxu0 0.0
    %4706 = vmatprep.subr.mxu0 0.0
    %4707 = vmatpush1.msra.mxu0 0.0
    %4708 = vmatprep.subr.mxu0 0.0
    %4709 = vmatpush1.msra.mxu0 0.0
    %4710 = vmatprep.subr.mxu0 0.0
    %4711 = vmatpush1.msra.mxu0 0.0
    %4712 = vmatprep.subr.mxu0 0.0
    %4713 = vmatpush1.msra.mxu0 0.0
    %4714 = vmatprep.subr.mxu0 0.0
    %4715 = vmatpush1.msra.mxu0 0.0
    %4716 = vmatprep.subr.mxu0 0.0
    %4717 = vmatpush1.msra.mxu0 0.0
    %4718 = vmatprep.subr.mxu0 0.0
    %4719 = vmatpush1.msra.mxu0 0.0
    %4720 = vmatprep.mubr.f32.mxu0 0.0
    %4721 = vmatmul.mubr.f32.gmra.mrb[0].mxu0 %v4514
    %v4722 = vpop.f32.mrb[0].mxu0
    %v4723 = vadd.f32 %v2948, %v4722
    %v4724 = vpop.f32.mrb[0].mxu0
    %4725 = vdwg.mxu0
    %v4727 = vrot.slane %v4583, 2
    %v4729 = vadd.f32 %v2634, %v4727
    %v4730 = vxor.u32 %v4729, 2147483648
    %v4731 = vmul.f32 %v4730, 1.442695
    %v4732 = vpow.pop %v4731
    %v4733 = vadd.f32 %v4732, 1.0
    %v4734 = vrcp.pop %v4733
    %v4735 = vmul.f32 1.0, %v4734
    %v4737 = vrot.slane %v4653, 2
    %v4739 = vadd.f32 %v2715, %v4737
    %v4740 = vxor.u32 %v4739, 2147483648
    %v4741 = vmul.f32 %v4740, 1.442695
    %v4742 = vpow.pop %v4741
    %v4743 = vadd.f32 %v4742, 1.0
    %v4744 = vrcp.pop %v4743
    %v4745 = vmul.f32 1.0, %v4744
    %v4747 = vrot.slane %v4723, 2
    %v4749 = vmul.f32 %v4735, %v4747
    %v4750 = vadd.f32 %v2796, %v4749
    %v4751 = vtanh.pop %v4750
    %v4752 = vsub.f32 1.0, %v4745
    %v4753 = vmul.f32 %v4752, %v4751
    %v4754 = vrot.slane %v4510, 6
    %v4756 = vmul.f32 %v4745, %v4754
    %v4757 = vadd.f32 %v4753, %v4756
    %4758 = vst.msk [vmem:[#allocation2 + $0x8] sm:$0xc0] %vm1540, %v4757
    %s4759 = scalar_lea.vmem [#allocation28], 2
    %4760 = vst.msk [vmem:[%s4759 - $0x6] sm:$0xc0] %vm1540, %v4757
    %v4761 = vld [vmem:[#allocation2] sm:$0xff]
    %v4762 = vld [vmem:[#allocation2 + $0x8] sm:$0xff]
    %v4763 = vld [vmem:[%s22] sm:$0xff]
    %v4764 = vld [vmem:[%s22 + $0x8] sm:$0xff]
    %v4765 = vld [vmem:[%s22 + $0x10] sm:$0xff]
    %v4766 = vld [vmem:[%s22 + $0x18] sm:$0xff]
    %v4767 = vld [vmem:[%s23] sm:$0x1]
    %v4769 = vlaneseq
    %v4770 = vshrl.u32 %v4769, 7
    %v4771 = vsub.s32 0, %v4770
    %v4772 = vrot.slane %v4767, %v4771
    %v4775 = vsel %vm312, %v4761, 0
    %v4778 = vsel %vm312, %v4762, 0
    %4780 = vmatprep.subr.mxu0 0.0
    %4781 = vmatpush1.msra.mxu0 %v4763
    %4782 = vmatprep.subr.mxu0 0.0
    %4783 = vmatpush1.msra.mxu0 %v4764
    %4784 = vmatprep.subr.mxu0 0.0
    %4785 = vmatpush1.msra.mxu0 %v4765
    %4786 = vmatprep.subr.mxu0 0.0
    %4787 = vmatpush1.msra.mxu0 %v4766
    %4788 = vmatprep.subr.mxu0 0.0
    %4789 = vmatpush1.msra.mxu0 0.0
    %4790 = vmatprep.subr.mxu0 0.0
    %4791 = vmatpush1.msra.mxu0 0.0
    %4792 = vmatprep.subr.mxu0 0.0
    %4793 = vmatpush1.msra.mxu0 0.0
    %4794 = vmatprep.subr.mxu0 0.0
    %4795 = vmatpush1.msra.mxu0 0.0
    %4796 = vmatprep.subr.mxu0 0.0
    %4797 = vmatpush1.msra.mxu0 0.0
    %4798 = vmatprep.subr.mxu0 0.0
    %4799 = vmatpush1.msra.mxu0 0.0
    %4800 = vmatprep.subr.mxu0 0.0
    %4801 = vmatpush1.msra.mxu0 0.0
    %4802 = vmatprep.subr.mxu0 0.0
    %4803 = vmatpush1.msra.mxu0 0.0
    %4804 = vmatprep.subr.mxu0 0.0
    %4805 = vmatpush1.msra.mxu0 0.0
    %4806 = vmatprep.subr.mxu0 0.0
    %4807 = vmatpush1.msra.mxu0 0.0
    %4808 = vmatprep.subr.mxu0 0.0
    %4809 = vmatpush1.msra.mxu0 0.0
    %4810 = vmatprep.subr.mxu0 0.0
    %4811 = vmatpush1.msra.mxu0 0.0
    %4812 = vmatprep.subr.mxu0 0.0
    %4813 = vmatpush1.msra.mxu0 0.0
    %4814 = vmatprep.subr.mxu0 0.0
    %4815 = vmatpush1.msra.mxu0 0.0
    %4816 = vmatprep.subr.mxu0 0.0
    %4817 = vmatpush1.msra.mxu0 0.0
    %4818 = vmatprep.subr.mxu0 0.0
    %4819 = vmatpush1.msra.mxu0 0.0
    %4820 = vmatprep.subr.mxu0 0.0
    %4821 = vmatpush1.msra.mxu0 0.0
    %4822 = vmatprep.subr.mxu0 0.0
    %4823 = vmatpush1.msra.mxu0 0.0
    %4824 = vmatprep.subr.mxu0 0.0
    %4825 = vmatpush1.msra.mxu0 0.0
    %4826 = vmatprep.subr.mxu0 0.0
    %4827 = vmatpush1.msra.mxu0 0.0
    %4828 = vmatprep.subr.mxu0 0.0
    %4829 = vmatpush1.msra.mxu0 0.0
    %4830 = vmatprep.subr.mxu0 0.0
    %4831 = vmatpush1.msra.mxu0 0.0
    %4832 = vmatprep.subr.mxu0 0.0
    %4833 = vmatpush1.msra.mxu0 0.0
    %4834 = vmatprep.subr.mxu0 0.0
    %4835 = vmatpush1.msra.mxu0 0.0
    %4836 = vmatprep.subr.mxu0 0.0
    %4837 = vmatpush1.msra.mxu0 0.0
    %4838 = vmatprep.subr.mxu0 0.0
    %4839 = vmatpush1.msra.mxu0 0.0
    %4840 = vmatprep.subr.mxu0 0.0
    %4841 = vmatpush1.msra.mxu0 0.0
    %4842 = vmatprep.subr.mxu0 0.0
    %4843 = vmatpush1.msra.mxu0 0.0
    %4844 = vmatprep.mubr.f32.mxu0 0.0
    %4845 = vmatmul.mubr.f32.gmra.mrb[0].mxu0 %v4775
    %v4846 = vpop.f32.mrb[0].mxu0
    %v4847 = vadd.f32 %v4772, %v4846
    %v4848 = vpop.f32.mrb[0].mxu0
    %4849 = vmatprep.mubr.f32.mxu0 0.0
    %4850 = vmatmul.mubr.f32.gmra.mrb[0].mxu0 %v4778
    %v4851 = vpop.f32.mrb[0].mxu0
    %v4852 = vadd.f32 %v4772, %v4851
    %v4853 = vpop.f32.mrb[0].mxu0
    %4854 = vdwg.mxu0
    %vm4855 = vcmask 130048
    %4856 = vst.msk [vmem:[#allocation27] sm:$0xff] %vm4855, %v4847
    %4857 = vst.msk [vmem:[#allocation27 + $0x8] sm:$0xff] %vm4855, %v4852
    // Predicated region
    $region158: #{tpu_custom_call.1} parent=1 // pred_check
      _
    $region159: #{tpu_custom_call.1} parent=1 // pred_check_branch
      %4859 = sbr.rel (0) target = $region161
    $region160: #{tpu_custom_call.1} parent=1 // pred_region
      %s4861 = ssub.s32 256, 256
      %4862 = vsyncadd [#allocation5], %s4861
      %s4863 = sshll.u32 [#allocation27], 4
      %s4864 = int_to_ptr.vmem [resolvable:$true] %s4863
      %4869 = dma.vmem_to_hbm [thread:$0]  %s4864, 256, %s24, [#allocation5], 128, 128, 8
    $region161: #{tpu_custom_call.1} parent=1 // pred_fallthru
      _
    // Predicated region
    $region162: #{tpu_custom_call.1} parent=1 // pred_check
      _
    $region163: #{tpu_custom_call.1} parent=1 // pred_check_branch
      %4871 = sbr.rel (0) target = $region165
    $region164: #{tpu_custom_call.1} parent=1 // pred_region
      %s4873 = ssub.s32 64, 64
      %4874 = vsyncadd [#allocation29], %s4873
      %s4875 = sshll.u32 [#allocation28], 4
      %s4876 = int_to_ptr.vmem [resolvable:$true] %s4875
      %4881 = dma.vmem_to_hbm [thread:$0]  %s4876, 64, %s25, [#allocation29], 32, 32, 2
    $region165: #{tpu_custom_call.1} parent=1 // pred_fallthru
      _
    // Predicated region
    $region166: #{tpu_custom_call.1} parent=1 // pred_check
      _
    $region167: #{tpu_custom_call.1} parent=1 // pred_check_branch
      %4883 = sbr.rel (0) target = $region169
    $region168: #{tpu_custom_call.1} parent=1 // pred_region
      %4884 = dma.done [#allocation5], 256
    $region169: #{tpu_custom_call.1} parent=1 // pred_fallthru
      _
    // Predicated region
    $region170: #{tpu_custom_call.1} parent=1 // pred_check
      _
    $region171: #{tpu_custom_call.1} parent=1 // pred_check_branch
      %4886 = sbr.rel (0) target = $region173
    $region172: #{tpu_custom_call.1} parent=1 // pred_region
      %4887 = dma.done [#allocation29], 64
    $region173: #{tpu_custom_call.1} parent=1 // pred_fallthru
      _
    %4888 = vsyncpa [#allocation4], 1
    %4889 = vsyncpa [#allocation7], 1
    %4890 = vsyncpa [#allocation10], 1
    %4891 = vsyncpa [#allocation13], 1
    %4892 = vsyncpa [#allocation16], 1
    %4893 = vsyncpa [#allocation19], 1
    %4894 = vsyncpa [#allocation22], 1
    %4895 = vsyncpa [#allocation25], 1
    %4896 = vsyncpa [#allocation5], 1
    %4897 = vsyncpa [#allocation29], 1

</llo_original>
